<compile_context>
chip_gen: v7x
topology: tpu7x:2x2x1
jax: 0.10.0
libtpu: 0.0.40
codegen_flags: <defaults>
</compile_context>

<pallas_src>
import math
import jax
import jax.numpy as jnp
from jax.experimental import pallas as pl
from jax.experimental.pallas import tpu as pltpu

# ---------------- config (small, consistent with the module's args) -------------
X_DIM = 16      # args.x_dim
H_DIM = 32      # args.h_dim
Z_DIM = 8       # args.z_dim
Y_DIM = 4       # args.y_dim  ("len" = number of GRU steps)
WORKERS = 3     # args.workers (heads unused when forward(..., workers=None))

BATCH = 16      # fills all 16 bf16 sublanes in one tile -> grid=(1,)

GP = 128                     # lanes per GRU gate after padding (H_DIM -> GP for alignment)
G3 = 3 * GP                  # fused gate width per step
FC1_W = GP                   # firstcell hidden padded to one lane group
ENC_XW_N = FC1_W + Y_DIM * G3    # fused [firstcell W1 | all encoder x-projections]
WHH_N = G3 + GP              # fused [W_hh | Predict-head W1]
OUT_W = 128                  # lane-dense packed output width
SLAB_W = (2 + 2 * Y_DIM) * GP    # packed input slab: x | eps_samp | eps_enc[0..Y) | eps_dec[0..Y)

LOG2PI = math.log(2.0 * math.pi)
STD_FIXED = math.exp(0.5 * 0.005)          # exp(0.5 * log_sigma) with log_sigma = 0.005
LOG_WBAR = math.log(1.0 / Y_DIM + 1e-6)    # workers_bar = 1/y_dim when workers is None


# ================================ kernel =================================
def dsgm_kernel(
    slab_ref,                                             # (TB, SLAB_W) packed x + noise
    enc_xw, enc_xb, fc_w2, fc_b2,                         # fused firstcell-W1 + x-projections
    enc_wt, enc_whh_f, enc_hh_b, enc_bhh_n0,              # encoder recurrent (fused w/ heads)
    ep_w2, ep_b2,                                         # encoder Predict-head output layer
    smp_w, smp_b,                                         # GaussianSample (mu | log_var fused)
    dec_wz, dec_zb, dec_wt, dec_whh, dec_hh_b, dec_bhh_n0,  # decoder recurrent
    rec_w, rec_b,                                         # decoder reconstruct (h -> x)
    out_ref,                                              # (TB, 128): [t (Y) | per-ex loss | 0]
):
    slab = slab_ref[...]                                  # (TB, SLAB_W) f32
    x = slab[:, :X_DIM]                                   # exact f32 copy of the data
    eps_samp = slab[:, GP:GP + Z_DIM]
    xb = x.astype(jnp.bfloat16)
    B = x.shape[0]

    # ------------------------------ Encoder ------------------------------
    # One fused lane-dense dot for firstcell-W1 + every step's x-projection; all b_ih and the
    # r/z parts of b_hh are already folded into enc_xb.
    xproj = jnp.dot(xb, enc_xw[...], preferred_element_type=jnp.float32) + enc_xb[...]
    h1 = jnp.maximum(xproj[:, :H_DIM], 0.0)
    t0 = jax.nn.sigmoid(
        jnp.dot(h1.astype(jnp.bfloat16), fc_w2[...],
                preferred_element_type=jnp.float32) + fc_b2[...])            # (B,1)

    t_cols = [t0] + [None] * (Y_DIM - 1)
    z = None
    for i in range(Y_DIM):                                # y_dim is small -> static unroll
        if i > 0:
            # Fused: [W_hh of step i | Predict-head W1 of step i-1] both consume z_{i-1}.
            fused = jnp.dot(z.astype(jnp.bfloat16), enc_whh_f[i - 1],
                            preferred_element_type=jnp.float32) + enc_hh_b[i - 1]
            gh = fused                                    # first G3 lanes; n slot has b_hh_n folded
            ph = jnp.maximum(fused[:, G3:G3 + H_DIM], 0.0)
            t_cols[i] = jax.nn.sigmoid(
                jnp.dot(ph.astype(jnp.bfloat16), ep_w2[i - 1],
                        preferred_element_type=jnp.float32) + ep_b2[i - 1])  # (B,1)

        tmp_t = (t_cols[i] >= 0.5).astype(jnp.float32)                       # (B,1)
        gi = xproj[:, FC1_W + i * G3: FC1_W + (i + 1) * G3] + tmp_t * enc_wt[i]   # (B, 3*GP)
        if i == 0:
            # hidden state is exactly zero: no recurrent matmul
            r = jax.nn.sigmoid(gi[:, :GP])
            u = jax.nn.sigmoid(gi[:, GP:2 * GP])
            n = jnp.tanh(gi[:, 2 * GP:] + r * enc_bhh_n0[...])
            mu = (1.0 - u[:, :H_DIM]) * n[:, :H_DIM]
        else:
            r = jax.nn.sigmoid(gi[:, :GP] + gh[:, :GP])
            u = jax.nn.sigmoid(gi[:, GP:2 * GP] + gh[:, GP:2 * GP])
            n = jnp.tanh(gi[:, 2 * GP:] + r * gh[:, 2 * GP:3 * GP])
            mu = (1.0 - u[:, :H_DIM]) * n[:, :H_DIM] + u[:, :H_DIM] * z
        eps_i = slab[:, (2 + i) * GP:(2 + i) * GP + H_DIM]
        z = mu + STD_FIXED * eps_i                                           # addcmul w/ randn

    # GaussianSample: mu | softplus(log_var) from one fused dot, then reparametrize.
    smp = jnp.dot(z.astype(jnp.bfloat16), smp_w[...],
                  preferred_element_type=jnp.float32) + smp_b[...]           # (B, 2*GP)
    z_mu = smp[:, :Z_DIM]
    log_var = jax.nn.softplus(smp[:, GP:GP + Z_DIM])
    latent = z_mu + jnp.exp(0.5 * log_var) * eps_samp                        # (B, Z)

    # ------------------------------ Decoder ------------------------------
    zproj = jnp.dot(latent.astype(jnp.bfloat16), dec_wz[...],
                    preferred_element_type=jnp.float32) + dec_zb[...]        # (B, Y*G3)
    z_theta = None
    for i in range(Y_DIM):
        t_col = (t_cols[i] > 0.5).astype(jnp.float32)                        # (B,1)
        gi = zproj[:, i * G3:(i + 1) * G3] + t_col * dec_wt[i]
        if i == 0:
            r = jax.nn.sigmoid(gi[:, :GP])
            u = jax.nn.sigmoid(gi[:, GP:2 * GP])
            n = jnp.tanh(gi[:, 2 * GP:] + r * dec_bhh_n0[...])
            mu_th = (1.0 - u[:, :H_DIM]) * n[:, :H_DIM]
        else:
            gh = jnp.dot(z_theta.astype(jnp.bfloat16), dec_whh[i - 1],
                         preferred_element_type=jnp.float32) + dec_hh_b[i - 1]
            r = jax.nn.sigmoid(gi[:, :GP] + gh[:, :GP])
            u = jax.nn.sigmoid(gi[:, GP:2 * GP] + gh[:, GP:2 * GP])
            n = jnp.tanh(gi[:, 2 * GP:] + r * gh[:, 2 * GP:])
            mu_th = (1.0 - u[:, :H_DIM]) * n[:, :H_DIM] + u[:, :H_DIM] * z_theta
        eps_i = slab[:, (2 + Y_DIM + i) * GP:(2 + Y_DIM + i) * GP + H_DIM]
        z_theta = mu_th + STD_FIXED * eps_i                                  # addcmul w/ rand
        # decoder Predict heads removed: with workers=None they never enter (t, loss)

    rec_logits = (jnp.dot(z_theta.astype(jnp.bfloat16), rec_w[...],
                          preferred_element_type=jnp.float32) + rec_b[...])  # (B, X)

    # -------------------------------- Loss -------------------------------
    # x * log(sigmoid(logits)) computed stably (and exactly) via log_sigmoid on the logits.
    log_p_x_tz = jnp.sum(x * jax.nn.log_sigmoid(rec_logits), axis=1, keepdims=True)  # (B,1)
    kl = jnp.zeros((B, 1), jnp.float32)                   # workers=None -> wbar = 1/y_dim
    for i in range(Y_DIM):
        kl = kl + t_cols[i] * (jnp.log(t_cols[i] + 1e-6) - LOG_WBAR)
    log_p_z = jnp.sum(-0.5 * LOG2PI - latent * latent / 2.0, axis=-1, keepdims=True)
    log_q_z_tx = jnp.sum(
        -0.5 * LOG2PI - log_var / 2.0
        - (latent - z_mu) ** 2 / (2.0 * jnp.exp(log_var)),
        axis=-1, keepdims=True)

    per_example = log_q_z_tx - log_p_z - log_p_x_tz + kl                     # (B,1)

    pad = jnp.zeros((B, OUT_W - Y_DIM - 1), jnp.float32)
    out_ref[...] = jnp.concatenate(t_cols + [per_example, pad], axis=-1)


# ------------------------- deterministic parameter init -------------------------
def init_params(key):
    keys = iter(jax.random.split(key, 128))

    def xavier(in_f, out_f):
        std = math.sqrt(2.0 / (in_f + out_f))     # xavier_normal on the torch (out,in) weight
        return (std * jax.random.normal(next(keys), (in_f, out_f))).astype(jnp.float32)

    def xavier_stack(in_f, out_f):
        return jnp.stack([xavier(in_f, out_f) for _ in range(Y_DIM)])

    k = 1.0 / math.sqrt(H_DIM)                    # GRUCell default uniform init bound

    def gru_u(shape):
        return jax.random.uniform(next(keys), shape, jnp.float32, -k, k)

    p = {}
    # Encoder.firstcell: Predict(x_dim, h_dim, 1)   (Linear biases zeroed by DSGM init)
    p["fc_w1"], p["fc_b1"] = xavier(X_DIM, H_DIM), jnp.zeros((1, H_DIM), jnp.float32)
    p["fc_w2"], p["fc_b2"] = xavier(H_DIM, 1), jnp.zeros((1, 1), jnp.float32)
    # Encoder GRU cells (input = x_dim + 1), stacked over time; gates packed [r|z|n]
    p["enc_wx"] = gru_u((Y_DIM, X_DIM, 3 * H_DIM))
    p["enc_wt"] = gru_u((Y_DIM, 1, 3 * H_DIM))
    p["enc_whh"] = gru_u((Y_DIM, H_DIM, 3 * H_DIM))
    p["enc_bih"] = gru_u((Y_DIM, 1, 3 * H_DIM))
    p["enc_bhh"] = gru_u((Y_DIM, 1, 3 * H_DIM))
    # Encoder Predict heads (h -> h -> 1); module owns Y heads, only the first Y-1 are used
    p["ep_w1"], p["ep_b1"] = xavier_stack(H_DIM, H_DIM), jnp.zeros((Y_DIM, 1, H_DIM), jnp.float32)
    p["ep_w2"], p["ep_b2"] = xavier_stack(H_DIM, 1), jnp.zeros((Y_DIM, 1, 1), jnp.float32)
    # GaussianSample (h -> z)
    p["smp_wmu"], p["smp_bmu"] = xavier(H_DIM, Z_DIM), jnp.zeros((1, Z_DIM), jnp.float32)
    p["smp_wlv"], p["smp_blv"] = xavier(H_DIM, Z_DIM), jnp.zeros((1, Z_DIM), jnp.float32)
    # Decoder GRU cells (input = z_dim + 1)
    p["dec_wz"] = gru_u((Y_DIM, Z_DIM, 3 * H_DIM))
    p["dec_wt"] = gru_u((Y_DIM, 1, 3 * H_DIM))
    p["dec_whh"] = gru_u((Y_DIM, H_DIM, 3 * H_DIM))
    p["dec_bih"] = gru_u((Y_DIM, 1, 3 * H_DIM))
    p["dec_bhh"] = gru_u((Y_DIM, 1, 3 * H_DIM))
    # Decoder worker-prediction heads intentionally omitted (forward(x, workers=None)).
    # Decoder reconstruct (h -> x)
    p["rec_w"], p["rec_b"] = xavier(H_DIM, X_DIM), jnp.zeros((1, X_DIM), jnp.float32)
    return p


# --------------------- kernel-layout preparation (runs once, host/XLA) ----------------------
def _pad_lanes(a, width):
    return jnp.pad(a, [(0, 0)] * (a.ndim - 1) + [(0, width - a.shape[-1])])


def _pad_gates(w):
    """(..., 3*H) packed [r|z|n] -> (..., 3*GP): each gate in its own 128-lane group."""
    r, z, n = jnp.split(w, 3, axis=-1)
    return jnp.concatenate([_pad_lanes(r, GP), _pad_lanes(z, GP), _pad_lanes(n, GP)], axis=-1)


def prepare_inputs(params):
    bf = jnp.bfloat16
    f32 = jnp.float32

    # ---- encoder: fused firstcell-W1 + hoisted x-projections, biases folded ----
    enc_wx_pad = _pad_gates(params["enc_wx"])                             # (Y, X, G3)
    enc_wx_all = jnp.transpose(enc_wx_pad, (1, 0, 2)).reshape(X_DIM, Y_DIM * G3)
    fc_w1_pad = _pad_lanes(params["fc_w1"], FC1_W)                        # (X, 128)
    enc_xw = jnp.concatenate([fc_w1_pad, enc_wx_all], axis=-1).astype(bf)  # (X, ENC_XW_N)

    bih = _pad_gates(params["enc_bih"])                                   # (Y, 1, G3)
    bhh = _pad_gates(params["enc_bhh"])                                   # (Y, 1, G3)
    bhh_rz = bhh.at[..., 2 * GP:].set(0.0)                                # zero the n slot
    bhh_n = bhh[..., 2 * GP:]                                             # (Y, 1, GP)
    fc_b1_pad = _pad_lanes(params["fc_b1"], FC1_W)                        # (1, 128)
    enc_xb = jnp.concatenate(
        [fc_b1_pad, (bih + bhh_rz).reshape(1, Y_DIM * G3)], axis=-1).astype(f32)

    # ---- encoder: recurrent W_hh fused with the previous step's Predict-head W1 ----
    whh_pad = _pad_gates(params["enc_whh"])                               # (Y, H, G3)
    ep_w1_pad = _pad_lanes(params["ep_w1"], GP)                           # (Y, H, 128)
    enc_whh_f = jnp.concatenate([whh_pad[1:], ep_w1_pad[:Y_DIM - 1]], axis=-1).astype(bf)
    ep_b1_pad = _pad_lanes(params["ep_b1"], GP)                           # (Y, 1, 128)
    enc_hh_b = jnp.concatenate(
        [jnp.zeros((Y_DIM - 1, 1, 2 * GP), f32), bhh_n[1:], ep_b1_pad[:Y_DIM - 1]],
        axis=-1).astype(f32)                                              # (Y-1, 1, WHH_N)

    # ---- GaussianSample: mu | log_var fused ----
    smp_w = jnp.concatenate(
        [_pad_lanes(params["smp_wmu"], GP), _pad_lanes(params["smp_wlv"], GP)],
        axis=-1).astype(bf)                                               # (H, 2*GP)
    smp_b = jnp.concatenate(
        [_pad_lanes(params["smp_bmu"], GP), _pad_lanes(params["smp_blv"], GP)],
        axis=-1).astype(f32)

    # ---- decoder ----
    dec_wz_pad = _pad_gates(params["dec_wz"])                             # (Y, Z, G3)
    dec_wz = jnp.transpose(dec_wz_pad, (1, 0, 2)).reshape(Z_DIM, Y_DIM * G3).astype(bf)
    dbih = _pad_gates(params["dec_bih"])
    dbhh = _pad_gates(params["dec_bhh"])
    dbhh_rz = dbhh.at[..., 2 * GP:].set(0.0)
    dbhh_n = dbhh[..., 2 * GP:]
    dec_zb = (dbih + dbhh_rz).reshape(1, Y_DIM * G3).astype(f32)
    dec_whh = _pad_gates(params["dec_whh"])[1:].astype(bf)                # (Y-1, H, G3)
    dec_hh_b = jnp.concatenate(
        [jnp.zeros((Y_DIM - 1, 1, 2 * GP), f32), dbhh_n[1:]], axis=-1).astype(f32)

    return dict(
        enc_xw=enc_xw, enc_xb=enc_xb,
        fc_w2=params["fc_w2"].astype(bf), fc_b2=params["fc_b2"].astype(f32),
        enc_wt=_pad_gates(params["enc_wt"]).astype(f32),
        enc_whh_f=enc_whh_f, enc_hh_b=enc_hh_b,
        enc_bhh_n0=bhh_n[0].astype(f32),                                  # (1, GP)
        ep_w2=params["ep_w2"][:Y_DIM - 1].astype(bf),
        ep_b2=params["ep_b2"][:Y_DIM - 1].astype(f32),
        smp_w=smp_w, smp_b=smp_b,
        dec_wz=dec_wz, dec_zb=dec_zb,
        dec_wt=_pad_gates(params["dec_wt"]).astype(f32),
        dec_whh=dec_whh, dec_hh_b=dec_hh_b,
        dec_bhh_n0=dbhh_n[0].astype(f32),
        rec_w=params["rec_w"].astype(bf), rec_b=params["rec_b"].astype(f32),
    )


KERNEL_PARAM_ORDER = [
    "enc_xw", "enc_xb", "fc_w2", "fc_b2",
    "enc_wt", "enc_whh_f", "enc_hh_b", "enc_bhh_n0",
    "ep_w2", "ep_b2",
    "smp_w", "smp_b",
    "dec_wz", "dec_zb", "dec_wt", "dec_whh", "dec_hh_b", "dec_bhh_n0",
    "rec_w", "rec_b",
]


def pack_inputs(x, eps_enc, eps_dec, eps_samp):
    """Pack x + all noise into one lane-dense f32 slab; each piece on a 128-lane boundary."""
    groups = [_pad_lanes(x, GP), _pad_lanes(eps_samp, GP)]
    groups += [_pad_lanes(eps_enc[i], GP) for i in range(Y_DIM)]
    groups += [_pad_lanes(eps_dec[i], GP) for i in range(Y_DIM)]
    return jnp.concatenate(groups, axis=-1).astype(jnp.float32)          # (B, SLAB_W)


def dsgm_forward(x, prepared, noise):
    """Returns (t, loss) exactly like DSGM.forward(x, workers=None)."""
    B = x.shape[0]
    # One tile for small batches (single-TC v5e/v6e have no use for a batch grid);
    # 32-row tiles sharded across TensorCores only when the batch is large enough (v7x).
    TB = B if B <= 32 else 32
    assert B % TB == 0, "batch must be a multiple of the batch tile"

    eps_enc, eps_dec, eps_samp = noise
    slab = pack_inputs(x, eps_enc, eps_dec, eps_samp)
    weights = [prepared[n] for n in KERNEL_PARAM_ORDER]

    def fullblock(arr):
        zeros = (0,) * arr.ndim
        return pl.BlockSpec(arr.shape, lambda b, _z=zeros: _z)   # weights resident across grid

    in_specs = ([pl.BlockSpec((TB, SLAB_W), lambda b: (b, 0))]
                + [fullblock(w) for w in weights])

    out = pl.pallas_call(
        dsgm_kernel,
        out_shape=jax.ShapeDtypeStruct((B, OUT_W), jnp.float32),
        grid=(B // TB,),
        in_specs=in_specs,
        out_specs=pl.BlockSpec((TB, OUT_W), lambda b: (b, 0)),
        compiler_params=pltpu.CompilerParams(dimension_semantics=("parallel",)),
    )(slab, *weights)

    t = out[:, :Y_DIM]
    loss = jnp.mean(out[:, Y_DIM])                                # batch mean in the wrapper
    return t, loss


if __name__ == "__main__":
    root = jax.random.PRNGKey(0)
    k_x, k_p, k_e1, k_e2, k_e3 = jax.random.split(root, 5)

    x = jax.random.uniform(k_x, (BATCH, X_DIM), jnp.float32)
    params = init_params(k_p)
    prepared = prepare_inputs(params)
    noise = (
        jax.random.normal(k_e1, (Y_DIM, BATCH, H_DIM), jnp.float32),   # encoder torch.randn
        jax.random.uniform(k_e2, (Y_DIM, BATCH, H_DIM), jnp.float32),  # decoder torch.rand
        jax.random.normal(k_e3, (BATCH, Z_DIM), jnp.float32),          # GaussianSample torch.randn
    )

    t, loss = dsgm_forward(x, prepared, noise)
    jax.block_until_ready((t, loss))
    assert t.shape == (BATCH, Y_DIM)
    assert bool(jnp.isfinite(loss))
    print("KERNEL_OK")
</pallas_src>

<mosaic_0001>
module attributes {stable_mosaic.version = 11 : i64} {
  func.func @dsgm_kernel(%arg0: i32, %arg1: memref<16x1280xf32, #tpu.memory_space<vmem>>, %arg2: memref<16x1664xbf16, #tpu.memory_space<vmem>>, %arg3: memref<1x1664xf32, #tpu.memory_space<vmem>>, %arg4: memref<32x1xbf16, #tpu.memory_space<vmem>>, %arg5: memref<1x1xf32, #tpu.memory_space<vmem>>, %arg6: memref<4x1x384xf32, #tpu.memory_space<vmem>>, %arg7: memref<3x32x512xbf16, #tpu.memory_space<vmem>>, %arg8: memref<3x1x512xf32, #tpu.memory_space<vmem>>, %arg9: memref<1x128xf32, #tpu.memory_space<vmem>>, %arg10: memref<3x32x1xbf16, #tpu.memory_space<vmem>>, %arg11: memref<3x1x1xf32, #tpu.memory_space<vmem>>, %arg12: memref<32x256xbf16, #tpu.memory_space<vmem>>, %arg13: memref<1x256xf32, #tpu.memory_space<vmem>>, %arg14: memref<8x1536xbf16, #tpu.memory_space<vmem>>, %arg15: memref<1x1536xf32, #tpu.memory_space<vmem>>, %arg16: memref<4x1x384xf32, #tpu.memory_space<vmem>>, %arg17: memref<3x32x384xbf16, #tpu.memory_space<vmem>>, %arg18: memref<3x1x384xf32, #tpu.memory_space<vmem>>, %arg19: memref<1x128xf32, #tpu.memory_space<vmem>>, %arg20: memref<32x16xbf16, #tpu.memory_space<vmem>>, %arg21: memref<1x16xf32, #tpu.memory_space<vmem>>, %arg22: memref<16x128xf32, #tpu.memory_space<vmem>>) attributes {dimension_semantics = [#tpu.dimension_semantics<parallel>], iteration_bounds = array<i64: 1>, scalar_prefetch = 0 : i64, scratch_operands = 0 : i64, tpu.core_type = #tpu.core_type<tc>, window_params = [{transform_indices = @transform_0, window_bounds = array<i64: 16, 1280>}, {pipeline_mode = #tpu.pipeline_mode<synchronous>, transform_indices = @transform_1, window_bounds = array<i64: 16, 1664>}, {pipeline_mode = #tpu.pipeline_mode<synchronous>, transform_indices = @transform_2, window_bounds = array<i64: 1, 1664>}, {pipeline_mode = #tpu.pipeline_mode<synchronous>, transform_indices = @transform_3, window_bounds = array<i64: 32, 1>}, {pipeline_mode = #tpu.pipeline_mode<synchronous>, transform_indices = @transform_4, window_bounds = array<i64: 1, 1>}, {pipeline_mode = #tpu.pipeline_mode<synchronous>, transform_indices = @transform_5, window_bounds = array<i64: 4, 1, 384>}, {pipeline_mode = #tpu.pipeline_mode<synchronous>, transform_indices = @transform_6, window_bounds = array<i64: 3, 32, 512>}, {pipeline_mode = #tpu.pipeline_mode<synchronous>, transform_indices = @transform_7, window_bounds = array<i64: 3, 1, 512>}, {pipeline_mode = #tpu.pipeline_mode<synchronous>, transform_indices = @transform_8, window_bounds = array<i64: 1, 128>}, {pipeline_mode = #tpu.pipeline_mode<synchronous>, transform_indices = @transform_9, window_bounds = array<i64: 3, 32, 1>}, {pipeline_mode = #tpu.pipeline_mode<synchronous>, transform_indices = @transform_10, window_bounds = array<i64: 3, 1, 1>}, {pipeline_mode = #tpu.pipeline_mode<synchronous>, transform_indices = @transform_11, window_bounds = array<i64: 32, 256>}, {pipeline_mode = #tpu.pipeline_mode<synchronous>, transform_indices = @transform_12, window_bounds = array<i64: 1, 256>}, {pipeline_mode = #tpu.pipeline_mode<synchronous>, transform_indices = @transform_13, window_bounds = array<i64: 8, 1536>}, {pipeline_mode = #tpu.pipeline_mode<synchronous>, transform_indices = @transform_14, window_bounds = array<i64: 1, 1536>}, {pipeline_mode = #tpu.pipeline_mode<synchronous>, transform_indices = @transform_15, window_bounds = array<i64: 4, 1, 384>}, {pipeline_mode = #tpu.pipeline_mode<synchronous>, transform_indices = @transform_16, window_bounds = array<i64: 3, 32, 384>}, {pipeline_mode = #tpu.pipeline_mode<synchronous>, transform_indices = @transform_17, window_bounds = array<i64: 3, 1, 384>}, {pipeline_mode = #tpu.pipeline_mode<synchronous>, transform_indices = @transform_18, window_bounds = array<i64: 1, 128>}, {pipeline_mode = #tpu.pipeline_mode<synchronous>, transform_indices = @transform_19, window_bounds = array<i64: 32, 16>}, {pipeline_mode = #tpu.pipeline_mode<synchronous>, transform_indices = @transform_20, window_bounds = array<i64: 1, 16>}, {transform_indices = @transform_21, window_bounds = array<i64: 16, 128>}]} {
    %c0 = arith.constant 0 : index
    %c0_0 = arith.constant 0 : index
    %0 = vector.load %arg1[%c0, %c0_0] : memref<16x1280xf32, #tpu.memory_space<vmem>>, vector<16x1280xf32>
    %1 = vector.extract_strided_slice %0 {offsets = [0, 0], sizes = [16, 16], strides = [1, 1]} : vector<16x1280xf32> to vector<16x16xf32>
    %2 = vector.extract_strided_slice %0 {offsets = [0, 128], sizes = [16, 8], strides = [1, 1]} : vector<16x1280xf32> to vector<16x8xf32>
    %3 = arith.truncf %1 : vector<16x16xf32> to vector<16x16xbf16>
    %c0_1 = arith.constant 0 : index
    %c0_2 = arith.constant 0 : index
    %4 = vector.load %arg2[%c0_1, %c0_2] : memref<16x1664xbf16, #tpu.memory_space<vmem>>, vector<16x1664xbf16>
    %cst = arith.constant dense<0.000000e+00> : vector<16x1664xf32>
    %5 = tpu.matmul %3, %4, %cst {dimension_numbers = #tpu.dot_dimension_numbers<[1], [0], [0], [1], [0, 0, 1, 1], [], []>} : vector<16x16xbf16>, vector<16x1664xbf16>, vector<16x1664xf32> -> vector<16x1664xf32>
    %c0_3 = arith.constant 0 : index
    %c0_4 = arith.constant 0 : index
    %6 = vector.load %arg3[%c0_3, %c0_4] : memref<1x1664xf32, #tpu.memory_space<vmem>>, vector<1x1664xf32>
    %7 = vector.broadcast %6 : vector<1x1664xf32> to vector<16x1664xf32>
    %8 = arith.addf %5, %7 : vector<16x1664xf32>
    %9 = vector.extract_strided_slice %8 {offsets = [0, 0], sizes = [16, 32], strides = [1, 1]} : vector<16x1664xf32> to vector<16x32xf32>
    %cst_5 = arith.constant 0.000000e+00 : f32
    %10 = vector.broadcast %cst_5 : f32 to vector<16x32xf32>
    %11 = arith.maximumf %9, %10 : vector<16x32xf32>
    %12 = arith.truncf %11 : vector<16x32xf32> to vector<16x32xbf16>
    %c0_6 = arith.constant 0 : index
    %c0_7 = arith.constant 0 : index
    %13 = vector.load %arg4[%c0_6, %c0_7] : memref<32x1xbf16, #tpu.memory_space<vmem>>, vector<32x1xbf16>
    %cst_8 = arith.constant dense<0.000000e+00> : vector<16x1xf32>
    %14 = tpu.matmul %12, %13, %cst_8 {dimension_numbers = #tpu.dot_dimension_numbers<[1], [0], [0], [1], [0, 0, 1, 1], [], []>} : vector<16x32xbf16>, vector<32x1xbf16>, vector<16x1xf32> -> vector<16x1xf32>
    %c0_9 = arith.constant 0 : index
    %c0_10 = arith.constant 0 : index
    %15 = vector.load %arg5[%c0_9, %c0_10] : memref<1x1xf32, #tpu.memory_space<vmem>>, vector<1x1xf32>
    %16 = vector.broadcast %15 : vector<1x1xf32> to vector<16x1xf32>
    %17 = arith.addf %14, %16 : vector<16x1xf32>
    %18 = arith.negf %17 : vector<16x1xf32>
    %19 = math.exp %18 : vector<16x1xf32>
    %cst_11 = arith.constant 1.000000e+00 : f32
    %20 = vector.broadcast %cst_11 : f32 to vector<16x1xf32>
    %21 = arith.addf %20, %19 : vector<16x1xf32>
    %22 = arith.divf %20, %21 : vector<16x1xf32>
    %cst_12 = arith.constant 5.000000e-01 : f32
    %23 = vector.broadcast %cst_12 : f32 to vector<16x1xf32>
    %24 = arith.cmpf oge, %22, %23 : vector<16x1xf32>
    %25 = arith.extui %24 : vector<16x1xi1> to vector<16x1xi32>
    %26 = arith.sitofp %25 : vector<16x1xi32> to vector<16x1xf32>
    %27 = vector.extract_strided_slice %8 {offsets = [0, 128], sizes = [16, 384], strides = [1, 1]} : vector<16x1664xf32> to vector<16x384xf32>
    %c0_13 = arith.constant 0 : index
    %c0_14 = arith.constant 0 : index
    %c0_15 = arith.constant 0 : index
    %28 = vector.load %arg6[%c0_13, %c0_14, %c0_15] : memref<4x1x384xf32, #tpu.memory_space<vmem>>, vector<1x1x384xf32>
    %29 = vector.shape_cast %28 : vector<1x1x384xf32> to vector<1x384xf32>
    %30 = vector.broadcast %26 : vector<16x1xf32> to vector<16x384xf32>
    %31 = vector.broadcast %29 : vector<1x384xf32> to vector<16x384xf32>
    %32 = arith.mulf %30, %31 : vector<16x384xf32>
    %33 = arith.addf %27, %32 : vector<16x384xf32>
    %34 = vector.extract_strided_slice %33 {offsets = [0, 0], sizes = [16, 128], strides = [1, 1]} : vector<16x384xf32> to vector<16x128xf32>
    %35 = arith.negf %34 : vector<16x128xf32>
    %36 = math.exp %35 : vector<16x128xf32>
    %cst_16 = arith.constant 1.000000e+00 : f32
    %37 = vector.broadcast %cst_16 : f32 to vector<16x128xf32>
    %38 = arith.addf %37, %36 : vector<16x128xf32>
    %39 = arith.divf %37, %38 : vector<16x128xf32>
    %40 = vector.extract_strided_slice %33 {offsets = [0, 128], sizes = [16, 128], strides = [1, 1]} : vector<16x384xf32> to vector<16x128xf32>
    %41 = arith.negf %40 : vector<16x128xf32>
    %42 = math.exp %41 : vector<16x128xf32>
    %cst_17 = arith.constant 1.000000e+00 : f32
    %43 = vector.broadcast %cst_17 : f32 to vector<16x128xf32>
    %44 = arith.addf %43, %42 : vector<16x128xf32>
    %45 = arith.divf %43, %44 : vector<16x128xf32>
    %46 = vector.extract_strided_slice %33 {offsets = [0, 256], sizes = [16, 128], strides = [1, 1]} : vector<16x384xf32> to vector<16x128xf32>
    %c0_18 = arith.constant 0 : index
    %c0_19 = arith.constant 0 : index
    %47 = vector.load %arg9[%c0_18, %c0_19] : memref<1x128xf32, #tpu.memory_space<vmem>>, vector<1x128xf32>
    %48 = vector.broadcast %47 : vector<1x128xf32> to vector<16x128xf32>
    %49 = arith.mulf %39, %48 : vector<16x128xf32>
    %50 = arith.addf %46, %49 : vector<16x128xf32>
    %51 = math.tanh %50 : vector<16x128xf32>
    %52 = vector.extract_strided_slice %45 {offsets = [0, 0], sizes = [16, 32], strides = [1, 1]} : vector<16x128xf32> to vector<16x32xf32>
    %cst_20 = arith.constant 1.000000e+00 : f32
    %53 = vector.broadcast %cst_20 : f32 to vector<16x32xf32>
    %54 = arith.subf %53, %52 : vector<16x32xf32>
    %55 = vector.extract_strided_slice %51 {offsets = [0, 0], sizes = [16, 32], strides = [1, 1]} : vector<16x128xf32> to vector<16x32xf32>
    %56 = arith.mulf %54, %55 : vector<16x32xf32>
    %57 = vector.extract_strided_slice %0 {offsets = [0, 256], sizes = [16, 32], strides = [1, 1]} : vector<16x1280xf32> to vector<16x32xf32>
    %cst_21 = arith.constant 1.00250316 : f32
    %58 = vector.broadcast %cst_21 : f32 to vector<16x32xf32>
    %59 = arith.mulf %58, %57 : vector<16x32xf32>
    %60 = arith.addf %56, %59 : vector<16x32xf32>
    %61 = arith.truncf %60 : vector<16x32xf32> to vector<16x32xbf16>
    %c0_22 = arith.constant 0 : index
    %c0_23 = arith.constant 0 : index
    %c0_24 = arith.constant 0 : index
    %62 = vector.load %arg7[%c0_22, %c0_23, %c0_24] : memref<3x32x512xbf16, #tpu.memory_space<vmem>>, vector<1x32x512xbf16>
    %63 = vector.shape_cast %62 : vector<1x32x512xbf16> to vector<32x512xbf16>
    %cst_25 = arith.constant dense<0.000000e+00> : vector<16x512xf32>
    %64 = tpu.matmul %61, %63, %cst_25 {dimension_numbers = #tpu.dot_dimension_numbers<[1], [0], [0], [1], [0, 0, 1, 1], [], []>} : vector<16x32xbf16>, vector<32x512xbf16>, vector<16x512xf32> -> vector<16x512xf32>
    %c0_26 = arith.constant 0 : index
    %c0_27 = arith.constant 0 : index
    %c0_28 = arith.constant 0 : index
    %65 = vector.load %arg8[%c0_26, %c0_27, %c0_28] : memref<3x1x512xf32, #tpu.memory_space<vmem>>, vector<1x1x512xf32>
    %66 = vector.shape_cast %65 : vector<1x1x512xf32> to vector<1x512xf32>
    %67 = vector.broadcast %66 : vector<1x512xf32> to vector<16x512xf32>
    %68 = arith.addf %64, %67 : vector<16x512xf32>
    %69 = vector.extract_strided_slice %68 {offsets = [0, 384], sizes = [16, 32], strides = [1, 1]} : vector<16x512xf32> to vector<16x32xf32>
    %cst_29 = arith.constant 0.000000e+00 : f32
    %70 = vector.broadcast %cst_29 : f32 to vector<16x32xf32>
    %71 = arith.maximumf %69, %70 : vector<16x32xf32>
    %72 = arith.truncf %71 : vector<16x32xf32> to vector<16x32xbf16>
    %c0_30 = arith.constant 0 : index
    %c0_31 = arith.constant 0 : index
    %c0_32 = arith.constant 0 : index
    %73 = vector.load %arg10[%c0_30, %c0_31, %c0_32] : memref<3x32x1xbf16, #tpu.memory_space<vmem>>, vector<1x32x1xbf16>
    %74 = vector.shape_cast %73 : vector<1x32x1xbf16> to vector<32x1xbf16>
    %cst_33 = arith.constant dense<0.000000e+00> : vector<16x1xf32>
    %75 = tpu.matmul %72, %74, %cst_33 {dimension_numbers = #tpu.dot_dimension_numbers<[1], [0], [0], [1], [0, 0, 1, 1], [], []>} : vector<16x32xbf16>, vector<32x1xbf16>, vector<16x1xf32> -> vector<16x1xf32>
    %c0_34 = arith.constant 0 : index
    %c0_35 = arith.constant 0 : index
    %c0_36 = arith.constant 0 : index
    %76 = vector.load %arg11[%c0_34, %c0_35, %c0_36] : memref<3x1x1xf32, #tpu.memory_space<vmem>>, vector<1x1x1xf32>
    %77 = vector.shape_cast %76 : vector<1x1x1xf32> to vector<1x1xf32>
    %78 = vector.broadcast %77 : vector<1x1xf32> to vector<16x1xf32>
    %79 = arith.addf %75, %78 : vector<16x1xf32>
    %80 = arith.negf %79 : vector<16x1xf32>
    %81 = math.exp %80 : vector<16x1xf32>
    %cst_37 = arith.constant 1.000000e+00 : f32
    %82 = vector.broadcast %cst_37 : f32 to vector<16x1xf32>
    %83 = arith.addf %82, %81 : vector<16x1xf32>
    %84 = arith.divf %82, %83 : vector<16x1xf32>
    %cst_38 = arith.constant 5.000000e-01 : f32
    %85 = vector.broadcast %cst_38 : f32 to vector<16x1xf32>
    %86 = arith.cmpf oge, %84, %85 : vector<16x1xf32>
    %87 = arith.extui %86 : vector<16x1xi1> to vector<16x1xi32>
    %88 = arith.sitofp %87 : vector<16x1xi32> to vector<16x1xf32>
    %89 = vector.extract_strided_slice %8 {offsets = [0, 512], sizes = [16, 384], strides = [1, 1]} : vector<16x1664xf32> to vector<16x384xf32>
    %c1 = arith.constant 1 : index
    %c0_39 = arith.constant 0 : index
    %c0_40 = arith.constant 0 : index
    %90 = vector.load %arg6[%c1, %c0_39, %c0_40] : memref<4x1x384xf32, #tpu.memory_space<vmem>>, vector<1x1x384xf32>
    %91 = vector.shape_cast %90 : vector<1x1x384xf32> to vector<1x384xf32>
    %92 = vector.broadcast %88 : vector<16x1xf32> to vector<16x384xf32>
    %93 = vector.broadcast %91 : vector<1x384xf32> to vector<16x384xf32>
    %94 = arith.mulf %92, %93 : vector<16x384xf32>
    %95 = arith.addf %89, %94 : vector<16x384xf32>
    %96 = vector.extract_strided_slice %95 {offsets = [0, 0], sizes = [16, 128], strides = [1, 1]} : vector<16x384xf32> to vector<16x128xf32>
    %97 = vector.extract_strided_slice %68 {offsets = [0, 0], sizes = [16, 128], strides = [1, 1]} : vector<16x512xf32> to vector<16x128xf32>
    %98 = arith.addf %96, %97 : vector<16x128xf32>
    %99 = arith.negf %98 : vector<16x128xf32>
    %100 = math.exp %99 : vector<16x128xf32>
    %cst_41 = arith.constant 1.000000e+00 : f32
    %101 = vector.broadcast %cst_41 : f32 to vector<16x128xf32>
    %102 = arith.addf %101, %100 : vector<16x128xf32>
    %103 = arith.divf %101, %102 : vector<16x128xf32>
    %104 = vector.extract_strided_slice %95 {offsets = [0, 128], sizes = [16, 128], strides = [1, 1]} : vector<16x384xf32> to vector<16x128xf32>
    %105 = vector.extract_strided_slice %68 {offsets = [0, 128], sizes = [16, 128], strides = [1, 1]} : vector<16x512xf32> to vector<16x128xf32>
    %106 = arith.addf %104, %105 : vector<16x128xf32>
    %107 = arith.negf %106 : vector<16x128xf32>
    %108 = math.exp %107 : vector<16x128xf32>
    %cst_42 = arith.constant 1.000000e+00 : f32
    %109 = vector.broadcast %cst_42 : f32 to vector<16x128xf32>
    %110 = arith.addf %109, %108 : vector<16x128xf32>
    %111 = arith.divf %109, %110 : vector<16x128xf32>
    %112 = vector.extract_strided_slice %95 {offsets = [0, 256], sizes = [16, 128], strides = [1, 1]} : vector<16x384xf32> to vector<16x128xf32>
    %113 = vector.extract_strided_slice %68 {offsets = [0, 256], sizes = [16, 128], strides = [1, 1]} : vector<16x512xf32> to vector<16x128xf32>
    %114 = arith.mulf %103, %113 : vector<16x128xf32>
    %115 = arith.addf %112, %114 : vector<16x128xf32>
    %116 = math.tanh %115 : vector<16x128xf32>
    %117 = vector.extract_strided_slice %111 {offsets = [0, 0], sizes = [16, 32], strides = [1, 1]} : vector<16x128xf32> to vector<16x32xf32>
    %cst_43 = arith.constant 1.000000e+00 : f32
    %118 = vector.broadcast %cst_43 : f32 to vector<16x32xf32>
    %119 = arith.subf %118, %117 : vector<16x32xf32>
    %120 = vector.extract_strided_slice %116 {offsets = [0, 0], sizes = [16, 32], strides = [1, 1]} : vector<16x128xf32> to vector<16x32xf32>
    %121 = arith.mulf %119, %120 : vector<16x32xf32>
    %122 = vector.extract_strided_slice %111 {offsets = [0, 0], sizes = [16, 32], strides = [1, 1]} : vector<16x128xf32> to vector<16x32xf32>
    %123 = arith.mulf %122, %60 : vector<16x32xf32>
    %124 = arith.addf %121, %123 : vector<16x32xf32>
    %125 = vector.extract_strided_slice %0 {offsets = [0, 384], sizes = [16, 32], strides = [1, 1]} : vector<16x1280xf32> to vector<16x32xf32>
    %cst_44 = arith.constant 1.00250316 : f32
    %126 = vector.broadcast %cst_44 : f32 to vector<16x32xf32>
    %127 = arith.mulf %126, %125 : vector<16x32xf32>
    %128 = arith.addf %124, %127 : vector<16x32xf32>
    %129 = arith.truncf %128 : vector<16x32xf32> to vector<16x32xbf16>
    %c1_45 = arith.constant 1 : index
    %c0_46 = arith.constant 0 : index
    %c0_47 = arith.constant 0 : index
    %130 = vector.load %arg7[%c1_45, %c0_46, %c0_47] : memref<3x32x512xbf16, #tpu.memory_space<vmem>>, vector<1x32x512xbf16>
    %131 = vector.shape_cast %130 : vector<1x32x512xbf16> to vector<32x512xbf16>
    %cst_48 = arith.constant dense<0.000000e+00> : vector<16x512xf32>
    %132 = tpu.matmul %129, %131, %cst_48 {dimension_numbers = #tpu.dot_dimension_numbers<[1], [0], [0], [1], [0, 0, 1, 1], [], []>} : vector<16x32xbf16>, vector<32x512xbf16>, vector<16x512xf32> -> vector<16x512xf32>
    %c1_49 = arith.constant 1 : index
    %c0_50 = arith.constant 0 : index
    %c0_51 = arith.constant 0 : index
    %133 = vector.load %arg8[%c1_49, %c0_50, %c0_51] : memref<3x1x512xf32, #tpu.memory_space<vmem>>, vector<1x1x512xf32>
    %134 = vector.shape_cast %133 : vector<1x1x512xf32> to vector<1x512xf32>
    %135 = vector.broadcast %134 : vector<1x512xf32> to vector<16x512xf32>
    %136 = arith.addf %132, %135 : vector<16x512xf32>
    %137 = vector.extract_strided_slice %136 {offsets = [0, 384], sizes = [16, 32], strides = [1, 1]} : vector<16x512xf32> to vector<16x32xf32>
    %cst_52 = arith.constant 0.000000e+00 : f32
    %138 = vector.broadcast %cst_52 : f32 to vector<16x32xf32>
    %139 = arith.maximumf %137, %138 : vector<16x32xf32>
    %140 = arith.truncf %139 : vector<16x32xf32> to vector<16x32xbf16>
    %c1_53 = arith.constant 1 : index
    %c0_54 = arith.constant 0 : index
    %c0_55 = arith.constant 0 : index
    %141 = vector.load %arg10[%c1_53, %c0_54, %c0_55] : memref<3x32x1xbf16, #tpu.memory_space<vmem>>, vector<1x32x1xbf16>
    %142 = vector.shape_cast %141 : vector<1x32x1xbf16> to vector<32x1xbf16>
    %cst_56 = arith.constant dense<0.000000e+00> : vector<16x1xf32>
    %143 = tpu.matmul %140, %142, %cst_56 {dimension_numbers = #tpu.dot_dimension_numbers<[1], [0], [0], [1], [0, 0, 1, 1], [], []>} : vector<16x32xbf16>, vector<32x1xbf16>, vector<16x1xf32> -> vector<16x1xf32>
    %c1_57 = arith.constant 1 : index
    %c0_58 = arith.constant 0 : index
    %c0_59 = arith.constant 0 : index
    %144 = vector.load %arg11[%c1_57, %c0_58, %c0_59] : memref<3x1x1xf32, #tpu.memory_space<vmem>>, vector<1x1x1xf32>
    %145 = vector.shape_cast %144 : vector<1x1x1xf32> to vector<1x1xf32>
    %146 = vector.broadcast %145 : vector<1x1xf32> to vector<16x1xf32>
    %147 = arith.addf %143, %146 : vector<16x1xf32>
    %148 = arith.negf %147 : vector<16x1xf32>
    %149 = math.exp %148 : vector<16x1xf32>
    %cst_60 = arith.constant 1.000000e+00 : f32
    %150 = vector.broadcast %cst_60 : f32 to vector<16x1xf32>
    %151 = arith.addf %150, %149 : vector<16x1xf32>
    %152 = arith.divf %150, %151 : vector<16x1xf32>
    %cst_61 = arith.constant 5.000000e-01 : f32
    %153 = vector.broadcast %cst_61 : f32 to vector<16x1xf32>
    %154 = arith.cmpf oge, %152, %153 : vector<16x1xf32>
    %155 = arith.extui %154 : vector<16x1xi1> to vector<16x1xi32>
    %156 = arith.sitofp %155 : vector<16x1xi32> to vector<16x1xf32>
    %157 = vector.extract_strided_slice %8 {offsets = [0, 896], sizes = [16, 384], strides = [1, 1]} : vector<16x1664xf32> to vector<16x384xf32>
    %c2 = arith.constant 2 : index
    %c0_62 = arith.constant 0 : index
    %c0_63 = arith.constant 0 : index
    %158 = vector.load %arg6[%c2, %c0_62, %c0_63] : memref<4x1x384xf32, #tpu.memory_space<vmem>>, vector<1x1x384xf32>
    %159 = vector.shape_cast %158 : vector<1x1x384xf32> to vector<1x384xf32>
    %160 = vector.broadcast %156 : vector<16x1xf32> to vector<16x384xf32>
    %161 = vector.broadcast %159 : vector<1x384xf32> to vector<16x384xf32>
    %162 = arith.mulf %160, %161 : vector<16x384xf32>
    %163 = arith.addf %157, %162 : vector<16x384xf32>
    %164 = vector.extract_strided_slice %163 {offsets = [0, 0], sizes = [16, 128], strides = [1, 1]} : vector<16x384xf32> to vector<16x128xf32>
    %165 = vector.extract_strided_slice %136 {offsets = [0, 0], sizes = [16, 128], strides = [1, 1]} : vector<16x512xf32> to vector<16x128xf32>
    %166 = arith.addf %164, %165 : vector<16x128xf32>
    %167 = arith.negf %166 : vector<16x128xf32>
    %168 = math.exp %167 : vector<16x128xf32>
    %cst_64 = arith.constant 1.000000e+00 : f32
    %169 = vector.broadcast %cst_64 : f32 to vector<16x128xf32>
    %170 = arith.addf %169, %168 : vector<16x128xf32>
    %171 = arith.divf %169, %170 : vector<16x128xf32>
    %172 = vector.extract_strided_slice %163 {offsets = [0, 128], sizes = [16, 128], strides = [1, 1]} : vector<16x384xf32> to vector<16x128xf32>
    %173 = vector.extract_strided_slice %136 {offsets = [0, 128], sizes = [16, 128], strides = [1, 1]} : vector<16x512xf32> to vector<16x128xf32>
    %174 = arith.addf %172, %173 : vector<16x128xf32>
    %175 = arith.negf %174 : vector<16x128xf32>
    %176 = math.exp %175 : vector<16x128xf32>
    %cst_65 = arith.constant 1.000000e+00 : f32
    %177 = vector.broadcast %cst_65 : f32 to vector<16x128xf32>
    %178 = arith.addf %177, %176 : vector<16x128xf32>
    %179 = arith.divf %177, %178 : vector<16x128xf32>
    %180 = vector.extract_strided_slice %163 {offsets = [0, 256], sizes = [16, 128], strides = [1, 1]} : vector<16x384xf32> to vector<16x128xf32>
    %181 = vector.extract_strided_slice %136 {offsets = [0, 256], sizes = [16, 128], strides = [1, 1]} : vector<16x512xf32> to vector<16x128xf32>
    %182 = arith.mulf %171, %181 : vector<16x128xf32>
    %183 = arith.addf %180, %182 : vector<16x128xf32>
    %184 = math.tanh %183 : vector<16x128xf32>
    %185 = vector.extract_strided_slice %179 {offsets = [0, 0], sizes = [16, 32], strides = [1, 1]} : vector<16x128xf32> to vector<16x32xf32>
    %cst_66 = arith.constant 1.000000e+00 : f32
    %186 = vector.broadcast %cst_66 : f32 to vector<16x32xf32>
    %187 = arith.subf %186, %185 : vector<16x32xf32>
    %188 = vector.extract_strided_slice %184 {offsets = [0, 0], sizes = [16, 32], strides = [1, 1]} : vector<16x128xf32> to vector<16x32xf32>
    %189 = arith.mulf %187, %188 : vector<16x32xf32>
    %190 = vector.extract_strided_slice %179 {offsets = [0, 0], sizes = [16, 32], strides = [1, 1]} : vector<16x128xf32> to vector<16x32xf32>
    %191 = arith.mulf %190, %128 : vector<16x32xf32>
    %192 = arith.addf %189, %191 : vector<16x32xf32>
    %193 = vector.extract_strided_slice %0 {offsets = [0, 512], sizes = [16, 32], strides = [1, 1]} : vector<16x1280xf32> to vector<16x32xf32>
    %cst_67 = arith.constant 1.00250316 : f32
    %194 = vector.broadcast %cst_67 : f32 to vector<16x32xf32>
    %195 = arith.mulf %194, %193 : vector<16x32xf32>
    %196 = arith.addf %192, %195 : vector<16x32xf32>
    %197 = arith.truncf %196 : vector<16x32xf32> to vector<16x32xbf16>
    %c2_68 = arith.constant 2 : index
    %c0_69 = arith.constant 0 : index
    %c0_70 = arith.constant 0 : index
    %198 = vector.load %arg7[%c2_68, %c0_69, %c0_70] : memref<3x32x512xbf16, #tpu.memory_space<vmem>>, vector<1x32x512xbf16>
    %199 = vector.shape_cast %198 : vector<1x32x512xbf16> to vector<32x512xbf16>
    %cst_71 = arith.constant dense<0.000000e+00> : vector<16x512xf32>
    %200 = tpu.matmul %197, %199, %cst_71 {dimension_numbers = #tpu.dot_dimension_numbers<[1], [0], [0], [1], [0, 0, 1, 1], [], []>} : vector<16x32xbf16>, vector<32x512xbf16>, vector<16x512xf32> -> vector<16x512xf32>
    %c2_72 = arith.constant 2 : index
    %c0_73 = arith.constant 0 : index
    %c0_74 = arith.constant 0 : index
    %201 = vector.load %arg8[%c2_72, %c0_73, %c0_74] : memref<3x1x512xf32, #tpu.memory_space<vmem>>, vector<1x1x512xf32>
    %202 = vector.shape_cast %201 : vector<1x1x512xf32> to vector<1x512xf32>
    %203 = vector.broadcast %202 : vector<1x512xf32> to vector<16x512xf32>
    %204 = arith.addf %200, %203 : vector<16x512xf32>
    %205 = vector.extract_strided_slice %204 {offsets = [0, 384], sizes = [16, 32], strides = [1, 1]} : vector<16x512xf32> to vector<16x32xf32>
    %cst_75 = arith.constant 0.000000e+00 : f32
    %206 = vector.broadcast %cst_75 : f32 to vector<16x32xf32>
    %207 = arith.maximumf %205, %206 : vector<16x32xf32>
    %208 = arith.truncf %207 : vector<16x32xf32> to vector<16x32xbf16>
    %c2_76 = arith.constant 2 : index
    %c0_77 = arith.constant 0 : index
    %c0_78 = arith.constant 0 : index
    %209 = vector.load %arg10[%c2_76, %c0_77, %c0_78] : memref<3x32x1xbf16, #tpu.memory_space<vmem>>, vector<1x32x1xbf16>
    %210 = vector.shape_cast %209 : vector<1x32x1xbf16> to vector<32x1xbf16>
    %cst_79 = arith.constant dense<0.000000e+00> : vector<16x1xf32>
    %211 = tpu.matmul %208, %210, %cst_79 {dimension_numbers = #tpu.dot_dimension_numbers<[1], [0], [0], [1], [0, 0, 1, 1], [], []>} : vector<16x32xbf16>, vector<32x1xbf16>, vector<16x1xf32> -> vector<16x1xf32>
    %c2_80 = arith.constant 2 : index
    %c0_81 = arith.constant 0 : index
    %c0_82 = arith.constant 0 : index
    %212 = vector.load %arg11[%c2_80, %c0_81, %c0_82] : memref<3x1x1xf32, #tpu.memory_space<vmem>>, vector<1x1x1xf32>
    %213 = vector.shape_cast %212 : vector<1x1x1xf32> to vector<1x1xf32>
    %214 = vector.broadcast %213 : vector<1x1xf32> to vector<16x1xf32>
    %215 = arith.addf %211, %214 : vector<16x1xf32>
    %216 = arith.negf %215 : vector<16x1xf32>
    %217 = math.exp %216 : vector<16x1xf32>
    %cst_83 = arith.constant 1.000000e+00 : f32
    %218 = vector.broadcast %cst_83 : f32 to vector<16x1xf32>
    %219 = arith.addf %218, %217 : vector<16x1xf32>
    %220 = arith.divf %218, %219 : vector<16x1xf32>
    %cst_84 = arith.constant 5.000000e-01 : f32
    %221 = vector.broadcast %cst_84 : f32 to vector<16x1xf32>
    %222 = arith.cmpf oge, %220, %221 : vector<16x1xf32>
    %223 = arith.extui %222 : vector<16x1xi1> to vector<16x1xi32>
    %224 = arith.sitofp %223 : vector<16x1xi32> to vector<16x1xf32>
    %225 = vector.extract_strided_slice %8 {offsets = [0, 1280], sizes = [16, 384], strides = [1, 1]} : vector<16x1664xf32> to vector<16x384xf32>
    %c3 = arith.constant 3 : index
    %c0_85 = arith.constant 0 : index
    %c0_86 = arith.constant 0 : index
    %226 = vector.load %arg6[%c3, %c0_85, %c0_86] : memref<4x1x384xf32, #tpu.memory_space<vmem>>, vector<1x1x384xf32>
    %227 = vector.shape_cast %226 : vector<1x1x384xf32> to vector<1x384xf32>
    %228 = vector.broadcast %224 : vector<16x1xf32> to vector<16x384xf32>
    %229 = vector.broadcast %227 : vector<1x384xf32> to vector<16x384xf32>
    %230 = arith.mulf %228, %229 : vector<16x384xf32>
    %231 = arith.addf %225, %230 : vector<16x384xf32>
    %232 = vector.extract_strided_slice %231 {offsets = [0, 0], sizes = [16, 128], strides = [1, 1]} : vector<16x384xf32> to vector<16x128xf32>
    %233 = vector.extract_strided_slice %204 {offsets = [0, 0], sizes = [16, 128], strides = [1, 1]} : vector<16x512xf32> to vector<16x128xf32>
    %234 = arith.addf %232, %233 : vector<16x128xf32>
    %235 = arith.negf %234 : vector<16x128xf32>
    %236 = math.exp %235 : vector<16x128xf32>
    %cst_87 = arith.constant 1.000000e+00 : f32
    %237 = vector.broadcast %cst_87 : f32 to vector<16x128xf32>
    %238 = arith.addf %237, %236 : vector<16x128xf32>
    %239 = arith.divf %237, %238 : vector<16x128xf32>
    %240 = vector.extract_strided_slice %231 {offsets = [0, 128], sizes = [16, 128], strides = [1, 1]} : vector<16x384xf32> to vector<16x128xf32>
    %241 = vector.extract_strided_slice %204 {offsets = [0, 128], sizes = [16, 128], strides = [1, 1]} : vector<16x512xf32> to vector<16x128xf32>
    %242 = arith.addf %240, %241 : vector<16x128xf32>
    %243 = arith.negf %242 : vector<16x128xf32>
    %244 = math.exp %243 : vector<16x128xf32>
    %cst_88 = arith.constant 1.000000e+00 : f32
    %245 = vector.broadcast %cst_88 : f32 to vector<16x128xf32>
    %246 = arith.addf %245, %244 : vector<16x128xf32>
    %247 = arith.divf %245, %246 : vector<16x128xf32>
    %248 = vector.extract_strided_slice %231 {offsets = [0, 256], sizes = [16, 128], strides = [1, 1]} : vector<16x384xf32> to vector<16x128xf32>
    %249 = vector.extract_strided_slice %204 {offsets = [0, 256], sizes = [16, 128], strides = [1, 1]} : vector<16x512xf32> to vector<16x128xf32>
    %250 = arith.mulf %239, %249 : vector<16x128xf32>
    %251 = arith.addf %248, %250 : vector<16x128xf32>
    %252 = math.tanh %251 : vector<16x128xf32>
    %253 = vector.extract_strided_slice %247 {offsets = [0, 0], sizes = [16, 32], strides = [1, 1]} : vector<16x128xf32> to vector<16x32xf32>
    %cst_89 = arith.constant 1.000000e+00 : f32
    %254 = vector.broadcast %cst_89 : f32 to vector<16x32xf32>
    %255 = arith.subf %254, %253 : vector<16x32xf32>
    %256 = vector.extract_strided_slice %252 {offsets = [0, 0], sizes = [16, 32], strides = [1, 1]} : vector<16x128xf32> to vector<16x32xf32>
    %257 = arith.mulf %255, %256 : vector<16x32xf32>
    %258 = vector.extract_strided_slice %247 {offsets = [0, 0], sizes = [16, 32], strides = [1, 1]} : vector<16x128xf32> to vector<16x32xf32>
    %259 = arith.mulf %258, %196 : vector<16x32xf32>
    %260 = arith.addf %257, %259 : vector<16x32xf32>
    %261 = vector.extract_strided_slice %0 {offsets = [0, 640], sizes = [16, 32], strides = [1, 1]} : vector<16x1280xf32> to vector<16x32xf32>
    %cst_90 = arith.constant 1.00250316 : f32
    %262 = vector.broadcast %cst_90 : f32 to vector<16x32xf32>
    %263 = arith.mulf %262, %261 : vector<16x32xf32>
    %264 = arith.addf %260, %263 : vector<16x32xf32>
    %265 = arith.truncf %264 : vector<16x32xf32> to vector<16x32xbf16>
    %c0_91 = arith.constant 0 : index
    %c0_92 = arith.constant 0 : index
    %266 = vector.load %arg12[%c0_91, %c0_92] : memref<32x256xbf16, #tpu.memory_space<vmem>>, vector<32x256xbf16>
    %cst_93 = arith.constant dense<0.000000e+00> : vector<16x256xf32>
    %267 = tpu.matmul %265, %266, %cst_93 {dimension_numbers = #tpu.dot_dimension_numbers<[1], [0], [0], [1], [0, 0, 1, 1], [], []>} : vector<16x32xbf16>, vector<32x256xbf16>, vector<16x256xf32> -> vector<16x256xf32>
    %c0_94 = arith.constant 0 : index
    %c0_95 = arith.constant 0 : index
    %268 = vector.load %arg13[%c0_94, %c0_95] : memref<1x256xf32, #tpu.memory_space<vmem>>, vector<1x256xf32>
    %269 = vector.broadcast %268 : vector<1x256xf32> to vector<16x256xf32>
    %270 = arith.addf %267, %269 : vector<16x256xf32>
    %271 = vector.extract_strided_slice %270 {offsets = [0, 0], sizes = [16, 8], strides = [1, 1]} : vector<16x256xf32> to vector<16x8xf32>
    %272 = vector.extract_strided_slice %270 {offsets = [0, 128], sizes = [16, 8], strides = [1, 1]} : vector<16x256xf32> to vector<16x8xf32>
    %cst_96 = arith.constant 0.000000e+00 : f32
    %273 = vector.broadcast %cst_96 : f32 to vector<16x8xf32>
    %274 = arith.maximumf %272, %273 : vector<16x8xf32>
    %275 = vector.broadcast %cst_96 : f32 to vector<16x8xf32>
    %276 = arith.subf %272, %275 : vector<16x8xf32>
    %277 = arith.cmpf one, %276, %276 : vector<16x8xf32>
    %278 = vector.broadcast %cst_96 : f32 to vector<16x8xf32>
    %279 = arith.addf %272, %278 : vector<16x8xf32>
    %280 = math.absf %276 : vector<16x8xf32>
    %cst_97 = arith.constant 0.000000e+00 : f32
    %281 = vector.broadcast %cst_97 : f32 to vector<16x8xf32>
    %282 = arith.subf %281, %280 : vector<16x8xf32>
    %283 = math.exp %282 : vector<16x8xf32>
    %284 = math.log1p %283 : vector<16x8xf32>
    %285 = arith.addf %274, %284 : vector<16x8xf32>
    %286 = arith.select %277, %279, %285 : vector<16x8xi1>, vector<16x8xf32>
    %cst_98 = arith.constant 5.000000e-01 : f32
    %287 = vector.broadcast %cst_98 : f32 to vector<16x8xf32>
    %288 = arith.mulf %287, %286 : vector<16x8xf32>
    %289 = math.exp %288 : vector<16x8xf32>
    %290 = arith.mulf %289, %2 : vector<16x8xf32>
    %291 = arith.addf %271, %290 : vector<16x8xf32>
    %292 = arith.truncf %291 : vector<16x8xf32> to vector<16x8xbf16>
    %c0_99 = arith.constant 0 : index
    %c0_100 = arith.constant 0 : index
    %293 = vector.load %arg14[%c0_99, %c0_100] : memref<8x1536xbf16, #tpu.memory_space<vmem>>, vector<8x1536xbf16>
    %cst_101 = arith.constant dense<0.000000e+00> : vector<16x1536xf32>
    %294 = tpu.matmul %292, %293, %cst_101 {dimension_numbers = #tpu.dot_dimension_numbers<[1], [0], [0], [1], [0, 0, 1, 1], [], []>} : vector<16x8xbf16>, vector<8x1536xbf16>, vector<16x1536xf32> -> vector<16x1536xf32>
    %c0_102 = arith.constant 0 : index
    %c0_103 = arith.constant 0 : index
    %295 = vector.load %arg15[%c0_102, %c0_103] : memref<1x1536xf32, #tpu.memory_space<vmem>>, vector<1x1536xf32>
    %296 = vector.broadcast %295 : vector<1x1536xf32> to vector<16x1536xf32>
    %297 = arith.addf %294, %296 : vector<16x1536xf32>
    %cst_104 = arith.constant 5.000000e-01 : f32
    %298 = vector.broadcast %cst_104 : f32 to vector<16x1xf32>
    %299 = arith.cmpf ogt, %22, %298 : vector<16x1xf32>
    %300 = arith.extui %299 : vector<16x1xi1> to vector<16x1xi32>
    %301 = arith.sitofp %300 : vector<16x1xi32> to vector<16x1xf32>
    %302 = vector.extract_strided_slice %297 {offsets = [0, 0], sizes = [16, 384], strides = [1, 1]} : vector<16x1536xf32> to vector<16x384xf32>
    %c0_105 = arith.constant 0 : index
    %c0_106 = arith.constant 0 : index
    %c0_107 = arith.constant 0 : index
    %303 = vector.load %arg16[%c0_105, %c0_106, %c0_107] : memref<4x1x384xf32, #tpu.memory_space<vmem>>, vector<1x1x384xf32>
    %304 = vector.shape_cast %303 : vector<1x1x384xf32> to vector<1x384xf32>
    %305 = vector.broadcast %301 : vector<16x1xf32> to vector<16x384xf32>
    %306 = vector.broadcast %304 : vector<1x384xf32> to vector<16x384xf32>
    %307 = arith.mulf %305, %306 : vector<16x384xf32>
    %308 = arith.addf %302, %307 : vector<16x384xf32>
    %309 = vector.extract_strided_slice %308 {offsets = [0, 0], sizes = [16, 128], strides = [1, 1]} : vector<16x384xf32> to vector<16x128xf32>
    %310 = arith.negf %309 : vector<16x128xf32>
    %311 = math.exp %310 : vector<16x128xf32>
    %cst_108 = arith.constant 1.000000e+00 : f32
    %312 = vector.broadcast %cst_108 : f32 to vector<16x128xf32>
    %313 = arith.addf %312, %311 : vector<16x128xf32>
    %314 = arith.divf %312, %313 : vector<16x128xf32>
    %315 = vector.extract_strided_slice %308 {offsets = [0, 128], sizes = [16, 128], strides = [1, 1]} : vector<16x384xf32> to vector<16x128xf32>
    %316 = arith.negf %315 : vector<16x128xf32>
    %317 = math.exp %316 : vector<16x128xf32>
    %cst_109 = arith.constant 1.000000e+00 : f32
    %318 = vector.broadcast %cst_109 : f32 to vector<16x128xf32>
    %319 = arith.addf %318, %317 : vector<16x128xf32>
    %320 = arith.divf %318, %319 : vector<16x128xf32>
    %321 = vector.extract_strided_slice %308 {offsets = [0, 256], sizes = [16, 128], strides = [1, 1]} : vector<16x384xf32> to vector<16x128xf32>
    %c0_110 = arith.constant 0 : index
    %c0_111 = arith.constant 0 : index
    %322 = vector.load %arg19[%c0_110, %c0_111] : memref<1x128xf32, #tpu.memory_space<vmem>>, vector<1x128xf32>
    %323 = vector.broadcast %322 : vector<1x128xf32> to vector<16x128xf32>
    %324 = arith.mulf %314, %323 : vector<16x128xf32>
    %325 = arith.addf %321, %324 : vector<16x128xf32>
    %326 = math.tanh %325 : vector<16x128xf32>
    %327 = vector.extract_strided_slice %320 {offsets = [0, 0], sizes = [16, 32], strides = [1, 1]} : vector<16x128xf32> to vector<16x32xf32>
    %cst_112 = arith.constant 1.000000e+00 : f32
    %328 = vector.broadcast %cst_112 : f32 to vector<16x32xf32>
    %329 = arith.subf %328, %327 : vector<16x32xf32>
    %330 = vector.extract_strided_slice %326 {offsets = [0, 0], sizes = [16, 32], strides = [1, 1]} : vector<16x128xf32> to vector<16x32xf32>
    %331 = arith.mulf %329, %330 : vector<16x32xf32>
    %332 = vector.extract_strided_slice %0 {offsets = [0, 768], sizes = [16, 32], strides = [1, 1]} : vector<16x1280xf32> to vector<16x32xf32>
    %cst_113 = arith.constant 1.00250316 : f32
    %333 = vector.broadcast %cst_113 : f32 to vector<16x32xf32>
    %334 = arith.mulf %333, %332 : vector<16x32xf32>
    %335 = arith.addf %331, %334 : vector<16x32xf32>
    %cst_114 = arith.constant 5.000000e-01 : f32
    %336 = vector.broadcast %cst_114 : f32 to vector<16x1xf32>
    %337 = arith.cmpf ogt, %84, %336 : vector<16x1xf32>
    %338 = arith.extui %337 : vector<16x1xi1> to vector<16x1xi32>
    %339 = arith.sitofp %338 : vector<16x1xi32> to vector<16x1xf32>
    %340 = vector.extract_strided_slice %297 {offsets = [0, 384], sizes = [16, 384], strides = [1, 1]} : vector<16x1536xf32> to vector<16x384xf32>
    %c1_115 = arith.constant 1 : index
    %c0_116 = arith.constant 0 : index
    %c0_117 = arith.constant 0 : index
    %341 = vector.load %arg16[%c1_115, %c0_116, %c0_117] : memref<4x1x384xf32, #tpu.memory_space<vmem>>, vector<1x1x384xf32>
    %342 = vector.shape_cast %341 : vector<1x1x384xf32> to vector<1x384xf32>
    %343 = vector.broadcast %339 : vector<16x1xf32> to vector<16x384xf32>
    %344 = vector.broadcast %342 : vector<1x384xf32> to vector<16x384xf32>
    %345 = arith.mulf %343, %344 : vector<16x384xf32>
    %346 = arith.addf %340, %345 : vector<16x384xf32>
    %347 = arith.truncf %335 : vector<16x32xf32> to vector<16x32xbf16>
    %c0_118 = arith.constant 0 : index
    %c0_119 = arith.constant 0 : index
    %c0_120 = arith.constant 0 : index
    %348 = vector.load %arg17[%c0_118, %c0_119, %c0_120] : memref<3x32x384xbf16, #tpu.memory_space<vmem>>, vector<1x32x384xbf16>
    %349 = vector.shape_cast %348 : vector<1x32x384xbf16> to vector<32x384xbf16>
    %cst_121 = arith.constant dense<0.000000e+00> : vector<16x384xf32>
    %350 = tpu.matmul %347, %349, %cst_121 {dimension_numbers = #tpu.dot_dimension_numbers<[1], [0], [0], [1], [0, 0, 1, 1], [], []>} : vector<16x32xbf16>, vector<32x384xbf16>, vector<16x384xf32> -> vector<16x384xf32>
    %c0_122 = arith.constant 0 : index
    %c0_123 = arith.constant 0 : index
    %c0_124 = arith.constant 0 : index
    %351 = vector.load %arg18[%c0_122, %c0_123, %c0_124] : memref<3x1x384xf32, #tpu.memory_space<vmem>>, vector<1x1x384xf32>
    %352 = vector.shape_cast %351 : vector<1x1x384xf32> to vector<1x384xf32>
    %353 = vector.broadcast %352 : vector<1x384xf32> to vector<16x384xf32>
    %354 = arith.addf %350, %353 : vector<16x384xf32>
    %355 = vector.extract_strided_slice %346 {offsets = [0, 0], sizes = [16, 128], strides = [1, 1]} : vector<16x384xf32> to vector<16x128xf32>
    %356 = vector.extract_strided_slice %354 {offsets = [0, 0], sizes = [16, 128], strides = [1, 1]} : vector<16x384xf32> to vector<16x128xf32>
    %357 = arith.addf %355, %356 : vector<16x128xf32>
    %358 = arith.negf %357 : vector<16x128xf32>
    %359 = math.exp %358 : vector<16x128xf32>
    %cst_125 = arith.constant 1.000000e+00 : f32
    %360 = vector.broadcast %cst_125 : f32 to vector<16x128xf32>
    %361 = arith.addf %360, %359 : vector<16x128xf32>
    %362 = arith.divf %360, %361 : vector<16x128xf32>
    %363 = vector.extract_strided_slice %346 {offsets = [0, 128], sizes = [16, 128], strides = [1, 1]} : vector<16x384xf32> to vector<16x128xf32>
    %364 = vector.extract_strided_slice %354 {offsets = [0, 128], sizes = [16, 128], strides = [1, 1]} : vector<16x384xf32> to vector<16x128xf32>
    %365 = arith.addf %363, %364 : vector<16x128xf32>
    %366 = arith.negf %365 : vector<16x128xf32>
    %367 = math.exp %366 : vector<16x128xf32>
    %cst_126 = arith.constant 1.000000e+00 : f32
    %368 = vector.broadcast %cst_126 : f32 to vector<16x128xf32>
    %369 = arith.addf %368, %367 : vector<16x128xf32>
    %370 = arith.divf %368, %369 : vector<16x128xf32>
    %371 = vector.extract_strided_slice %346 {offsets = [0, 256], sizes = [16, 128], strides = [1, 1]} : vector<16x384xf32> to vector<16x128xf32>
    %372 = vector.extract_strided_slice %354 {offsets = [0, 256], sizes = [16, 128], strides = [1, 1]} : vector<16x384xf32> to vector<16x128xf32>
    %373 = arith.mulf %362, %372 : vector<16x128xf32>
    %374 = arith.addf %371, %373 : vector<16x128xf32>
    %375 = math.tanh %374 : vector<16x128xf32>
    %376 = vector.extract_strided_slice %370 {offsets = [0, 0], sizes = [16, 32], strides = [1, 1]} : vector<16x128xf32> to vector<16x32xf32>
    %cst_127 = arith.constant 1.000000e+00 : f32
    %377 = vector.broadcast %cst_127 : f32 to vector<16x32xf32>
    %378 = arith.subf %377, %376 : vector<16x32xf32>
    %379 = vector.extract_strided_slice %375 {offsets = [0, 0], sizes = [16, 32], strides = [1, 1]} : vector<16x128xf32> to vector<16x32xf32>
    %380 = arith.mulf %378, %379 : vector<16x32xf32>
    %381 = vector.extract_strided_slice %370 {offsets = [0, 0], sizes = [16, 32], strides = [1, 1]} : vector<16x128xf32> to vector<16x32xf32>
    %382 = arith.mulf %381, %335 : vector<16x32xf32>
    %383 = arith.addf %380, %382 : vector<16x32xf32>
    %384 = vector.extract_strided_slice %0 {offsets = [0, 896], sizes = [16, 32], strides = [1, 1]} : vector<16x1280xf32> to vector<16x32xf32>
    %cst_128 = arith.constant 1.00250316 : f32
    %385 = vector.broadcast %cst_128 : f32 to vector<16x32xf32>
    %386 = arith.mulf %385, %384 : vector<16x32xf32>
    %387 = arith.addf %383, %386 : vector<16x32xf32>
    %cst_129 = arith.constant 5.000000e-01 : f32
    %388 = vector.broadcast %cst_129 : f32 to vector<16x1xf32>
    %389 = arith.cmpf ogt, %152, %388 : vector<16x1xf32>
    %390 = arith.extui %389 : vector<16x1xi1> to vector<16x1xi32>
    %391 = arith.sitofp %390 : vector<16x1xi32> to vector<16x1xf32>
    %392 = vector.extract_strided_slice %297 {offsets = [0, 768], sizes = [16, 384], strides = [1, 1]} : vector<16x1536xf32> to vector<16x384xf32>
    %c2_130 = arith.constant 2 : index
    %c0_131 = arith.constant 0 : index
    %c0_132 = arith.constant 0 : index
    %393 = vector.load %arg16[%c2_130, %c0_131, %c0_132] : memref<4x1x384xf32, #tpu.memory_space<vmem>>, vector<1x1x384xf32>
    %394 = vector.shape_cast %393 : vector<1x1x384xf32> to vector<1x384xf32>
    %395 = vector.broadcast %391 : vector<16x1xf32> to vector<16x384xf32>
    %396 = vector.broadcast %394 : vector<1x384xf32> to vector<16x384xf32>
    %397 = arith.mulf %395, %396 : vector<16x384xf32>
    %398 = arith.addf %392, %397 : vector<16x384xf32>
    %399 = arith.truncf %387 : vector<16x32xf32> to vector<16x32xbf16>
    %c1_133 = arith.constant 1 : index
    %c0_134 = arith.constant 0 : index
    %c0_135 = arith.constant 0 : index
    %400 = vector.load %arg17[%c1_133, %c0_134, %c0_135] : memref<3x32x384xbf16, #tpu.memory_space<vmem>>, vector<1x32x384xbf16>
    %401 = vector.shape_cast %400 : vector<1x32x384xbf16> to vector<32x384xbf16>
    %cst_136 = arith.constant dense<0.000000e+00> : vector<16x384xf32>
    %402 = tpu.matmul %399, %401, %cst_136 {dimension_numbers = #tpu.dot_dimension_numbers<[1], [0], [0], [1], [0, 0, 1, 1], [], []>} : vector<16x32xbf16>, vector<32x384xbf16>, vector<16x384xf32> -> vector<16x384xf32>
    %c1_137 = arith.constant 1 : index
    %c0_138 = arith.constant 0 : index
    %c0_139 = arith.constant 0 : index
    %403 = vector.load %arg18[%c1_137, %c0_138, %c0_139] : memref<3x1x384xf32, #tpu.memory_space<vmem>>, vector<1x1x384xf32>
    %404 = vector.shape_cast %403 : vector<1x1x384xf32> to vector<1x384xf32>
    %405 = vector.broadcast %404 : vector<1x384xf32> to vector<16x384xf32>
    %406 = arith.addf %402, %405 : vector<16x384xf32>
    %407 = vector.extract_strided_slice %398 {offsets = [0, 0], sizes = [16, 128], strides = [1, 1]} : vector<16x384xf32> to vector<16x128xf32>
    %408 = vector.extract_strided_slice %406 {offsets = [0, 0], sizes = [16, 128], strides = [1, 1]} : vector<16x384xf32> to vector<16x128xf32>
    %409 = arith.addf %407, %408 : vector<16x128xf32>
    %410 = arith.negf %409 : vector<16x128xf32>
    %411 = math.exp %410 : vector<16x128xf32>
    %cst_140 = arith.constant 1.000000e+00 : f32
    %412 = vector.broadcast %cst_140 : f32 to vector<16x128xf32>
    %413 = arith.addf %412, %411 : vector<16x128xf32>
    %414 = arith.divf %412, %413 : vector<16x128xf32>
    %415 = vector.extract_strided_slice %398 {offsets = [0, 128], sizes = [16, 128], strides = [1, 1]} : vector<16x384xf32> to vector<16x128xf32>
    %416 = vector.extract_strided_slice %406 {offsets = [0, 128], sizes = [16, 128], strides = [1, 1]} : vector<16x384xf32> to vector<16x128xf32>
    %417 = arith.addf %415, %416 : vector<16x128xf32>
    %418 = arith.negf %417 : vector<16x128xf32>
    %419 = math.exp %418 : vector<16x128xf32>
    %cst_141 = arith.constant 1.000000e+00 : f32
    %420 = vector.broadcast %cst_141 : f32 to vector<16x128xf32>
    %421 = arith.addf %420, %419 : vector<16x128xf32>
    %422 = arith.divf %420, %421 : vector<16x128xf32>
    %423 = vector.extract_strided_slice %398 {offsets = [0, 256], sizes = [16, 128], strides = [1, 1]} : vector<16x384xf32> to vector<16x128xf32>
    %424 = vector.extract_strided_slice %406 {offsets = [0, 256], sizes = [16, 128], strides = [1, 1]} : vector<16x384xf32> to vector<16x128xf32>
    %425 = arith.mulf %414, %424 : vector<16x128xf32>
    %426 = arith.addf %423, %425 : vector<16x128xf32>
    %427 = math.tanh %426 : vector<16x128xf32>
    %428 = vector.extract_strided_slice %422 {offsets = [0, 0], sizes = [16, 32], strides = [1, 1]} : vector<16x128xf32> to vector<16x32xf32>
    %cst_142 = arith.constant 1.000000e+00 : f32
    %429 = vector.broadcast %cst_142 : f32 to vector<16x32xf32>
    %430 = arith.subf %429, %428 : vector<16x32xf32>
    %431 = vector.extract_strided_slice %427 {offsets = [0, 0], sizes = [16, 32], strides = [1, 1]} : vector<16x128xf32> to vector<16x32xf32>
    %432 = arith.mulf %430, %431 : vector<16x32xf32>
    %433 = vector.extract_strided_slice %422 {offsets = [0, 0], sizes = [16, 32], strides = [1, 1]} : vector<16x128xf32> to vector<16x32xf32>
    %434 = arith.mulf %433, %387 : vector<16x32xf32>
    %435 = arith.addf %432, %434 : vector<16x32xf32>
    %436 = vector.extract_strided_slice %0 {offsets = [0, 1024], sizes = [16, 32], strides = [1, 1]} : vector<16x1280xf32> to vector<16x32xf32>
    %cst_143 = arith.constant 1.00250316 : f32
    %437 = vector.broadcast %cst_143 : f32 to vector<16x32xf32>
    %438 = arith.mulf %437, %436 : vector<16x32xf32>
    %439 = arith.addf %435, %438 : vector<16x32xf32>
    %cst_144 = arith.constant 5.000000e-01 : f32
    %440 = vector.broadcast %cst_144 : f32 to vector<16x1xf32>
    %441 = arith.cmpf ogt, %220, %440 : vector<16x1xf32>
    %442 = arith.extui %441 : vector<16x1xi1> to vector<16x1xi32>
    %443 = arith.sitofp %442 : vector<16x1xi32> to vector<16x1xf32>
    %444 = vector.extract_strided_slice %297 {offsets = [0, 1152], sizes = [16, 384], strides = [1, 1]} : vector<16x1536xf32> to vector<16x384xf32>
    %c3_145 = arith.constant 3 : index
    %c0_146 = arith.constant 0 : index
    %c0_147 = arith.constant 0 : index
    %445 = vector.load %arg16[%c3_145, %c0_146, %c0_147] : memref<4x1x384xf32, #tpu.memory_space<vmem>>, vector<1x1x384xf32>
    %446 = vector.shape_cast %445 : vector<1x1x384xf32> to vector<1x384xf32>
    %447 = vector.broadcast %443 : vector<16x1xf32> to vector<16x384xf32>
    %448 = vector.broadcast %446 : vector<1x384xf32> to vector<16x384xf32>
    %449 = arith.mulf %447, %448 : vector<16x384xf32>
    %450 = arith.addf %444, %449 : vector<16x384xf32>
    %451 = arith.truncf %439 : vector<16x32xf32> to vector<16x32xbf16>
    %c2_148 = arith.constant 2 : index
    %c0_149 = arith.constant 0 : index
    %c0_150 = arith.constant 0 : index
    %452 = vector.load %arg17[%c2_148, %c0_149, %c0_150] : memref<3x32x384xbf16, #tpu.memory_space<vmem>>, vector<1x32x384xbf16>
    %453 = vector.shape_cast %452 : vector<1x32x384xbf16> to vector<32x384xbf16>
    %cst_151 = arith.constant dense<0.000000e+00> : vector<16x384xf32>
    %454 = tpu.matmul %451, %453, %cst_151 {dimension_numbers = #tpu.dot_dimension_numbers<[1], [0], [0], [1], [0, 0, 1, 1], [], []>} : vector<16x32xbf16>, vector<32x384xbf16>, vector<16x384xf32> -> vector<16x384xf32>
    %c2_152 = arith.constant 2 : index
    %c0_153 = arith.constant 0 : index
    %c0_154 = arith.constant 0 : index
    %455 = vector.load %arg18[%c2_152, %c0_153, %c0_154] : memref<3x1x384xf32, #tpu.memory_space<vmem>>, vector<1x1x384xf32>
    %456 = vector.shape_cast %455 : vector<1x1x384xf32> to vector<1x384xf32>
    %457 = vector.broadcast %456 : vector<1x384xf32> to vector<16x384xf32>
    %458 = arith.addf %454, %457 : vector<16x384xf32>
    %459 = vector.extract_strided_slice %450 {offsets = [0, 0], sizes = [16, 128], strides = [1, 1]} : vector<16x384xf32> to vector<16x128xf32>
    %460 = vector.extract_strided_slice %458 {offsets = [0, 0], sizes = [16, 128], strides = [1, 1]} : vector<16x384xf32> to vector<16x128xf32>
    %461 = arith.addf %459, %460 : vector<16x128xf32>
    %462 = arith.negf %461 : vector<16x128xf32>
    %463 = math.exp %462 : vector<16x128xf32>
    %cst_155 = arith.constant 1.000000e+00 : f32
    %464 = vector.broadcast %cst_155 : f32 to vector<16x128xf32>
    %465 = arith.addf %464, %463 : vector<16x128xf32>
    %466 = arith.divf %464, %465 : vector<16x128xf32>
    %467 = vector.extract_strided_slice %450 {offsets = [0, 128], sizes = [16, 128], strides = [1, 1]} : vector<16x384xf32> to vector<16x128xf32>
    %468 = vector.extract_strided_slice %458 {offsets = [0, 128], sizes = [16, 128], strides = [1, 1]} : vector<16x384xf32> to vector<16x128xf32>
    %469 = arith.addf %467, %468 : vector<16x128xf32>
    %470 = arith.negf %469 : vector<16x128xf32>
    %471 = math.exp %470 : vector<16x128xf32>
    %cst_156 = arith.constant 1.000000e+00 : f32
    %472 = vector.broadcast %cst_156 : f32 to vector<16x128xf32>
    %473 = arith.addf %472, %471 : vector<16x128xf32>
    %474 = arith.divf %472, %473 : vector<16x128xf32>
    %475 = vector.extract_strided_slice %450 {offsets = [0, 256], sizes = [16, 128], strides = [1, 1]} : vector<16x384xf32> to vector<16x128xf32>
    %476 = vector.extract_strided_slice %458 {offsets = [0, 256], sizes = [16, 128], strides = [1, 1]} : vector<16x384xf32> to vector<16x128xf32>
    %477 = arith.mulf %466, %476 : vector<16x128xf32>
    %478 = arith.addf %475, %477 : vector<16x128xf32>
    %479 = math.tanh %478 : vector<16x128xf32>
    %480 = vector.extract_strided_slice %474 {offsets = [0, 0], sizes = [16, 32], strides = [1, 1]} : vector<16x128xf32> to vector<16x32xf32>
    %cst_157 = arith.constant 1.000000e+00 : f32
    %481 = vector.broadcast %cst_157 : f32 to vector<16x32xf32>
    %482 = arith.subf %481, %480 : vector<16x32xf32>
    %483 = vector.extract_strided_slice %479 {offsets = [0, 0], sizes = [16, 32], strides = [1, 1]} : vector<16x128xf32> to vector<16x32xf32>
    %484 = arith.mulf %482, %483 : vector<16x32xf32>
    %485 = vector.extract_strided_slice %474 {offsets = [0, 0], sizes = [16, 32], strides = [1, 1]} : vector<16x128xf32> to vector<16x32xf32>
    %486 = arith.mulf %485, %439 : vector<16x32xf32>
    %487 = arith.addf %484, %486 : vector<16x32xf32>
    %488 = vector.extract_strided_slice %0 {offsets = [0, 1152], sizes = [16, 32], strides = [1, 1]} : vector<16x1280xf32> to vector<16x32xf32>
    %cst_158 = arith.constant 1.00250316 : f32
    %489 = vector.broadcast %cst_158 : f32 to vector<16x32xf32>
    %490 = arith.mulf %489, %488 : vector<16x32xf32>
    %491 = arith.addf %487, %490 : vector<16x32xf32>
    %492 = arith.truncf %491 : vector<16x32xf32> to vector<16x32xbf16>
    %c0_159 = arith.constant 0 : index
    %c0_160 = arith.constant 0 : index
    %493 = vector.load %arg20[%c0_159, %c0_160] : memref<32x16xbf16, #tpu.memory_space<vmem>>, vector<32x16xbf16>
    %cst_161 = arith.constant dense<0.000000e+00> : vector<16x16xf32>
    %494 = tpu.matmul %492, %493, %cst_161 {dimension_numbers = #tpu.dot_dimension_numbers<[1], [0], [0], [1], [0, 0, 1, 1], [], []>} : vector<16x32xbf16>, vector<32x16xbf16>, vector<16x16xf32> -> vector<16x16xf32>
    %c0_162 = arith.constant 0 : index
    %c0_163 = arith.constant 0 : index
    %495 = vector.load %arg21[%c0_162, %c0_163] : memref<1x16xf32, #tpu.memory_space<vmem>>, vector<1x16xf32>
    %496 = vector.broadcast %495 : vector<1x16xf32> to vector<16x16xf32>
    %497 = arith.addf %494, %496 : vector<16x16xf32>
    %cst_164 = arith.constant 0.000000e+00 : f32
    %498 = vector.broadcast %cst_164 : f32 to vector<16x16xf32>
    %499 = arith.subf %498, %497 : vector<16x16xf32>
    %cst_165 = arith.constant 0.000000e+00 : f32
    %500 = vector.broadcast %cst_165 : f32 to vector<16x16xf32>
    %501 = arith.maximumf %499, %500 : vector<16x16xf32>
    %502 = vector.broadcast %cst_165 : f32 to vector<16x16xf32>
    %503 = arith.subf %499, %502 : vector<16x16xf32>
    %504 = arith.cmpf one, %503, %503 : vector<16x16xf32>
    %505 = vector.broadcast %cst_165 : f32 to vector<16x16xf32>
    %506 = arith.addf %499, %505 : vector<16x16xf32>
    %507 = math.absf %503 : vector<16x16xf32>
    %cst_166 = arith.constant 0.000000e+00 : f32
    %508 = vector.broadcast %cst_166 : f32 to vector<16x16xf32>
    %509 = arith.subf %508, %507 : vector<16x16xf32>
    %510 = math.exp %509 : vector<16x16xf32>
    %511 = math.log1p %510 : vector<16x16xf32>
    %512 = arith.addf %501, %511 : vector<16x16xf32>
    %513 = arith.select %504, %506, %512 : vector<16x16xi1>, vector<16x16xf32>
    %cst_167 = arith.constant 0.000000e+00 : f32
    %514 = vector.broadcast %cst_167 : f32 to vector<16x16xf32>
    %515 = arith.subf %514, %513 : vector<16x16xf32>
    %516 = arith.mulf %1, %515 : vector<16x16xf32>
    %cst_168 = arith.constant dense<0.000000e+00> : vector<16xf32>
    %517 = vector.multi_reduction <add>, %516, %cst_168 [1] : vector<16x16xf32> to vector<16xf32>
    %518 = vector.shape_cast %517 : vector<16xf32> to vector<16x1xf32>
    %cst_169 = arith.constant 0.000000e+00 : f32
    %519 = vector.broadcast %cst_169 : f32 to vector<16x1xf32>
    %cst_170 = arith.constant 9.99999997E-7 : f32
    %520 = vector.broadcast %cst_170 : f32 to vector<16x1xf32>
    %521 = arith.addf %22, %520 : vector<16x1xf32>
    %522 = math.log %521 : vector<16x1xf32>
    %cst_171 = arith.constant -1.38629031 : f32
    %523 = vector.broadcast %cst_171 : f32 to vector<16x1xf32>
    %524 = arith.subf %522, %523 : vector<16x1xf32>
    %525 = arith.mulf %22, %524 : vector<16x1xf32>
    %526 = arith.addf %519, %525 : vector<16x1xf32>
    %cst_172 = arith.constant 9.99999997E-7 : f32
    %527 = vector.broadcast %cst_172 : f32 to vector<16x1xf32>
    %528 = arith.addf %84, %527 : vector<16x1xf32>
    %529 = math.log %528 : vector<16x1xf32>
    %cst_173 = arith.constant -1.38629031 : f32
    %530 = vector.broadcast %cst_173 : f32 to vector<16x1xf32>
    %531 = arith.subf %529, %530 : vector<16x1xf32>
    %532 = arith.mulf %84, %531 : vector<16x1xf32>
    %533 = arith.addf %526, %532 : vector<16x1xf32>
    %cst_174 = arith.constant 9.99999997E-7 : f32
    %534 = vector.broadcast %cst_174 : f32 to vector<16x1xf32>
    %535 = arith.addf %152, %534 : vector<16x1xf32>
    %536 = math.log %535 : vector<16x1xf32>
    %cst_175 = arith.constant -1.38629031 : f32
    %537 = vector.broadcast %cst_175 : f32 to vector<16x1xf32>
    %538 = arith.subf %536, %537 : vector<16x1xf32>
    %539 = arith.mulf %152, %538 : vector<16x1xf32>
    %540 = arith.addf %533, %539 : vector<16x1xf32>
    %cst_176 = arith.constant 9.99999997E-7 : f32
    %541 = vector.broadcast %cst_176 : f32 to vector<16x1xf32>
    %542 = arith.addf %220, %541 : vector<16x1xf32>
    %543 = math.log %542 : vector<16x1xf32>
    %cst_177 = arith.constant -1.38629031 : f32
    %544 = vector.broadcast %cst_177 : f32 to vector<16x1xf32>
    %545 = arith.subf %543, %544 : vector<16x1xf32>
    %546 = arith.mulf %220, %545 : vector<16x1xf32>
    %547 = arith.addf %540, %546 : vector<16x1xf32>
    %548 = arith.mulf %291, %291 : vector<16x8xf32>
    %cst_178 = arith.constant 2.000000e+00 : f32
    %549 = vector.broadcast %cst_178 : f32 to vector<16x8xf32>
    %550 = arith.divf %548, %549 : vector<16x8xf32>
    %cst_179 = arith.constant -0.918938517 : f32
    %551 = vector.broadcast %cst_179 : f32 to vector<16x8xf32>
    %552 = arith.subf %551, %550 : vector<16x8xf32>
    %cst_180 = arith.constant dense<0.000000e+00> : vector<16xf32>
    %553 = vector.multi_reduction <add>, %552, %cst_180 [1] : vector<16x8xf32> to vector<16xf32>
    %554 = vector.shape_cast %553 : vector<16xf32> to vector<16x1xf32>
    %cst_181 = arith.constant 2.000000e+00 : f32
    %555 = vector.broadcast %cst_181 : f32 to vector<16x8xf32>
    %556 = arith.divf %286, %555 : vector<16x8xf32>
    %cst_182 = arith.constant -0.918938517 : f32
    %557 = vector.broadcast %cst_182 : f32 to vector<16x8xf32>
    %558 = arith.subf %557, %556 : vector<16x8xf32>
    %559 = arith.subf %291, %271 : vector<16x8xf32>
    %560 = arith.mulf %559, %559 : vector<16x8xf32>
    %561 = math.exp %286 : vector<16x8xf32>
    %cst_183 = arith.constant 2.000000e+00 : f32
    %562 = vector.broadcast %cst_183 : f32 to vector<16x8xf32>
    %563 = arith.mulf %562, %561 : vector<16x8xf32>
    %564 = arith.divf %560, %563 : vector<16x8xf32>
    %565 = arith.subf %558, %564 : vector<16x8xf32>
    %cst_184 = arith.constant dense<0.000000e+00> : vector<16xf32>
    %566 = vector.multi_reduction <add>, %565, %cst_184 [1] : vector<16x8xf32> to vector<16xf32>
    %567 = vector.shape_cast %566 : vector<16xf32> to vector<16x1xf32>
    %568 = arith.subf %567, %554 : vector<16x1xf32>
    %569 = arith.subf %568, %518 : vector<16x1xf32>
    %570 = arith.addf %569, %547 : vector<16x1xf32>
    %cst_185 = arith.constant 0.000000e+00 : f32
    %571 = vector.broadcast %cst_185 : f32 to vector<16x123xf32>
    %572 = tpu.concatenate %22, %84, %152, %220, %570, %571 in 1 : vector<16x1xf32>, vector<16x1xf32>, vector<16x1xf32>, vector<16x1xf32>, vector<16x1xf32>, vector<16x123xf32> -> vector<16x128xf32>
    %c0_186 = arith.constant 0 : index
    %c0_187 = arith.constant 0 : index
    %573 = vector.load %arg22[%c0_186, %c0_187] : memref<16x128xf32, #tpu.memory_space<vmem>>, vector<16x128xf32>
    tpu.vector_store %arg22[%c0_186, %c0_187], %572 {strides = array<i32>} : memref<16x128xf32, #tpu.memory_space<vmem>>, vector<16x128xf32>,
    return
  }
  func.func @transform_0(%arg0: i32) -> (i32, i32) {
    %c0_i32 = arith.constant 0 : i32
    %c0_i32_0 = arith.constant 0 : i32
    return %arg0, %c0_i32 : i32, i32
  }
  func.func @transform_1(%arg0: i32) -> (i32, i32) {
    %c0_i32 = arith.constant 0 : i32
    %c0_i32_0 = arith.constant 0 : i32
    %c0_i32_1 = arith.constant 0 : i32
    return %c0_i32, %c0_i32_0 : i32, i32
  }
  func.func @transform_2(%arg0: i32) -> (i32, i32) {
    %c0_i32 = arith.constant 0 : i32
    %c0_i32_0 = arith.constant 0 : i32
    %c0_i32_1 = arith.constant 0 : i32
    return %c0_i32, %c0_i32_0 : i32, i32
  }
  func.func @transform_3(%arg0: i32) -> (i32, i32) {
    %c0_i32 = arith.constant 0 : i32
    %c0_i32_0 = arith.constant 0 : i32
    %c0_i32_1 = arith.constant 0 : i32
    return %c0_i32, %c0_i32_0 : i32, i32
  }
  func.func @transform_4(%arg0: i32) -> (i32, i32) {
    %c0_i32 = arith.constant 0 : i32
    %c0_i32_0 = arith.constant 0 : i32
    %c0_i32_1 = arith.constant 0 : i32
    return %c0_i32, %c0_i32_0 : i32, i32
  }
  func.func @transform_5(%arg0: i32) -> (i32, i32, i32) {
    %c0_i32 = arith.constant 0 : i32
    %c0_i32_0 = arith.constant 0 : i32
    %c0_i32_1 = arith.constant 0 : i32
    %c0_i32_2 = arith.constant 0 : i32
    return %c0_i32, %c0_i32_0, %c0_i32_1 : i32, i32, i32
  }
  func.func @transform_6(%arg0: i32) -> (i32, i32, i32) {
    %c0_i32 = arith.constant 0 : i32
    %c0_i32_0 = arith.constant 0 : i32
    %c0_i32_1 = arith.constant 0 : i32
    %c0_i32_2 = arith.constant 0 : i32
    return %c0_i32, %c0_i32_0, %c0_i32_1 : i32, i32, i32
  }
  func.func @transform_7(%arg0: i32) -> (i32, i32, i32) {
    %c0_i32 = arith.constant 0 : i32
    %c0_i32_0 = arith.constant 0 : i32
    %c0_i32_1 = arith.constant 0 : i32
    %c0_i32_2 = arith.constant 0 : i32
    return %c0_i32, %c0_i32_0, %c0_i32_1 : i32, i32, i32
  }
  func.func @transform_8(%arg0: i32) -> (i32, i32) {
    %c0_i32 = arith.constant 0 : i32
    %c0_i32_0 = arith.constant 0 : i32
    %c0_i32_1 = arith.constant 0 : i32
    return %c0_i32, %c0_i32_0 : i32, i32
  }
  func.func @transform_9(%arg0: i32) -> (i32, i32, i32) {
    %c0_i32 = arith.constant 0 : i32
    %c0_i32_0 = arith.constant 0 : i32
    %c0_i32_1 = arith.constant 0 : i32
    %c0_i32_2 = arith.constant 0 : i32
    return %c0_i32, %c0_i32_0, %c0_i32_1 : i32, i32, i32
  }
  func.func @transform_10(%arg0: i32) -> (i32, i32, i32) {
    %c0_i32 = arith.constant 0 : i32
    %c0_i32_0 = arith.constant 0 : i32
    %c0_i32_1 = arith.constant 0 : i32
    %c0_i32_2 = arith.constant 0 : i32
    return %c0_i32, %c0_i32_0, %c0_i32_1 : i32, i32, i32
  }
  func.func @transform_11(%arg0: i32) -> (i32, i32) {
    %c0_i32 = arith.constant 0 : i32
    %c0_i32_0 = arith.constant 0 : i32
    %c0_i32_1 = arith.constant 0 : i32
    return %c0_i32, %c0_i32_0 : i32, i32
  }
  func.func @transform_12(%arg0: i32) -> (i32, i32) {
    %c0_i32 = arith.constant 0 : i32
    %c0_i32_0 = arith.constant 0 : i32
    %c0_i32_1 = arith.constant 0 : i32
    return %c0_i32, %c0_i32_0 : i32, i32
  }
  func.func @transform_13(%arg0: i32) -> (i32, i32) {
    %c0_i32 = arith.constant 0 : i32
    %c0_i32_0 = arith.constant 0 : i32
    %c0_i32_1 = arith.constant 0 : i32
    return %c0_i32, %c0_i32_0 : i32, i32
  }
  func.func @transform_14(%arg0: i32) -> (i32, i32) {
    %c0_i32 = arith.constant 0 : i32
    %c0_i32_0 = arith.constant 0 : i32
    %c0_i32_1 = arith.constant 0 : i32
    return %c0_i32, %c0_i32_0 : i32, i32
  }
  func.func @transform_15(%arg0: i32) -> (i32, i32, i32) {
    %c0_i32 = arith.constant 0 : i32
    %c0_i32_0 = arith.constant 0 : i32
    %c0_i32_1 = arith.constant 0 : i32
    %c0_i32_2 = arith.constant 0 : i32
    return %c0_i32, %c0_i32_0, %c0_i32_1 : i32, i32, i32
  }
  func.func @transform_16(%arg0: i32) -> (i32, i32, i32) {
    %c0_i32 = arith.constant 0 : i32
    %c0_i32_0 = arith.constant 0 : i32
    %c0_i32_1 = arith.constant 0 : i32
    %c0_i32_2 = arith.constant 0 : i32
    return %c0_i32, %c0_i32_0, %c0_i32_1 : i32, i32, i32
  }
  func.func @transform_17(%arg0: i32) -> (i32, i32, i32) {
    %c0_i32 = arith.constant 0 : i32
    %c0_i32_0 = arith.constant 0 : i32
    %c0_i32_1 = arith.constant 0 : i32
    %c0_i32_2 = arith.constant 0 : i32
    return %c0_i32, %c0_i32_0, %c0_i32_1 : i32, i32, i32
  }
  func.func @transform_18(%arg0: i32) -> (i32, i32) {
    %c0_i32 = arith.constant 0 : i32
    %c0_i32_0 = arith.constant 0 : i32
    %c0_i32_1 = arith.constant 0 : i32
    return %c0_i32, %c0_i32_0 : i32, i32
  }
  func.func @transform_19(%arg0: i32) -> (i32, i32) {
    %c0_i32 = arith.constant 0 : i32
    %c0_i32_0 = arith.constant 0 : i32
    %c0_i32_1 = arith.constant 0 : i32
    return %c0_i32, %c0_i32_0 : i32, i32
  }
  func.func @transform_20(%arg0: i32) -> (i32, i32) {
    %c0_i32 = arith.constant 0 : i32
    %c0_i32_0 = arith.constant 0 : i32
    %c0_i32_1 = arith.constant 0 : i32
    return %c0_i32, %c0_i32_0 : i32, i32
  }
  func.func @transform_21(%arg0: i32) -> (i32, i32) {
    %c0_i32 = arith.constant 0 : i32
    %c0_i32_0 = arith.constant 0 : i32
    return %arg0, %c0_i32 : i32, i32
  }
}

</mosaic_0001>

<llo_original>
// kernel: tpu_custom_call.1
$region0: #{tpu_custom_call.1}
  #allocation0 [shape = 'u32[]', space=smem, size = 0x4, offset = 0x4, fixed_abs, tag = 'smem constant byte address 0x4 - core index']
  #allocation1 [shape = 'u32[144,128]{1,0:T(1,128)}', space=vmem, size = 0x12000, scoped, tag = 'internal scratch']
  #allocation2 [shape = 'f32[1,1]{1,0:T(1,128)S(1)}', space=vmem, size = 0x200, scoped, tag = 'scoped memory for tpu_custom_call.1']
  %s0 = inlined_call_operand.hbm [shape: f32[16,1280], index: 0, kind: input, shape index: {}]
  %s1 = inlined_call_operand.hbm [shape: bf16[16,1664], index: 1, kind: input, shape index: {}]
  %s2 = inlined_call_operand.hbm [shape: f32[1,1664], index: 2, kind: input, shape index: {}]
  %s3 = inlined_call_operand.vmem [shape: bf16[32,1], index: 3, kind: input, shape index: {}]
  %s4 = inlined_call_operand.<no memory space> [shape: f32[1,1], index: 4, kind: input, shape index: {}]
  %s5 = inlined_call_operand.hbm [shape: f32[4,1,384], index: 5, kind: input, shape index: {}]
  %s6 = inlined_call_operand.hbm [shape: bf16[3,32,512], index: 6, kind: input, shape index: {}]
  %s7 = inlined_call_operand.hbm [shape: f32[3,1,512], index: 7, kind: input, shape index: {}]
  %s8 = inlined_call_operand.hbm [shape: f32[1,128], index: 8, kind: input, shape index: {}]
  %s9 = inlined_call_operand.vmem [shape: bf16[3,32,1], index: 9, kind: input, shape index: {}]
  %s10 = inlined_call_operand.vmem [shape: f32[3,1,1], index: 10, kind: input, shape index: {}]
  %s11 = inlined_call_operand.hbm [shape: bf16[32,256], index: 11, kind: input, shape index: {}]
  %s12 = inlined_call_operand.vmem [shape: f32[1,256], index: 12, kind: input, shape index: {}]
  %s13 = inlined_call_operand.hbm [shape: bf16[8,1536], index: 13, kind: input, shape index: {}]
  %s14 = inlined_call_operand.hbm [shape: f32[1,1536], index: 14, kind: input, shape index: {}]
  %s15 = inlined_call_operand.hbm [shape: f32[4,1,384], index: 15, kind: input, shape index: {}]
  %s16 = inlined_call_operand.vmem [shape: bf16[3,32,384], index: 16, kind: input, shape index: {}]
  %s17 = inlined_call_operand.vmem [shape: f32[3,1,384], index: 17, kind: input, shape index: {}]
  %s18 = inlined_call_operand.hbm [shape: f32[1,128], index: 18, kind: input, shape index: {}]
  %s19 = inlined_call_operand.vmem [shape: bf16[32,16], index: 19, kind: input, shape index: {}]
  %s20 = inlined_call_operand.vmem [shape: f32[1,16], index: 20, kind: input, shape index: {}]
  %s21 = inlined_call_operand.hbm [shape: f32[16,128], index: 21, kind: output, shape index: {}]
  %s22 = sld [smem:[#allocation0]]
  $region142: #{tpu_custom_call.1} parent=0
    _
  %s24 = ssub.s32 1, %s22
  %s25 = scalar_select 0, %s24, %s22
  %v26 = vstv %s4
  %27 = vst [vmem:[#allocation2] sm:$0x1] %v26
  $region1: #{tpu_custom_call.1} parent=0
    #allocation3 [shape = 'u8[81920]{0}', space=vmem, size = 0x14000, scoped, tag = 'input window, operand 0, single buffered']
    #allocation4 [shape = 's32[1]{0}', space=sflag, size = 0x4, scoped, tag = 'scoped memory for tpu_custom_call.1']
    #allocation5 [shape = 's32[1]{0}', space=sflag, size = 0x4, scoped, tag = 'scoped memory for tpu_custom_call.1']
    #allocation6 [shape = 'u8[53248]{0}', space=vmem, size = 0xd000, scoped, tag = 'input window, operand 1, single buffered']
    #allocation7 [shape = 's32[1]{0}', space=sflag, size = 0x4, scoped, tag = 'scoped memory for tpu_custom_call.1']
    #allocation8 [shape = 'u8[6656]{0}', space=vmem, size = 0x1c00, scoped, tag = 'input window, operand 2, single buffered']
    #allocation9 [shape = 'u8[6144]{0}', space=vmem, size = 0x1800, scoped, tag = 'input window, operand 5, single buffered']
    #allocation10 [shape = 's32[1]{0}', space=sflag, size = 0x4, scoped, tag = 'scoped memory for tpu_custom_call.1']
    #allocation11 [shape = 'u8[98304]{0}', space=vmem, size = 0x18000, scoped, tag = 'input window, operand 6, single buffered']
    #allocation12 [shape = 'u8[6144]{0}', space=vmem, size = 0x1800, scoped, tag = 'input window, operand 7, single buffered']
    #allocation13 [shape = 's32[1]{0}', space=sflag, size = 0x4, scoped, tag = 'scoped memory for tpu_custom_call.1']
    #allocation14 [shape = 'u8[512]{0}', space=vmem, size = 0x400, scoped, tag = 'input window, operand 8, single buffered']
    #allocation15 [shape = 'u8[16384]{0}', space=vmem, size = 0x4000, scoped, tag = 'input window, operand 11, single buffered']
    #allocation16 [shape = 's32[1]{0}', space=sflag, size = 0x4, scoped, tag = 'scoped memory for tpu_custom_call.1']
    #allocation17 [shape = 'u8[24576]{0}', space=vmem, size = 0x6000, scoped, tag = 'input window, operand 13, single buffered']
    #allocation18 [shape = 'u8[6144]{0}', space=vmem, size = 0x1800, scoped, tag = 'input window, operand 14, single buffered']
    #allocation19 [shape = 's32[1]{0}', space=sflag, size = 0x4, scoped, tag = 'scoped memory for tpu_custom_call.1']
    #allocation20 [shape = 'u8[6144]{0}', space=vmem, size = 0x1800, scoped, tag = 'input window, operand 15, single buffered']
    #allocation21 [shape = 'u8[512]{0}', space=vmem, size = 0x400, scoped, tag = 'input window, operand 18, single buffered']
    #allocation22 [shape = 's32[1]{0}', space=sflag, size = 0x4, scoped, tag = 'scoped memory for tpu_custom_call.1']
    #allocation23 [shape = 'u8[8192]{0}', space=vmem, size = 0x2000, scoped, tag = 'output window, operand 0, single buffered']
    %28 = vsyncpa [#allocation4], 0
    %29 = vsyncpa [#allocation7], 0
    %30 = vsyncpa [#allocation10], 0
    %31 = vsyncpa [#allocation13], 0
    %32 = vsyncpa [#allocation16], 0
    %33 = vsyncpa [#allocation19], 0
    %34 = vsyncpa [#allocation22], 0
    %35 = vsyncpa [#allocation5], 0
    // Predicated region
    $region2: #{tpu_custom_call.1} parent=1 // pred_check
      _
    $region3: #{tpu_custom_call.1} parent=1 // pred_check_branch
      %37 = sbr.rel (0) target = $region5
    $region4: #{tpu_custom_call.1} parent=1 // pred_region
      %s39 = ssub.s32 2560, 2560
      %40 = vsyncadd [#allocation4], %s39
      %s41 = sshll.u32 [#allocation3], 4
      %s42 = int_to_ptr.vmem [resolvable:$true] %s41
      %47 = dma.hbm_to_vmem [thread:$0]  %s0, 2560, %s42, [#allocation4], 1280, 1280, 80
    $region5: #{tpu_custom_call.1} parent=1 // pred_fallthru
      _
    // Predicated region
    $region6: #{tpu_custom_call.1} parent=1 // pred_check
      _
    $region7: #{tpu_custom_call.1} parent=1 // pred_check_branch
      %49 = sbr.rel (0) target = $region9
    $region8: #{tpu_custom_call.1} parent=1 // pred_region
      %s51 = ssub.s32 1664, 1664
      %52 = vsyncadd [#allocation7], %s51
      %s53 = sshll.u32 [#allocation6], 4
      %s54 = int_to_ptr.vmem [resolvable:$true] %s53
      %59 = dma.hbm_to_vmem [thread:$0]  %s1, 1664, %s54, [#allocation7], 832, 832, 52
    $region9: #{tpu_custom_call.1} parent=1 // pred_fallthru
      _
    // Predicated region
    $region10: #{tpu_custom_call.1} parent=1 // pred_check
      _
    $region11: #{tpu_custom_call.1} parent=1 // pred_check_branch
      %61 = sbr.rel (0) target = $region13
    $region12: #{tpu_custom_call.1} parent=1 // pred_region
      %s63 = ssub.s32 208, 208
      %64 = vsyncadd [#allocation7], %s63
      %s66 = sshll.u32 [#allocation8], 4
      %s67 = int_to_ptr.vmem [resolvable:$true] %s66
      %69 = dma.hbm_to_vmem [thread:$0]  %s2, 208, %s67, [#allocation7]
    $region13: #{tpu_custom_call.1} parent=1 // pred_fallthru
      _
    // Predicated region
    $region14: #{tpu_custom_call.1} parent=1 // pred_check
      _
    $region15: #{tpu_custom_call.1} parent=1 // pred_check_branch
      %71 = sbr.rel (0) target = $region17
    $region16: #{tpu_custom_call.1} parent=1 // pred_region
      _
    $region17: #{tpu_custom_call.1} parent=1 // pred_fallthru
      _
    // Predicated region
    $region18: #{tpu_custom_call.1} parent=1 // pred_check
      _
    $region19: #{tpu_custom_call.1} parent=1 // pred_check_branch
      %73 = sbr.rel (0) target = $region21
    $region20: #{tpu_custom_call.1} parent=1 // pred_region
      _
    $region21: #{tpu_custom_call.1} parent=1 // pred_fallthru
      _
    // Predicated region
    $region22: #{tpu_custom_call.1} parent=1 // pred_check
      _
    $region23: #{tpu_custom_call.1} parent=1 // pred_check_branch
      %75 = sbr.rel (0) target = $region25
    $region24: #{tpu_custom_call.1} parent=1 // pred_region
      %s77 = ssub.s32 192, 192
      %78 = vsyncadd [#allocation10], %s77
      %s79 = sshll.u32 [#allocation9], 4
      %s80 = int_to_ptr.vmem [resolvable:$true] %s79
      %85 = dma.hbm_to_vmem [thread:$0]  %s5, 192, %s80, [#allocation10], 48, 48, 3
    $region25: #{tpu_custom_call.1} parent=1 // pred_fallthru
      _
    // Predicated region
    $region26: #{tpu_custom_call.1} parent=1 // pred_check
      _
    $region27: #{tpu_custom_call.1} parent=1 // pred_check_branch
      %87 = sbr.rel (0) target = $region29
    $region28: #{tpu_custom_call.1} parent=1 // pred_region
      %s89 = ssub.s32 3072, 3072
      %90 = vsyncadd [#allocation10], %s89
      %s91 = sshll.u32 [#allocation11], 4
      %s92 = int_to_ptr.vmem [resolvable:$true] %s91
      %97 = dma.hbm_to_vmem [thread:$0]  %s6, 3072, %s92, [#allocation10], 256, 256, 16
    $region29: #{tpu_custom_call.1} parent=1 // pred_fallthru
      _
    // Predicated region
    $region30: #{tpu_custom_call.1} parent=1 // pred_check
      _
    $region31: #{tpu_custom_call.1} parent=1 // pred_check_branch
      %99 = sbr.rel (0) target = $region33
    $region32: #{tpu_custom_call.1} parent=1 // pred_region
      %s101 = ssub.s32 192, 192
      %102 = vsyncadd [#allocation13], %s101
      %s103 = sshll.u32 [#allocation12], 4
      %s104 = int_to_ptr.vmem [resolvable:$true] %s103
      %109 = dma.hbm_to_vmem [thread:$0]  %s7, 192, %s104, [#allocation13], 64, 64, 4
    $region33: #{tpu_custom_call.1} parent=1 // pred_fallthru
      _
    // Predicated region
    $region34: #{tpu_custom_call.1} parent=1 // pred_check
      _
    $region35: #{tpu_custom_call.1} parent=1 // pred_check_branch
      %111 = sbr.rel (0) target = $region37
    $region36: #{tpu_custom_call.1} parent=1 // pred_region
      %s113 = ssub.s32 16, 16
      %114 = vsyncadd [#allocation13], %s113
      %s116 = sshll.u32 [#allocation14], 4
      %s117 = int_to_ptr.vmem [resolvable:$true] %s116
      %119 = dma.hbm_to_vmem [thread:$0]  %s8, 16, %s117, [#allocation13]
    $region37: #{tpu_custom_call.1} parent=1 // pred_fallthru
      _
    // Predicated region
    $region38: #{tpu_custom_call.1} parent=1 // pred_check
      _
    $region39: #{tpu_custom_call.1} parent=1 // pred_check_branch
      %121 = sbr.rel (0) target = $region41
    $region40: #{tpu_custom_call.1} parent=1 // pred_region
      _
    $region41: #{tpu_custom_call.1} parent=1 // pred_fallthru
      _
    // Predicated region
    $region42: #{tpu_custom_call.1} parent=1 // pred_check
      _
    $region43: #{tpu_custom_call.1} parent=1 // pred_check_branch
      %123 = sbr.rel (0) target = $region45
    $region44: #{tpu_custom_call.1} parent=1 // pred_region
      _
    $region45: #{tpu_custom_call.1} parent=1 // pred_fallthru
      _
    // Predicated region
    $region46: #{tpu_custom_call.1} parent=1 // pred_check
      _
    $region47: #{tpu_custom_call.1} parent=1 // pred_check_branch
      %125 = sbr.rel (0) target = $region49
    $region48: #{tpu_custom_call.1} parent=1 // pred_region
      %s127 = ssub.s32 512, 512
      %128 = vsyncadd [#allocation16], %s127
      %s129 = sshll.u32 [#allocation15], 4
      %s130 = int_to_ptr.vmem [resolvable:$true] %s129
      %135 = dma.hbm_to_vmem [thread:$0]  %s11, 512, %s130, [#allocation16], 128, 128, 8
    $region49: #{tpu_custom_call.1} parent=1 // pred_fallthru
      _
    // Predicated region
    $region50: #{tpu_custom_call.1} parent=1 // pred_check
      _
    $region51: #{tpu_custom_call.1} parent=1 // pred_check_branch
      %137 = sbr.rel (0) target = $region53
    $region52: #{tpu_custom_call.1} parent=1 // pred_region
      _
    $region53: #{tpu_custom_call.1} parent=1 // pred_fallthru
      _
    // Predicated region
    $region54: #{tpu_custom_call.1} parent=1 // pred_check
      _
    $region55: #{tpu_custom_call.1} parent=1 // pred_check_branch
      %139 = sbr.rel (0) target = $region57
    $region56: #{tpu_custom_call.1} parent=1 // pred_region
      %s141 = ssub.s32 768, 768
      %142 = vsyncadd [#allocation16], %s141
      %s144 = sshll.u32 [#allocation17], 4
      %s145 = int_to_ptr.vmem [resolvable:$true] %s144
      %147 = dma.hbm_to_vmem [thread:$0]  %s13, 768, %s145, [#allocation16]
    $region57: #{tpu_custom_call.1} parent=1 // pred_fallthru
      _
    // Predicated region
    $region58: #{tpu_custom_call.1} parent=1 // pred_check
      _
    $region59: #{tpu_custom_call.1} parent=1 // pred_check_branch
      %149 = sbr.rel (0) target = $region61
    $region60: #{tpu_custom_call.1} parent=1 // pred_region
      %s151 = ssub.s32 192, 192
      %152 = vsyncadd [#allocation19], %s151
      %s154 = sshll.u32 [#allocation18], 4
      %s155 = int_to_ptr.vmem [resolvable:$true] %s154
      %157 = dma.hbm_to_vmem [thread:$0]  %s14, 192, %s155, [#allocation19]
    $region61: #{tpu_custom_call.1} parent=1 // pred_fallthru
      _
    // Predicated region
    $region62: #{tpu_custom_call.1} parent=1 // pred_check
      _
    $region63: #{tpu_custom_call.1} parent=1 // pred_check_branch
      %159 = sbr.rel (0) target = $region65
    $region64: #{tpu_custom_call.1} parent=1 // pred_region
      %s161 = ssub.s32 192, 192
      %162 = vsyncadd [#allocation19], %s161
      %s163 = sshll.u32 [#allocation20], 4
      %s164 = int_to_ptr.vmem [resolvable:$true] %s163
      %169 = dma.hbm_to_vmem [thread:$0]  %s15, 192, %s164, [#allocation19], 48, 48, 3
    $region65: #{tpu_custom_call.1} parent=1 // pred_fallthru
      _
    // Predicated region
    $region66: #{tpu_custom_call.1} parent=1 // pred_check
      _
    $region67: #{tpu_custom_call.1} parent=1 // pred_check_branch
      %171 = sbr.rel (0) target = $region69
    $region68: #{tpu_custom_call.1} parent=1 // pred_region
      _
    $region69: #{tpu_custom_call.1} parent=1 // pred_fallthru
      _
    // Predicated region
    $region70: #{tpu_custom_call.1} parent=1 // pred_check
      _
    $region71: #{tpu_custom_call.1} parent=1 // pred_check_branch
      %173 = sbr.rel (0) target = $region73
    $region72: #{tpu_custom_call.1} parent=1 // pred_region
      _
    $region73: #{tpu_custom_call.1} parent=1 // pred_fallthru
      _
    // Predicated region
    $region74: #{tpu_custom_call.1} parent=1 // pred_check
      _
    $region75: #{tpu_custom_call.1} parent=1 // pred_check_branch
      %175 = sbr.rel (0) target = $region77
    $region76: #{tpu_custom_call.1} parent=1 // pred_region
      %s177 = ssub.s32 16, 16
      %178 = vsyncadd [#allocation22], %s177
      %s180 = sshll.u32 [#allocation21], 4
      %s181 = int_to_ptr.vmem [resolvable:$true] %s180
      %183 = dma.hbm_to_vmem [thread:$0]  %s18, 16, %s181, [#allocation22]
    $region77: #{tpu_custom_call.1} parent=1 // pred_fallthru
      _
    // Predicated region
    $region78: #{tpu_custom_call.1} parent=1 // pred_check
      _
    $region79: #{tpu_custom_call.1} parent=1 // pred_check_branch
      %185 = sbr.rel (0) target = $region81
    $region80: #{tpu_custom_call.1} parent=1 // pred_region
      _
    $region81: #{tpu_custom_call.1} parent=1 // pred_fallthru
      _
    // Predicated region
    $region82: #{tpu_custom_call.1} parent=1 // pred_check
      _
    $region83: #{tpu_custom_call.1} parent=1 // pred_check_branch
      %187 = sbr.rel (0) target = $region85
    $region84: #{tpu_custom_call.1} parent=1 // pred_region
      _
    $region85: #{tpu_custom_call.1} parent=1 // pred_fallthru
      _
    // Predicated region
    $region86: #{tpu_custom_call.1} parent=1 // pred_check
      _
    $region87: #{tpu_custom_call.1} parent=1 // pred_check_branch
      %189 = sbr.rel (0) target = $region89
    $region88: #{tpu_custom_call.1} parent=1 // pred_region
      %190 = dma.done [#allocation4], 2560
    $region89: #{tpu_custom_call.1} parent=1 // pred_fallthru
      _
    // Predicated region
    $region90: #{tpu_custom_call.1} parent=1 // pred_check
      _
    $region91: #{tpu_custom_call.1} parent=1 // pred_check_branch
      %192 = sbr.rel (0) target = $region93
    $region92: #{tpu_custom_call.1} parent=1 // pred_region
      %193 = dma.done [#allocation7], 1664
    $region93: #{tpu_custom_call.1} parent=1 // pred_fallthru
      _
    // Predicated region
    $region94: #{tpu_custom_call.1} parent=1 // pred_check
      _
    $region95: #{tpu_custom_call.1} parent=1 // pred_check_branch
      %195 = sbr.rel (0) target = $region97
    $region96: #{tpu_custom_call.1} parent=1 // pred_region
      %196 = dma.done [#allocation7], 208
    $region97: #{tpu_custom_call.1} parent=1 // pred_fallthru
      _
    // Predicated region
    $region98: #{tpu_custom_call.1} parent=1 // pred_check
      _
    $region99: #{tpu_custom_call.1} parent=1 // pred_check_branch
      %198 = sbr.rel (0) target = $region101
    $region100: #{tpu_custom_call.1} parent=1 // pred_region
      %199 = dma.done [#allocation10], 192
    $region101: #{tpu_custom_call.1} parent=1 // pred_fallthru
      _
    // Predicated region
    $region102: #{tpu_custom_call.1} parent=1 // pred_check
      _
    $region103: #{tpu_custom_call.1} parent=1 // pred_check_branch
      %201 = sbr.rel (0) target = $region105
    $region104: #{tpu_custom_call.1} parent=1 // pred_region
      %202 = dma.done [#allocation10], 3072
    $region105: #{tpu_custom_call.1} parent=1 // pred_fallthru
      _
    // Predicated region
    $region106: #{tpu_custom_call.1} parent=1 // pred_check
      _
    $region107: #{tpu_custom_call.1} parent=1 // pred_check_branch
      %204 = sbr.rel (0) target = $region109
    $region108: #{tpu_custom_call.1} parent=1 // pred_region
      %205 = dma.done [#allocation13], 192
    $region109: #{tpu_custom_call.1} parent=1 // pred_fallthru
      _
    // Predicated region
    $region110: #{tpu_custom_call.1} parent=1 // pred_check
      _
    $region111: #{tpu_custom_call.1} parent=1 // pred_check_branch
      %207 = sbr.rel (0) target = $region113
    $region112: #{tpu_custom_call.1} parent=1 // pred_region
      %208 = dma.done [#allocation13], 16
    $region113: #{tpu_custom_call.1} parent=1 // pred_fallthru
      _
    // Predicated region
    $region114: #{tpu_custom_call.1} parent=1 // pred_check
      _
    $region115: #{tpu_custom_call.1} parent=1 // pred_check_branch
      %210 = sbr.rel (0) target = $region117
    $region116: #{tpu_custom_call.1} parent=1 // pred_region
      %211 = dma.done [#allocation16], 512
    $region117: #{tpu_custom_call.1} parent=1 // pred_fallthru
      _
    // Predicated region
    $region118: #{tpu_custom_call.1} parent=1 // pred_check
      _
    $region119: #{tpu_custom_call.1} parent=1 // pred_check_branch
      %213 = sbr.rel (0) target = $region121
    $region120: #{tpu_custom_call.1} parent=1 // pred_region
      %214 = dma.done [#allocation16], 768
    $region121: #{tpu_custom_call.1} parent=1 // pred_fallthru
      _
    // Predicated region
    $region122: #{tpu_custom_call.1} parent=1 // pred_check
      _
    $region123: #{tpu_custom_call.1} parent=1 // pred_check_branch
      %216 = sbr.rel (0) target = $region125
    $region124: #{tpu_custom_call.1} parent=1 // pred_region
      %217 = dma.done [#allocation19], 192
    $region125: #{tpu_custom_call.1} parent=1 // pred_fallthru
      _
    // Predicated region
    $region126: #{tpu_custom_call.1} parent=1 // pred_check
      _
    $region127: #{tpu_custom_call.1} parent=1 // pred_check_branch
      %219 = sbr.rel (0) target = $region129
    $region128: #{tpu_custom_call.1} parent=1 // pred_region
      %220 = dma.done [#allocation19], 192
    $region129: #{tpu_custom_call.1} parent=1 // pred_fallthru
      _
    // Predicated region
    $region130: #{tpu_custom_call.1} parent=1 // pred_check
      _
    $region131: #{tpu_custom_call.1} parent=1 // pred_check_branch
      %222 = sbr.rel (0) target = $region133
    $region132: #{tpu_custom_call.1} parent=1 // pred_region
      %223 = dma.done [#allocation22], 16
    $region133: #{tpu_custom_call.1} parent=1 // pred_fallthru
      _
    %v225 = vld [vmem:[#allocation3] sm:$0xff]
    %v226 = vld [vmem:[#allocation3 + $0x8] sm:$0xff]
    %v227 = vld [vmem:[#allocation3 + $0x10] sm:$0xff]
    %v228 = vld [vmem:[#allocation3 + $0x18] sm:$0xff]
    %v229 = vld [vmem:[#allocation3 + $0x20] sm:$0xff]
    %v230 = vld [vmem:[#allocation3 + $0x28] sm:$0xff]
    %v231 = vld [vmem:[#allocation3 + $0x30] sm:$0xff]
    %v232 = vld [vmem:[#allocation3 + $0x38] sm:$0xff]
    %v233 = vld [vmem:[#allocation3 + $0x40] sm:$0xff]
    %v234 = vld [vmem:[#allocation3 + $0x48] sm:$0xff]
    %v235 = vld [vmem:[#allocation3 + $0x50] sm:$0xff]
    %v236 = vld [vmem:[#allocation3 + $0x58] sm:$0xff]
    %v237 = vld [vmem:[#allocation3 + $0x60] sm:$0xff]
    %v238 = vld [vmem:[#allocation3 + $0x68] sm:$0xff]
    %v239 = vld [vmem:[#allocation3 + $0x70] sm:$0xff]
    %v240 = vld [vmem:[#allocation3 + $0x78] sm:$0xff]
    %v241 = vld [vmem:[#allocation3 + $0x80] sm:$0xff]
    %v242 = vld [vmem:[#allocation3 + $0x88] sm:$0xff]
    %v243 = vld [vmem:[#allocation3 + $0x90] sm:$0xff]
    %v244 = vld [vmem:[#allocation3 + $0x98] sm:$0xff]
    %v245 = vpack.c.bf16 %v235, %v225
    %v246 = vld [vmem:[#allocation6] sm:$0xff]
    %v247 = vld [vmem:[#allocation6 + $0x8] sm:$0xff]
    %v248 = vld [vmem:[#allocation6 + $0x10] sm:$0xff]
    %v249 = vld [vmem:[#allocation6 + $0x18] sm:$0xff]
    %v250 = vld [vmem:[#allocation6 + $0x20] sm:$0xff]
    %v251 = vld [vmem:[#allocation6 + $0x28] sm:$0xff]
    %v252 = vld [vmem:[#allocation6 + $0x30] sm:$0xf]
    %v253 = vld [vmem:[#allocation6 + $0x34] sm:$0xff]
    %v254 = vld [vmem:[#allocation6 + $0x3c] sm:$0xff]
    %v255 = vld [vmem:[#allocation6 + $0x44] sm:$0xff]
    %v256 = vld [vmem:[#allocation6 + $0x4c] sm:$0xff]
    %v257 = vld [vmem:[#allocation6 + $0x54] sm:$0xff]
    %v258 = vld [vmem:[#allocation6 + $0x5c] sm:$0xff]
    %v259 = vld [vmem:[#allocation6 + $0x64] sm:$0xf]
    %v260 = vld [vmem:[#allocation8] sm:$0xff]
    %v261 = vld [vmem:[#allocation8 + $0x8] sm:$0x1f]
    %v264 = vlaneseq
    %v265 = vshrl.u32 %v264, 7
    %v266 = vsub.s32 0, %v265
    %v267 = vrot.slane %v260, %v266
    %v268 = vlaneseq
    %v269 = vshrl.u32 %v268, 7
    %v270 = vsub.s32 1, %v269
    %v271 = vrot.slane %v260, %v270
    %v272 = vlaneseq
    %v273 = vshrl.u32 %v272, 7
    %v274 = vsub.s32 2, %v273
    %v275 = vrot.slane %v260, %v274
    %v276 = vlaneseq
    %v277 = vshrl.u32 %v276, 7
    %v278 = vsub.s32 3, %v277
    %v279 = vrot.slane %v260, %v278
    %v280 = vlaneseq
    %v281 = vshrl.u32 %v280, 7
    %v282 = vsub.s32 4, %v281
    %v283 = vrot.slane %v260, %v282
    %v284 = vlaneseq
    %v285 = vshrl.u32 %v284, 7
    %v286 = vsub.s32 5, %v285
    %v287 = vrot.slane %v260, %v286
    %v288 = vlaneseq
    %v289 = vshrl.u32 %v288, 7
    %v290 = vsub.s32 6, %v289
    %v291 = vrot.slane %v260, %v290
    %v292 = vlaneseq
    %v293 = vshrl.u32 %v292, 7
    %v294 = vsub.s32 7, %v293
    %v295 = vrot.slane %v260, %v294
    %v296 = vlaneseq
    %v297 = vshrl.u32 %v296, 7
    %v298 = vsub.s32 0, %v297
    %v299 = vrot.slane %v261, %v298
    %v300 = vlaneseq
    %v301 = vshrl.u32 %v300, 7
    %v302 = vsub.s32 1, %v301
    %v303 = vrot.slane %v261, %v302
    %v304 = vlaneseq
    %v305 = vshrl.u32 %v304, 7
    %v306 = vsub.s32 2, %v305
    %v307 = vrot.slane %v261, %v306
    %v308 = vlaneseq
    %v309 = vshrl.u32 %v308, 7
    %v310 = vsub.s32 3, %v309
    %v311 = vrot.slane %v261, %v310
    %v312 = vlaneseq
    %v313 = vshrl.u32 %v312, 7
    %v314 = vsub.s32 4, %v313
    %v315 = vrot.slane %v261, %v314
    %v343 = vunpack.c.l.b16 %v246
    %v344 = vunpack.c.h.b16 %v246
    %v345 = vunpack.c.l.b16 %v247
    %v346 = vunpack.c.h.b16 %v247
    %v347 = vunpack.c.l.b16 %v248
    %v348 = vunpack.c.h.b16 %v248
    %v349 = vunpack.c.l.b16 %v249
    %v350 = vunpack.c.h.b16 %v249
    %v351 = vunpack.c.l.b16 %v250
    %v352 = vunpack.c.h.b16 %v250
    %v353 = vunpack.c.l.b16 %v251
    %v354 = vunpack.c.h.b16 %v251
    %v355 = vunpack.c.l.b16 %v252
    %v356 = vunpack.c.l.b16 %v253
    %v357 = vunpack.c.h.b16 %v253
    %v358 = vunpack.c.l.b16 %v254
    %v359 = vunpack.c.h.b16 %v254
    %v360 = vunpack.c.l.b16 %v255
    %v361 = vunpack.c.h.b16 %v255
    %v362 = vunpack.c.l.b16 %v256
    %v363 = vunpack.c.h.b16 %v256
    %v364 = vunpack.c.l.b16 %v257
    %v365 = vunpack.c.h.b16 %v257
    %v366 = vunpack.c.l.b16 %v258
    %v367 = vunpack.c.h.b16 %v258
    %v368 = vunpack.c.l.b16 %v259
    %v369 = vpack.c.b16 %v356, %v343
    %v370 = vpack.c.b16 %v357, %v344
    %v371 = vpack.c.b16 %v358, %v345
    %v372 = vpack.c.b16 %v359, %v346
    %v373 = vpack.c.b16 %v360, %v347
    %v374 = vpack.c.b16 %v361, %v348
    %v375 = vpack.c.b16 %v362, %v349
    %v376 = vpack.c.b16 %v363, %v350
    %v377 = vpack.c.b16 %v364, %v351
    %v378 = vpack.c.b16 %v365, %v352
    %v379 = vpack.c.b16 %v366, %v353
    %v380 = vpack.c.b16 %v367, %v354
    %v381 = vpack.c.b16 %v368, %v355
    %vm395 = vcmask 130048
    %v397 = vsel %vm395, %v245, 0
    %399 = vmatprep.subr.bf16.mxu0 %v370
    %400 = vmatpush1.bf16.msra.mxu0 %v369
    %401 = vmatprep.subr.bf16.mxu0 0
    %402 = vmatpush1.bf16.msra.mxu0 0
    %403 = vmatprep.subr.bf16.mxu0 0
    %404 = vmatpush1.bf16.msra.mxu0 0
    %405 = vmatprep.subr.bf16.mxu0 0
    %406 = vmatpush1.bf16.msra.mxu0 0
    %407 = vmatprep.subr.bf16.mxu0 0
    %408 = vmatpush1.bf16.msra.mxu0 0
    %409 = vmatprep.subr.bf16.mxu0 0
    %410 = vmatpush1.bf16.msra.mxu0 0
    %411 = vmatprep.subr.bf16.mxu0 0
    %412 = vmatpush1.bf16.msra.mxu0 0
    %413 = vmatprep.subr.bf16.mxu0 0
    %414 = vmatpush1.bf16.msra.mxu0 0
    %415 = vmatprep.subr.bf16.mxu0 0
    %416 = vmatpush1.bf16.msra.mxu0 0
    %417 = vmatprep.subr.bf16.mxu0 0
    %418 = vmatpush1.bf16.msra.mxu0 0
    %419 = vmatprep.subr.bf16.mxu0 0
    %420 = vmatpush1.bf16.msra.mxu0 0
    %421 = vmatprep.subr.bf16.mxu0 0
    %422 = vmatpush1.bf16.msra.mxu0 0
    %423 = vmatprep.subr.bf16.mxu0 0
    %424 = vmatpush1.bf16.msra.mxu0 0
    %425 = vmatprep.subr.bf16.mxu0 0
    %426 = vmatpush1.bf16.msra.mxu0 0
    %427 = vmatprep.subr.bf16.mxu0 0
    %428 = vmatpush1.bf16.msra.mxu0 0
    %429 = vmatprep.subr.bf16.mxu0 0
    %430 = vmatpush1.bf16.msra.mxu0 0
    %431 = vmatprep.mubr.bf16.mxu0 0
    %432 = vmatmul.mubr.bf16.gmra.mrb[0].mxu0 %v397
    %v433 = vpop.f32.mrb[0].mxu0
    %v434 = vadd.f32 %v267, %v433
    %v435 = vpop.f32.mrb[0].mxu0
    %v436 = vadd.f32 %v271, %v435
    %v437 = vpop.f32.mrb[0].mxu0
    %v438 = vadd.f32 %v267, %v437
    %v439 = vpop.f32.mrb[0].mxu0
    %v440 = vadd.f32 %v271, %v439
    %441 = vdwg.mxu0
    %442 = vmatprep.subr.bf16.mxu0 %v372
    %443 = vmatpush1.bf16.msra.mxu0 %v371
    %444 = vmatprep.subr.bf16.mxu0 0
    %445 = vmatpush1.bf16.msra.mxu0 0
    %446 = vmatprep.subr.bf16.mxu0 0
    %447 = vmatpush1.bf16.msra.mxu0 0
    %448 = vmatprep.subr.bf16.mxu0 0
    %449 = vmatpush1.bf16.msra.mxu0 0
    %450 = vmatprep.subr.bf16.mxu0 0
    %451 = vmatpush1.bf16.msra.mxu0 0
    %452 = vmatprep.subr.bf16.mxu0 0
    %453 = vmatpush1.bf16.msra.mxu0 0
    %454 = vmatprep.subr.bf16.mxu0 0
    %455 = vmatpush1.bf16.msra.mxu0 0
    %456 = vmatprep.subr.bf16.mxu0 0
    %457 = vmatpush1.bf16.msra.mxu0 0
    %458 = vmatprep.subr.bf16.mxu0 0
    %459 = vmatpush1.bf16.msra.mxu0 0
    %460 = vmatprep.subr.bf16.mxu0 0
    %461 = vmatpush1.bf16.msra.mxu0 0
    %462 = vmatprep.subr.bf16.mxu0 0
    %463 = vmatpush1.bf16.msra.mxu0 0
    %464 = vmatprep.subr.bf16.mxu0 0
    %465 = vmatpush1.bf16.msra.mxu0 0
    %466 = vmatprep.subr.bf16.mxu0 0
    %467 = vmatpush1.bf16.msra.mxu0 0
    %468 = vmatprep.subr.bf16.mxu0 0
    %469 = vmatpush1.bf16.msra.mxu0 0
    %470 = vmatprep.subr.bf16.mxu0 0
    %471 = vmatpush1.bf16.msra.mxu0 0
    %472 = vmatprep.subr.bf16.mxu0 0
    %473 = vmatpush1.bf16.msra.mxu0 0
    %474 = vmatprep.mubr.bf16.mxu0 0
    %475 = vmatmul.mubr.bf16.gmra.mrb[0].mxu0 %v397
    %v476 = vpop.f32.mrb[0].mxu0
    %v477 = vadd.f32 %v275, %v476
    %v478 = vpop.f32.mrb[0].mxu0
    %v479 = vadd.f32 %v279, %v478
    %v480 = vpop.f32.mrb[0].mxu0
    %v481 = vadd.f32 %v275, %v480
    %v482 = vpop.f32.mrb[0].mxu0
    %v483 = vadd.f32 %v279, %v482
    %484 = vdwg.mxu0
    %485 = vmatprep.subr.bf16.mxu0 %v374
    %486 = vmatpush1.bf16.msra.mxu0 %v373
    %487 = vmatprep.subr.bf16.mxu0 0
    %488 = vmatpush1.bf16.msra.mxu0 0
    %489 = vmatprep.subr.bf16.mxu0 0
    %490 = vmatpush1.bf16.msra.mxu0 0
    %491 = vmatprep.subr.bf16.mxu0 0
    %492 = vmatpush1.bf16.msra.mxu0 0
    %493 = vmatprep.subr.bf16.mxu0 0
    %494 = vmatpush1.bf16.msra.mxu0 0
    %495 = vmatprep.subr.bf16.mxu0 0
    %496 = vmatpush1.bf16.msra.mxu0 0
    %497 = vmatprep.subr.bf16.mxu0 0
    %498 = vmatpush1.bf16.msra.mxu0 0
    %499 = vmatprep.subr.bf16.mxu0 0
    %500 = vmatpush1.bf16.msra.mxu0 0
    %501 = vmatprep.subr.bf16.mxu0 0
    %502 = vmatpush1.bf16.msra.mxu0 0
    %503 = vmatprep.subr.bf16.mxu0 0
    %504 = vmatpush1.bf16.msra.mxu0 0
    %505 = vmatprep.subr.bf16.mxu0 0
    %506 = vmatpush1.bf16.msra.mxu0 0
    %507 = vmatprep.subr.bf16.mxu0 0
    %508 = vmatpush1.bf16.msra.mxu0 0
    %509 = vmatprep.subr.bf16.mxu0 0
    %510 = vmatpush1.bf16.msra.mxu0 0
    %511 = vmatprep.subr.bf16.mxu0 0
    %512 = vmatpush1.bf16.msra.mxu0 0
    %513 = vmatprep.subr.bf16.mxu0 0
    %514 = vmatpush1.bf16.msra.mxu0 0
    %515 = vmatprep.subr.bf16.mxu0 0
    %516 = vmatpush1.bf16.msra.mxu0 0
    %517 = vmatprep.mubr.bf16.mxu0 0
    %518 = vmatmul.mubr.bf16.gmra.mrb[0].mxu0 %v397
    %v519 = vpop.f32.mrb[0].mxu0
    %v520 = vadd.f32 %v283, %v519
    %v521 = vpop.f32.mrb[0].mxu0
    %v522 = vadd.f32 %v287, %v521
    %v523 = vpop.f32.mrb[0].mxu0
    %v524 = vadd.f32 %v283, %v523
    %v525 = vpop.f32.mrb[0].mxu0
    %v526 = vadd.f32 %v287, %v525
    %527 = vdwg.mxu0
    %528 = vmatprep.subr.bf16.mxu0 %v376
    %529 = vmatpush1.bf16.msra.mxu0 %v375
    %530 = vmatprep.subr.bf16.mxu0 0
    %531 = vmatpush1.bf16.msra.mxu0 0
    %532 = vmatprep.subr.bf16.mxu0 0
    %533 = vmatpush1.bf16.msra.mxu0 0
    %534 = vmatprep.subr.bf16.mxu0 0
    %535 = vmatpush1.bf16.msra.mxu0 0
    %536 = vmatprep.subr.bf16.mxu0 0
    %537 = vmatpush1.bf16.msra.mxu0 0
    %538 = vmatprep.subr.bf16.mxu0 0
    %539 = vmatpush1.bf16.msra.mxu0 0
    %540 = vmatprep.subr.bf16.mxu0 0
    %541 = vmatpush1.bf16.msra.mxu0 0
    %542 = vmatprep.subr.bf16.mxu0 0
    %543 = vmatpush1.bf16.msra.mxu0 0
    %544 = vmatprep.subr.bf16.mxu0 0
    %545 = vmatpush1.bf16.msra.mxu0 0
    %546 = vmatprep.subr.bf16.mxu0 0
    %547 = vmatpush1.bf16.msra.mxu0 0
    %548 = vmatprep.subr.bf16.mxu0 0
    %549 = vmatpush1.bf16.msra.mxu0 0
    %550 = vmatprep.subr.bf16.mxu0 0
    %551 = vmatpush1.bf16.msra.mxu0 0
    %552 = vmatprep.subr.bf16.mxu0 0
    %553 = vmatpush1.bf16.msra.mxu0 0
    %554 = vmatprep.subr.bf16.mxu0 0
    %555 = vmatpush1.bf16.msra.mxu0 0
    %556 = vmatprep.subr.bf16.mxu0 0
    %557 = vmatpush1.bf16.msra.mxu0 0
    %558 = vmatprep.subr.bf16.mxu0 0
    %559 = vmatpush1.bf16.msra.mxu0 0
    %560 = vmatprep.mubr.bf16.mxu0 0
    %561 = vmatmul.mubr.bf16.gmra.mrb[0].mxu0 %v397
    %v562 = vpop.f32.mrb[0].mxu0
    %v563 = vadd.f32 %v291, %v562
    %v564 = vpop.f32.mrb[0].mxu0
    %v565 = vadd.f32 %v295, %v564
    %v566 = vpop.f32.mrb[0].mxu0
    %v567 = vadd.f32 %v291, %v566
    %v568 = vpop.f32.mrb[0].mxu0
    %v569 = vadd.f32 %v295, %v568
    %570 = vdwg.mxu0
    %571 = vmatprep.subr.bf16.mxu0 %v378
    %572 = vmatpush1.bf16.msra.mxu0 %v377
    %573 = vmatprep.subr.bf16.mxu0 0
    %574 = vmatpush1.bf16.msra.mxu0 0
    %575 = vmatprep.subr.bf16.mxu0 0
    %576 = vmatpush1.bf16.msra.mxu0 0
    %577 = vmatprep.subr.bf16.mxu0 0
    %578 = vmatpush1.bf16.msra.mxu0 0
    %579 = vmatprep.subr.bf16.mxu0 0
    %580 = vmatpush1.bf16.msra.mxu0 0
    %581 = vmatprep.subr.bf16.mxu0 0
    %582 = vmatpush1.bf16.msra.mxu0 0
    %583 = vmatprep.subr.bf16.mxu0 0
    %584 = vmatpush1.bf16.msra.mxu0 0
    %585 = vmatprep.subr.bf16.mxu0 0
    %586 = vmatpush1.bf16.msra.mxu0 0
    %587 = vmatprep.subr.bf16.mxu0 0
    %588 = vmatpush1.bf16.msra.mxu0 0
    %589 = vmatprep.subr.bf16.mxu0 0
    %590 = vmatpush1.bf16.msra.mxu0 0
    %591 = vmatprep.subr.bf16.mxu0 0
    %592 = vmatpush1.bf16.msra.mxu0 0
    %593 = vmatprep.subr.bf16.mxu0 0
    %594 = vmatpush1.bf16.msra.mxu0 0
    %595 = vmatprep.subr.bf16.mxu0 0
    %596 = vmatpush1.bf16.msra.mxu0 0
    %597 = vmatprep.subr.bf16.mxu0 0
    %598 = vmatpush1.bf16.msra.mxu0 0
    %599 = vmatprep.subr.bf16.mxu0 0
    %600 = vmatpush1.bf16.msra.mxu0 0
    %601 = vmatprep.subr.bf16.mxu0 0
    %602 = vmatpush1.bf16.msra.mxu0 0
    %603 = vmatprep.mubr.bf16.mxu0 0
    %604 = vmatmul.mubr.bf16.gmra.mrb[0].mxu0 %v397
    %v605 = vpop.f32.mrb[0].mxu0
    %v606 = vadd.f32 %v299, %v605
    %v607 = vpop.f32.mrb[0].mxu0
    %v608 = vadd.f32 %v303, %v607
    %v609 = vpop.f32.mrb[0].mxu0
    %v610 = vadd.f32 %v299, %v609
    %v611 = vpop.f32.mrb[0].mxu0
    %v612 = vadd.f32 %v303, %v611
    %613 = vdwg.mxu0
    %614 = vmatprep.subr.bf16.mxu0 %v380
    %615 = vmatpush1.bf16.msra.mxu0 %v379
    %616 = vmatprep.subr.bf16.mxu0 0
    %617 = vmatpush1.bf16.msra.mxu0 0
    %618 = vmatprep.subr.bf16.mxu0 0
    %619 = vmatpush1.bf16.msra.mxu0 0
    %620 = vmatprep.subr.bf16.mxu0 0
    %621 = vmatpush1.bf16.msra.mxu0 0
    %622 = vmatprep.subr.bf16.mxu0 0
    %623 = vmatpush1.bf16.msra.mxu0 0
    %624 = vmatprep.subr.bf16.mxu0 0
    %625 = vmatpush1.bf16.msra.mxu0 0
    %626 = vmatprep.subr.bf16.mxu0 0
    %627 = vmatpush1.bf16.msra.mxu0 0
    %628 = vmatprep.subr.bf16.mxu0 0
    %629 = vmatpush1.bf16.msra.mxu0 0
    %630 = vmatprep.subr.bf16.mxu0 0
    %631 = vmatpush1.bf16.msra.mxu0 0
    %632 = vmatprep.subr.bf16.mxu0 0
    %633 = vmatpush1.bf16.msra.mxu0 0
    %634 = vmatprep.subr.bf16.mxu0 0
    %635 = vmatpush1.bf16.msra.mxu0 0
    %636 = vmatprep.subr.bf16.mxu0 0
    %637 = vmatpush1.bf16.msra.mxu0 0
    %638 = vmatprep.subr.bf16.mxu0 0
    %639 = vmatpush1.bf16.msra.mxu0 0
    %640 = vmatprep.subr.bf16.mxu0 0
    %641 = vmatpush1.bf16.msra.mxu0 0
    %642 = vmatprep.subr.bf16.mxu0 0
    %643 = vmatpush1.bf16.msra.mxu0 0
    %644 = vmatprep.subr.bf16.mxu0 0
    %645 = vmatpush1.bf16.msra.mxu0 0
    %646 = vmatprep.mubr.bf16.mxu0 0
    %647 = vmatmul.mubr.bf16.gmra.mrb[0].mxu0 %v397
    %v648 = vpop.f32.mrb[0].mxu0
    %v649 = vadd.f32 %v307, %v648
    %v650 = vpop.f32.mrb[0].mxu0
    %v651 = vadd.f32 %v311, %v650
    %v652 = vpop.f32.mrb[0].mxu0
    %v653 = vadd.f32 %v307, %v652
    %v654 = vpop.f32.mrb[0].mxu0
    %v655 = vadd.f32 %v311, %v654
    %656 = vdwg.mxu0
    %657 = vmatprep.subr.bf16.mxu0 0
    %658 = vmatpush1.bf16.msra.mxu0 %v381
    %659 = vmatprep.subr.bf16.mxu0 0
    %660 = vmatpush1.bf16.msra.mxu0 0
    %661 = vmatprep.subr.bf16.mxu0 0
    %662 = vmatpush1.bf16.msra.mxu0 0
    %663 = vmatprep.subr.bf16.mxu0 0
    %664 = vmatpush1.bf16.msra.mxu0 0
    %665 = vmatprep.subr.bf16.mxu0 0
    %666 = vmatpush1.bf16.msra.mxu0 0
    %667 = vmatprep.subr.bf16.mxu0 0
    %668 = vmatpush1.bf16.msra.mxu0 0
    %669 = vmatprep.subr.bf16.mxu0 0
    %670 = vmatpush1.bf16.msra.mxu0 0
    %671 = vmatprep.subr.bf16.mxu0 0
    %672 = vmatpush1.bf16.msra.mxu0 0
    %673 = vmatprep.subr.bf16.mxu0 0
    %674 = vmatpush1.bf16.msra.mxu0 0
    %675 = vmatprep.subr.bf16.mxu0 0
    %676 = vmatpush1.bf16.msra.mxu0 0
    %677 = vmatprep.subr.bf16.mxu0 0
    %678 = vmatpush1.bf16.msra.mxu0 0
    %679 = vmatprep.subr.bf16.mxu0 0
    %680 = vmatpush1.bf16.msra.mxu0 0
    %681 = vmatprep.subr.bf16.mxu0 0
    %682 = vmatpush1.bf16.msra.mxu0 0
    %683 = vmatprep.subr.bf16.mxu0 0
    %684 = vmatpush1.bf16.msra.mxu0 0
    %685 = vmatprep.subr.bf16.mxu0 0
    %686 = vmatpush1.bf16.msra.mxu0 0
    %687 = vmatprep.subr.bf16.mxu0 0
    %688 = vmatpush1.bf16.msra.mxu0 0
    %689 = vmatprep.mubr.bf16.mxu0 0
    %690 = vmatmul.mubr.bf16.gmra.mrb[0].mxu0 %v397
    %v691 = vpop.f32.mrb[0].mxu0
    %v692 = vadd.f32 %v315, %v691
    %v693 = vpop.f32.mrb[0].mxu0
    %v694 = vpop.f32.mrb[0].mxu0
    %v695 = vadd.f32 %v315, %v694
    %v696 = vpop.f32.mrb[0].mxu0
    %697 = vdwg.mxu0
    %v698 = vmax.f32 %v434, 0.0
    %v699 = vmax.f32 %v438, 0.0
    %v700 = vpack.c.bf16 %v699, %v698
    %v701 = vld [vmem:[%s3] sm:$0xf]
    %v702 = vld [vmem:[%s3 + $0x4] sm:$0xf]
    %v703 = vld [vmem:[%s3 + $0x8] sm:$0xf]
    %v704 = vld [vmem:[%s3 + $0xc] sm:$0xf]
    %v705 = vld [vmem:[#allocation2] sm:$0x1]
    %v707 = vlaneseq
    %v708 = vshrl.u32 %v707, 7
    %v709 = vsub.s32 0, %v708
    %v710 = vrot.slane %v705, %v709
    %v716 = vunpack.c.l.b16 %v701
    %v717 = vunpack.c.l.b16 %v702
    %v718 = vunpack.c.l.b16 %v703
    %v719 = vunpack.c.l.b16 %v704
    %v720 = vpack.c.b16 %v717, %v716
    %v721 = vpack.c.b16 %v719, %v718
    %vm724 = vcmask 261120
    %v726 = vsel %vm724, %v700, 0
    %728 = vmatprep.subr.bf16.mxu0 0
    %729 = vmatpush1.bf16.msra.mxu0 %v720
    %730 = vmatprep.subr.bf16.mxu0 0
    %731 = vmatpush1.bf16.msra.mxu0 %v721
    %732 = vmatprep.subr.bf16.mxu0 0
    %733 = vmatpush1.bf16.msra.mxu0 0
    %734 = vmatprep.subr.bf16.mxu0 0
    %735 = vmatpush1.bf16.msra.mxu0 0
    %736 = vmatprep.subr.bf16.mxu0 0
    %737 = vmatpush1.bf16.msra.mxu0 0
    %738 = vmatprep.subr.bf16.mxu0 0
    %739 = vmatpush1.bf16.msra.mxu0 0
    %740 = vmatprep.subr.bf16.mxu0 0
    %741 = vmatpush1.bf16.msra.mxu0 0
    %742 = vmatprep.subr.bf16.mxu0 0
    %743 = vmatpush1.bf16.msra.mxu0 0
    %744 = vmatprep.subr.bf16.mxu0 0
    %745 = vmatpush1.bf16.msra.mxu0 0
    %746 = vmatprep.subr.bf16.mxu0 0
    %747 = vmatpush1.bf16.msra.mxu0 0
    %748 = vmatprep.subr.bf16.mxu0 0
    %749 = vmatpush1.bf16.msra.mxu0 0
    %750 = vmatprep.subr.bf16.mxu0 0
    %751 = vmatpush1.bf16.msra.mxu0 0
    %752 = vmatprep.subr.bf16.mxu0 0
    %753 = vmatpush1.bf16.msra.mxu0 0
    %754 = vmatprep.subr.bf16.mxu0 0
    %755 = vmatpush1.bf16.msra.mxu0 0
    %756 = vmatprep.subr.bf16.mxu0 0
    %757 = vmatpush1.bf16.msra.mxu0 0
    %758 = vmatprep.subr.bf16.mxu0 0
    %759 = vmatpush1.bf16.msra.mxu0 0
    %760 = vmatprep.mubr.bf16.mxu0 0
    %761 = vmatmul.mubr.bf16.gmra.mrb[0].mxu0 %v726
    %v762 = vpop.f32.mrb[0].mxu0
    %v763 = vadd.f32 %v710, %v762
    %v764 = vpop.f32.mrb[0].mxu0
    %v765 = vpop.f32.mrb[0].mxu0
    %v766 = vadd.f32 %v710, %v765
    %v767 = vpop.f32.mrb[0].mxu0
    %768 = vdwg.mxu0
    %v769 = vxor.u32 %v763, 2147483648
    %v770 = vxor.u32 %v766, 2147483648
    %v771 = vmul.f32 %v769, 1.442695
    %v772 = vpow.pop %v771
    %v773 = vmul.f32 %v770, 1.442695
    %v774 = vpow.pop %v773
    %v775 = vadd.f32 %v772, 1.0
    %v776 = vadd.f32 %v774, 1.0
    %v777 = vrcp.pop %v775
    %v778 = vmul.f32 1.0, %v777
    %v779 = vrcp.pop %v776
    %v780 = vmul.f32 1.0, %v779
    %vm781 = vcmp.ge.f32.partialorder %v778, 0.5
    %vm782 = vcmp.ge.f32.partialorder %v780, 0.5
    %v783 = vsel %vm781, 1, 0
    %v784 = vsel %vm782, 1, 0
    %v785 = vcvt.s32.f32 %v783
    %v786 = vcvt.s32.f32 %v784
    %v787 = vld [vmem:[#allocation9] sm:$0x7]
    %789 = vset.pattern.permute.xlu0 0
    %790 = vperm.xlu0 %789, %v785
    %v791 = vpop.permute.xlu0 %790
    %794 = vset.pattern.permute.xlu0 0
    %795 = vperm.xlu0 %794, %v786
    %v796 = vpop.permute.xlu0 %795
    %v799 = vlaneseq
    %v800 = vshrl.u32 %v799, 7
    %v801 = vsub.s32 0, %v800
    %v802 = vrot.slane %v787, %v801
    %v803 = vlaneseq
    %v804 = vshrl.u32 %v803, 7
    %v805 = vsub.s32 1, %v804
    %v806 = vrot.slane %v787, %v805
    %v807 = vlaneseq
    %v808 = vshrl.u32 %v807, 7
    %v809 = vsub.s32 2, %v808
    %v810 = vrot.slane %v787, %v809
    %v814 = vmul.f32 %v791, %v802
    %v815 = vmul.f32 %v791, %v806
    %v816 = vmul.f32 %v791, %v810
    %v817 = vmul.f32 %v796, %v802
    %v818 = vmul.f32 %v796, %v806
    %v819 = vmul.f32 %v796, %v810
    %v820 = vadd.f32 %v436, %v814
    %v821 = vadd.f32 %v477, %v815
    %v822 = vadd.f32 %v479, %v816
    %v823 = vadd.f32 %v440, %v817
    %v824 = vadd.f32 %v481, %v818
    %v825 = vadd.f32 %v483, %v819
    %v826 = vxor.u32 %v820, 2147483648
    %v827 = vxor.u32 %v823, 2147483648
    %v828 = vmul.f32 %v826, 1.442695
    %v829 = vpow.pop %v828
    %v830 = vmul.f32 %v827, 1.442695
    %v831 = vpow.pop %v830
    %v832 = vadd.f32 %v829, 1.0
    %v833 = vadd.f32 %v831, 1.0
    %v834 = vrcp.pop %v832
    %v835 = vmul.f32 1.0, %v834
    %v836 = vrcp.pop %v833
    %v837 = vmul.f32 1.0, %v836
    %v838 = vxor.u32 %v821, 2147483648
    %v839 = vxor.u32 %v824, 2147483648
    %v840 = vmul.f32 %v838, 1.442695
    %v841 = vpow.pop %v840
    %v842 = vmul.f32 %v839, 1.442695
    %v843 = vpow.pop %v842
    %v844 = vadd.f32 %v841, 1.0
    %v845 = vadd.f32 %v843, 1.0
    %v846 = vrcp.pop %v844
    %v847 = vmul.f32 1.0, %v846
    %v848 = vrcp.pop %v845
    %v849 = vmul.f32 1.0, %v848
    %v850 = vld [vmem:[#allocation14] sm:$0x1]
    %v852 = vlaneseq
    %v853 = vshrl.u32 %v852, 7
    %v854 = vsub.s32 0, %v853
    %v855 = vrot.slane %v850, %v854
    %v857 = vmul.f32 %v835, %v855
    %v858 = vmul.f32 %v837, %v855
    %v859 = vadd.f32 %v822, %v857
    %v860 = vadd.f32 %v825, %v858
    %v861 = vtanh.pop %v859
    %v862 = vtanh.pop %v860
    %v863 = vsub.f32 1.0, %v847
    %v864 = vsub.f32 1.0, %v849
    %v865 = vmul.f32 %v863, %v861
    %v866 = vmul.f32 %v864, %v862
    %v867 = vmul.f32 %v227, 1.0025032
    %v868 = vmul.f32 %v237, 1.0025032
    %v869 = vadd.f32 %v865, %v867
    %v870 = vadd.f32 %v866, %v868
    %v871 = vpack.c.bf16 %v870, %v869
    %v872 = vld [vmem:[#allocation11] sm:$0xff]
    %v873 = vld [vmem:[#allocation11 + $0x8] sm:$0xff]
    %v874 = vld [vmem:[#allocation11 + $0x10] sm:$0xff]
    %v875 = vld [vmem:[#allocation11 + $0x18] sm:$0xff]
    %v876 = vld [vmem:[#allocation11 + $0x20] sm:$0xff]
    %v877 = vld [vmem:[#allocation11 + $0x28] sm:$0xff]
    %v878 = vld [vmem:[#allocation11 + $0x30] sm:$0xff]
    %v879 = vld [vmem:[#allocation11 + $0x38] sm:$0xff]
    %v880 = vld [vmem:[#allocation12] sm:$0xf]
    %v882 = vlaneseq
    %v883 = vshrl.u32 %v882, 7
    %v884 = vsub.s32 0, %v883
    %v885 = vrot.slane %v880, %v884
    %v886 = vlaneseq
    %v887 = vshrl.u32 %v886, 7
    %v888 = vsub.s32 1, %v887
    %v889 = vrot.slane %v880, %v888
    %v890 = vlaneseq
    %v891 = vshrl.u32 %v890, 7
    %v892 = vsub.s32 2, %v891
    %v893 = vrot.slane %v880, %v892
    %v894 = vlaneseq
    %v895 = vshrl.u32 %v894, 7
    %v896 = vsub.s32 3, %v895
    %v897 = vrot.slane %v880, %v896
    %v910 = vunpack.c.l.b16 %v872
    %v911 = vunpack.c.h.b16 %v872
    %v912 = vunpack.c.l.b16 %v873
    %v913 = vunpack.c.h.b16 %v873
    %v914 = vunpack.c.l.b16 %v874
    %v915 = vunpack.c.h.b16 %v874
    %v916 = vunpack.c.l.b16 %v875
    %v917 = vunpack.c.h.b16 %v875
    %v918 = vunpack.c.l.b16 %v876
    %v919 = vunpack.c.h.b16 %v876
    %v920 = vunpack.c.l.b16 %v877
    %v921 = vunpack.c.h.b16 %v877
    %v922 = vunpack.c.l.b16 %v878
    %v923 = vunpack.c.h.b16 %v878
    %v924 = vunpack.c.l.b16 %v879
    %v925 = vunpack.c.h.b16 %v879
    %v926 = vpack.c.b16 %v914, %v910
    %v927 = vpack.c.b16 %v915, %v911
    %v928 = vpack.c.b16 %v916, %v912
    %v929 = vpack.c.b16 %v917, %v913
    %v930 = vpack.c.b16 %v922, %v918
    %v931 = vpack.c.b16 %v923, %v919
    %v932 = vpack.c.b16 %v924, %v920
    %v933 = vpack.c.b16 %v925, %v921
    %v943 = vsel %vm724, %v871, 0
    %945 = vmatprep.subr.bf16.mxu0 %v927
    %946 = vmatpush1.bf16.msra.mxu0 %v926
    %947 = vmatprep.subr.bf16.mxu0 %v931
    %948 = vmatpush1.bf16.msra.mxu0 %v930
    %949 = vmatprep.subr.bf16.mxu0 0
    %950 = vmatpush1.bf16.msra.mxu0 0
    %951 = vmatprep.subr.bf16.mxu0 0
    %952 = vmatpush1.bf16.msra.mxu0 0
    %953 = vmatprep.subr.bf16.mxu0 0
    %954 = vmatpush1.bf16.msra.mxu0 0
    %955 = vmatprep.subr.bf16.mxu0 0
    %956 = vmatpush1.bf16.msra.mxu0 0
    %957 = vmatprep.subr.bf16.mxu0 0
    %958 = vmatpush1.bf16.msra.mxu0 0
    %959 = vmatprep.subr.bf16.mxu0 0
    %960 = vmatpush1.bf16.msra.mxu0 0
    %961 = vmatprep.subr.bf16.mxu0 0
    %962 = vmatpush1.bf16.msra.mxu0 0
    %963 = vmatprep.subr.bf16.mxu0 0
    %964 = vmatpush1.bf16.msra.mxu0 0
    %965 = vmatprep.subr.bf16.mxu0 0
    %966 = vmatpush1.bf16.msra.mxu0 0
    %967 = vmatprep.subr.bf16.mxu0 0
    %968 = vmatpush1.bf16.msra.mxu0 0
    %969 = vmatprep.subr.bf16.mxu0 0
    %970 = vmatpush1.bf16.msra.mxu0 0
    %971 = vmatprep.subr.bf16.mxu0 0
    %972 = vmatpush1.bf16.msra.mxu0 0
    %973 = vmatprep.subr.bf16.mxu0 0
    %974 = vmatpush1.bf16.msra.mxu0 0
    %975 = vmatprep.subr.bf16.mxu0 0
    %976 = vmatpush1.bf16.msra.mxu0 0
    %977 = vmatprep.mubr.bf16.mxu0 0
    %978 = vmatmul.mubr.bf16.gmra.mrb[0].mxu0 %v943
    %v979 = vpop.f32.mrb[0].mxu0
    %v980 = vadd.f32 %v885, %v979
    %v981 = vpop.f32.mrb[0].mxu0
    %v982 = vadd.f32 %v889, %v981
    %v983 = vpop.f32.mrb[0].mxu0
    %v984 = vadd.f32 %v885, %v983
    %v985 = vpop.f32.mrb[0].mxu0
    %v986 = vadd.f32 %v889, %v985
    %987 = vdwg.mxu0
    %988 = vmatprep.subr.bf16.mxu0 %v929
    %989 = vmatpush1.bf16.msra.mxu0 %v928
    %990 = vmatprep.subr.bf16.mxu0 %v933
    %991 = vmatpush1.bf16.msra.mxu0 %v932
    %992 = vmatprep.subr.bf16.mxu0 0
    %993 = vmatpush1.bf16.msra.mxu0 0
    %994 = vmatprep.subr.bf16.mxu0 0
    %995 = vmatpush1.bf16.msra.mxu0 0
    %996 = vmatprep.subr.bf16.mxu0 0
    %997 = vmatpush1.bf16.msra.mxu0 0
    %998 = vmatprep.subr.bf16.mxu0 0
    %999 = vmatpush1.bf16.msra.mxu0 0
    %1000 = vmatprep.subr.bf16.mxu0 0
    %1001 = vmatpush1.bf16.msra.mxu0 0
    %1002 = vmatprep.subr.bf16.mxu0 0
    %1003 = vmatpush1.bf16.msra.mxu0 0
    %1004 = vmatprep.subr.bf16.mxu0 0
    %1005 = vmatpush1.bf16.msra.mxu0 0
    %1006 = vmatprep.subr.bf16.mxu0 0
    %1007 = vmatpush1.bf16.msra.mxu0 0
    %1008 = vmatprep.subr.bf16.mxu0 0
    %1009 = vmatpush1.bf16.msra.mxu0 0
    %1010 = vmatprep.subr.bf16.mxu0 0
    %1011 = vmatpush1.bf16.msra.mxu0 0
    %1012 = vmatprep.subr.bf16.mxu0 0
    %1013 = vmatpush1.bf16.msra.mxu0 0
    %1014 = vmatprep.subr.bf16.mxu0 0
    %1015 = vmatpush1.bf16.msra.mxu0 0
    %1016 = vmatprep.subr.bf16.mxu0 0
    %1017 = vmatpush1.bf16.msra.mxu0 0
    %1018 = vmatprep.subr.bf16.mxu0 0
    %1019 = vmatpush1.bf16.msra.mxu0 0
    %1020 = vmatprep.mubr.bf16.mxu0 0
    %1021 = vmatmul.mubr.bf16.gmra.mrb[0].mxu0 %v943
    %v1022 = vpop.f32.mrb[0].mxu0
    %v1023 = vadd.f32 %v893, %v1022
    %v1024 = vpop.f32.mrb[0].mxu0
    %v1025 = vadd.f32 %v897, %v1024
    %v1026 = vpop.f32.mrb[0].mxu0
    %v1027 = vadd.f32 %v893, %v1026
    %v1028 = vpop.f32.mrb[0].mxu0
    %v1029 = vadd.f32 %v897, %v1028
    %1030 = vdwg.mxu0
    %v1031 = vmax.f32 %v1025, 0.0
    %v1032 = vmax.f32 %v1029, 0.0
    %v1033 = vpack.c.bf16 %v1032, %v1031
    %v1034 = vld [vmem:[%s9] sm:$0xf]
    %v1035 = vld [vmem:[%s9 + $0x4] sm:$0xf]
    %v1036 = vld [vmem:[%s9 + $0x8] sm:$0xf]
    %v1037 = vld [vmem:[%s9 + $0xc] sm:$0xf]
    %v1038 = vld [vmem:[%s10] sm:$0x1]
    %v1040 = vlaneseq
    %v1041 = vshrl.u32 %v1040, 7
    %v1042 = vsub.s32 0, %v1041
    %v1043 = vrot.slane %v1038, %v1042
    %v1049 = vunpack.c.l.b16 %v1034
    %v1050 = vunpack.c.l.b16 %v1035
    %v1051 = vunpack.c.l.b16 %v1036
    %v1052 = vunpack.c.l.b16 %v1037
    %v1053 = vpack.c.b16 %v1050, %v1049
    %v1054 = vpack.c.b16 %v1052, %v1051
    %v1058 = vsel %vm724, %v1033, 0
    %1060 = vmatprep.subr.bf16.mxu0 0
    %1061 = vmatpush1.bf16.msra.mxu0 %v1053
    %1062 = vmatprep.subr.bf16.mxu0 0
    %1063 = vmatpush1.bf16.msra.mxu0 %v1054
    %1064 = vmatprep.subr.bf16.mxu0 0
    %1065 = vmatpush1.bf16.msra.mxu0 0
    %1066 = vmatprep.subr.bf16.mxu0 0
    %1067 = vmatpush1.bf16.msra.mxu0 0
    %1068 = vmatprep.subr.bf16.mxu0 0
    %1069 = vmatpush1.bf16.msra.mxu0 0
    %1070 = vmatprep.subr.bf16.mxu0 0
    %1071 = vmatpush1.bf16.msra.mxu0 0
    %1072 = vmatprep.subr.bf16.mxu0 0
    %1073 = vmatpush1.bf16.msra.mxu0 0
    %1074 = vmatprep.subr.bf16.mxu0 0
    %1075 = vmatpush1.bf16.msra.mxu0 0
    %1076 = vmatprep.subr.bf16.mxu0 0
    %1077 = vmatpush1.bf16.msra.mxu0 0
    %1078 = vmatprep.subr.bf16.mxu0 0
    %1079 = vmatpush1.bf16.msra.mxu0 0
    %1080 = vmatprep.subr.bf16.mxu0 0
    %1081 = vmatpush1.bf16.msra.mxu0 0
    %1082 = vmatprep.subr.bf16.mxu0 0
    %1083 = vmatpush1.bf16.msra.mxu0 0
    %1084 = vmatprep.subr.bf16.mxu0 0
    %1085 = vmatpush1.bf16.msra.mxu0 0
    %1086 = vmatprep.subr.bf16.mxu0 0
    %1087 = vmatpush1.bf16.msra.mxu0 0
    %1088 = vmatprep.subr.bf16.mxu0 0
    %1089 = vmatpush1.bf16.msra.mxu0 0
    %1090 = vmatprep.subr.bf16.mxu0 0
    %1091 = vmatpush1.bf16.msra.mxu0 0
    %1092 = vmatprep.mubr.bf16.mxu0 0
    %1093 = vmatmul.mubr.bf16.gmra.mrb[0].mxu0 %v1058
    %v1094 = vpop.f32.mrb[0].mxu0
    %v1095 = vadd.f32 %v1043, %v1094
    %v1096 = vpop.f32.mrb[0].mxu0
    %v1097 = vpop.f32.mrb[0].mxu0
    %v1098 = vadd.f32 %v1043, %v1097
    %v1099 = vpop.f32.mrb[0].mxu0
    %1100 = vdwg.mxu0
    %v1101 = vxor.u32 %v1095, 2147483648
    %v1102 = vxor.u32 %v1098, 2147483648
    %v1103 = vmul.f32 %v1101, 1.442695
    %v1104 = vpow.pop %v1103
    %v1105 = vmul.f32 %v1102, 1.442695
    %v1106 = vpow.pop %v1105
    %v1107 = vadd.f32 %v1104, 1.0
    %v1108 = vadd.f32 %v1106, 1.0
    %v1109 = vrcp.pop %v1107
    %v1110 = vmul.f32 1.0, %v1109
    %v1111 = vrcp.pop %v1108
    %v1112 = vmul.f32 1.0, %v1111
    %vm1113 = vcmp.ge.f32.partialorder %v1110, 0.5
    %vm1114 = vcmp.ge.f32.partialorder %v1112, 0.5
    %v1115 = vsel %vm1113, 1, 0
    %v1116 = vsel %vm1114, 1, 0
    %v1117 = vcvt.s32.f32 %v1115
    %v1118 = vcvt.s32.f32 %v1116
    %s1119 = scalar_lea.vmem [#allocation9], 3
    %v1120 = vld [vmem:[%s1119] sm:$0x7]
    %1122 = vset.pattern.permute.xlu0 0
    %1123 = vperm.xlu0 %1122, %v1117
    %v1124 = vpop.permute.xlu0 %1123
    %1127 = vset.pattern.permute.xlu0 0
    %1128 = vperm.xlu0 %1127, %v1118
    %v1129 = vpop.permute.xlu0 %1128
    %v1132 = vlaneseq
    %v1133 = vshrl.u32 %v1132, 7
    %v1134 = vsub.s32 0, %v1133
    %v1135 = vrot.slane %v1120, %v1134
    %v1136 = vlaneseq
    %v1137 = vshrl.u32 %v1136, 7
    %v1138 = vsub.s32 1, %v1137
    %v1139 = vrot.slane %v1120, %v1138
    %v1140 = vlaneseq
    %v1141 = vshrl.u32 %v1140, 7
    %v1142 = vsub.s32 2, %v1141
    %v1143 = vrot.slane %v1120, %v1142
    %v1147 = vmul.f32 %v1124, %v1135
    %v1148 = vmul.f32 %v1124, %v1139
    %v1149 = vmul.f32 %v1124, %v1143
    %v1150 = vmul.f32 %v1129, %v1135
    %v1151 = vmul.f32 %v1129, %v1139
    %v1152 = vmul.f32 %v1129, %v1143
    %v1153 = vadd.f32 %v520, %v1147
    %v1154 = vadd.f32 %v522, %v1148
    %v1155 = vadd.f32 %v563, %v1149
    %v1156 = vadd.f32 %v524, %v1150
    %v1157 = vadd.f32 %v526, %v1151
    %v1158 = vadd.f32 %v567, %v1152
    %v1159 = vadd.f32 %v1153, %v980
    %v1160 = vadd.f32 %v1156, %v984
    %v1161 = vxor.u32 %v1159, 2147483648
    %v1162 = vxor.u32 %v1160, 2147483648
    %v1163 = vmul.f32 %v1161, 1.442695
    %v1164 = vpow.pop %v1163
    %v1165 = vmul.f32 %v1162, 1.442695
    %v1166 = vpow.pop %v1165
    %v1167 = vadd.f32 %v1164, 1.0
    %v1168 = vadd.f32 %v1166, 1.0
    %v1169 = vrcp.pop %v1167
    %v1170 = vmul.f32 1.0, %v1169
    %v1171 = vrcp.pop %v1168
    %v1172 = vmul.f32 1.0, %v1171
    %v1173 = vadd.f32 %v1154, %v982
    %v1174 = vadd.f32 %v1157, %v986
    %v1175 = vxor.u32 %v1173, 2147483648
    %v1176 = vxor.u32 %v1174, 2147483648
    %v1177 = vmul.f32 %v1175, 1.442695
    %v1178 = vpow.pop %v1177
    %v1179 = vmul.f32 %v1176, 1.442695
    %v1180 = vpow.pop %v1179
    %v1181 = vadd.f32 %v1178, 1.0
    %v1182 = vadd.f32 %v1180, 1.0
    %v1183 = vrcp.pop %v1181
    %v1184 = vmul.f32 1.0, %v1183
    %v1185 = vrcp.pop %v1182
    %v1186 = vmul.f32 1.0, %v1185
    %v1187 = vmul.f32 %v1170, %v1023
    %v1188 = vmul.f32 %v1172, %v1027
    %v1189 = vadd.f32 %v1155, %v1187
    %v1190 = vadd.f32 %v1158, %v1188
    %v1191 = vtanh.pop %v1189
    %v1192 = vtanh.pop %v1190
    %v1193 = vsub.f32 1.0, %v1184
    %v1194 = vsub.f32 1.0, %v1186
    %v1195 = vmul.f32 %v1193, %v1191
    %v1196 = vmul.f32 %v1194, %v1192
    %v1197 = vmul.f32 %v1184, %v869
    %v1198 = vmul.f32 %v1186, %v870
    %v1199 = vadd.f32 %v1195, %v1197
    %v1200 = vadd.f32 %v1196, %v1198
    %v1201 = vmul.f32 %v228, 1.0025032
    %v1202 = vmul.f32 %v238, 1.0025032
    %v1203 = vadd.f32 %v1199, %v1201
    %v1204 = vadd.f32 %v1200, %v1202
    %v1205 = vpack.c.bf16 %v1204, %v1203
    %s1206 = scalar_lea.vmem [#allocation11], 64
    %v1207 = vld [vmem:[%s1206] sm:$0xff]
    %v1208 = vld [vmem:[%s1206 + $0x8] sm:$0xff]
    %v1209 = vld [vmem:[%s1206 + $0x10] sm:$0xff]
    %v1210 = vld [vmem:[%s1206 + $0x18] sm:$0xff]
    %v1211 = vld [vmem:[%s1206 + $0x20] sm:$0xff]
    %v1212 = vld [vmem:[%s1206 + $0x28] sm:$0xff]
    %v1213 = vld [vmem:[%s1206 + $0x30] sm:$0xff]
    %v1214 = vld [vmem:[%s1206 + $0x38] sm:$0xff]
    %s1215 = scalar_lea.vmem [#allocation12], 4
    %v1216 = vld [vmem:[%s1215] sm:$0xf]
    %v1218 = vlaneseq
    %v1219 = vshrl.u32 %v1218, 7
    %v1220 = vsub.s32 0, %v1219
    %v1221 = vrot.slane %v1216, %v1220
    %v1222 = vlaneseq
    %v1223 = vshrl.u32 %v1222, 7
    %v1224 = vsub.s32 1, %v1223
    %v1225 = vrot.slane %v1216, %v1224
    %v1226 = vlaneseq
    %v1227 = vshrl.u32 %v1226, 7
    %v1228 = vsub.s32 2, %v1227
    %v1229 = vrot.slane %v1216, %v1228
    %v1230 = vlaneseq
    %v1231 = vshrl.u32 %v1230, 7
    %v1232 = vsub.s32 3, %v1231
    %v1233 = vrot.slane %v1216, %v1232
    %v1246 = vunpack.c.l.b16 %v1207
    %v1247 = vunpack.c.h.b16 %v1207
    %v1248 = vunpack.c.l.b16 %v1208
    %v1249 = vunpack.c.h.b16 %v1208
    %v1250 = vunpack.c.l.b16 %v1209
    %v1251 = vunpack.c.h.b16 %v1209
    %v1252 = vunpack.c.l.b16 %v1210
    %v1253 = vunpack.c.h.b16 %v1210
    %v1254 = vunpack.c.l.b16 %v1211
    %v1255 = vunpack.c.h.b16 %v1211
    %v1256 = vunpack.c.l.b16 %v1212
    %v1257 = vunpack.c.h.b16 %v1212
    %v1258 = vunpack.c.l.b16 %v1213
    %v1259 = vunpack.c.h.b16 %v1213
    %v1260 = vunpack.c.l.b16 %v1214
    %v1261 = vunpack.c.h.b16 %v1214
    %v1262 = vpack.c.b16 %v1250, %v1246
    %v1263 = vpack.c.b16 %v1251, %v1247
    %v1264 = vpack.c.b16 %v1252, %v1248
    %v1265 = vpack.c.b16 %v1253, %v1249
    %v1266 = vpack.c.b16 %v1258, %v1254
    %v1267 = vpack.c.b16 %v1259, %v1255
    %v1268 = vpack.c.b16 %v1260, %v1256
    %v1269 = vpack.c.b16 %v1261, %v1257
    %v1279 = vsel %vm724, %v1205, 0
    %1281 = vmatprep.subr.bf16.mxu0 %v1263
    %1282 = vmatpush1.bf16.msra.mxu0 %v1262
    %1283 = vmatprep.subr.bf16.mxu0 %v1267
    %1284 = vmatpush1.bf16.msra.mxu0 %v1266
    %1285 = vmatprep.subr.bf16.mxu0 0
    %1286 = vmatpush1.bf16.msra.mxu0 0
    %1287 = vmatprep.subr.bf16.mxu0 0
    %1288 = vmatpush1.bf16.msra.mxu0 0
    %1289 = vmatprep.subr.bf16.mxu0 0
    %1290 = vmatpush1.bf16.msra.mxu0 0
    %1291 = vmatprep.subr.bf16.mxu0 0
    %1292 = vmatpush1.bf16.msra.mxu0 0
    %1293 = vmatprep.subr.bf16.mxu0 0
    %1294 = vmatpush1.bf16.msra.mxu0 0
    %1295 = vmatprep.subr.bf16.mxu0 0
    %1296 = vmatpush1.bf16.msra.mxu0 0
    %1297 = vmatprep.subr.bf16.mxu0 0
    %1298 = vmatpush1.bf16.msra.mxu0 0
    %1299 = vmatprep.subr.bf16.mxu0 0
    %1300 = vmatpush1.bf16.msra.mxu0 0
    %1301 = vmatprep.subr.bf16.mxu0 0
    %1302 = vmatpush1.bf16.msra.mxu0 0
    %1303 = vmatprep.subr.bf16.mxu0 0
    %1304 = vmatpush1.bf16.msra.mxu0 0
    %1305 = vmatprep.subr.bf16.mxu0 0
    %1306 = vmatpush1.bf16.msra.mxu0 0
    %1307 = vmatprep.subr.bf16.mxu0 0
    %1308 = vmatpush1.bf16.msra.mxu0 0
    %1309 = vmatprep.subr.bf16.mxu0 0
    %1310 = vmatpush1.bf16.msra.mxu0 0
    %1311 = vmatprep.subr.bf16.mxu0 0
    %1312 = vmatpush1.bf16.msra.mxu0 0
    %1313 = vmatprep.mubr.bf16.mxu0 0
    %1314 = vmatmul.mubr.bf16.gmra.mrb[0].mxu0 %v1279
    %v1315 = vpop.f32.mrb[0].mxu0
    %v1316 = vadd.f32 %v1221, %v1315
    %v1317 = vpop.f32.mrb[0].mxu0
    %v1318 = vadd.f32 %v1225, %v1317
    %v1319 = vpop.f32.mrb[0].mxu0
    %v1320 = vadd.f32 %v1221, %v1319
    %v1321 = vpop.f32.mrb[0].mxu0
    %v1322 = vadd.f32 %v1225, %v1321
    %1323 = vdwg.mxu0
    %1324 = vmatprep.subr.bf16.mxu0 %v1265
    %1325 = vmatpush1.bf16.msra.mxu0 %v1264
    %1326 = vmatprep.subr.bf16.mxu0 %v1269
    %1327 = vmatpush1.bf16.msra.mxu0 %v1268
    %1328 = vmatprep.subr.bf16.mxu0 0
    %1329 = vmatpush1.bf16.msra.mxu0 0
    %1330 = vmatprep.subr.bf16.mxu0 0
    %1331 = vmatpush1.bf16.msra.mxu0 0
    %1332 = vmatprep.subr.bf16.mxu0 0
    %1333 = vmatpush1.bf16.msra.mxu0 0
    %1334 = vmatprep.subr.bf16.mxu0 0
    %1335 = vmatpush1.bf16.msra.mxu0 0
    %1336 = vmatprep.subr.bf16.mxu0 0
    %1337 = vmatpush1.bf16.msra.mxu0 0
    %1338 = vmatprep.subr.bf16.mxu0 0
    %1339 = vmatpush1.bf16.msra.mxu0 0
    %1340 = vmatprep.subr.bf16.mxu0 0
    %1341 = vmatpush1.bf16.msra.mxu0 0
    %1342 = vmatprep.subr.bf16.mxu0 0
    %1343 = vmatpush1.bf16.msra.mxu0 0
    %1344 = vmatprep.subr.bf16.mxu0 0
    %1345 = vmatpush1.bf16.msra.mxu0 0
    %1346 = vmatprep.subr.bf16.mxu0 0
    %1347 = vmatpush1.bf16.msra.mxu0 0
    %1348 = vmatprep.subr.bf16.mxu0 0
    %1349 = vmatpush1.bf16.msra.mxu0 0
    %1350 = vmatprep.subr.bf16.mxu0 0
    %1351 = vmatpush1.bf16.msra.mxu0 0
    %1352 = vmatprep.subr.bf16.mxu0 0
    %1353 = vmatpush1.bf16.msra.mxu0 0
    %1354 = vmatprep.subr.bf16.mxu0 0
    %1355 = vmatpush1.bf16.msra.mxu0 0
    %1356 = vmatprep.mubr.bf16.mxu0 0
    %1357 = vmatmul.mubr.bf16.gmra.mrb[0].mxu0 %v1279
    %v1358 = vpop.f32.mrb[0].mxu0
    %v1359 = vadd.f32 %v1229, %v1358
    %v1360 = vpop.f32.mrb[0].mxu0
    %v1361 = vadd.f32 %v1233, %v1360
    %v1362 = vpop.f32.mrb[0].mxu0
    %v1363 = vadd.f32 %v1229, %v1362
    %v1364 = vpop.f32.mrb[0].mxu0
    %v1365 = vadd.f32 %v1233, %v1364
    %1366 = vdwg.mxu0
    %v1367 = vmax.f32 %v1361, 0.0
    %v1368 = vmax.f32 %v1365, 0.0
    %v1369 = vpack.c.bf16 %v1368, %v1367
    %s1370 = scalar_lea.vmem %s9, 16
    %v1371 = vld [vmem:[%s1370] sm:$0xf]
    %v1372 = vld [vmem:[%s1370 + $0x4] sm:$0xf]
    %v1373 = vld [vmem:[%s1370 + $0x8] sm:$0xf]
    %v1374 = vld [vmem:[%s1370 + $0xc] sm:$0xf]
    %s1375 = scalar_lea.vmem %s10, 1
    %v1376 = vld [vmem:[%s1375] sm:$0x1]
    %v1378 = vlaneseq
    %v1379 = vshrl.u32 %v1378, 7
    %v1380 = vsub.s32 0, %v1379
    %v1381 = vrot.slane %v1376, %v1380
    %v1387 = vunpack.c.l.b16 %v1371
    %v1388 = vunpack.c.l.b16 %v1372
    %v1389 = vunpack.c.l.b16 %v1373
    %v1390 = vunpack.c.l.b16 %v1374
    %v1391 = vpack.c.b16 %v1388, %v1387
    %v1392 = vpack.c.b16 %v1390, %v1389
    %v1396 = vsel %vm724, %v1369, 0
    %1398 = vmatprep.subr.bf16.mxu0 0
    %1399 = vmatpush1.bf16.msra.mxu0 %v1391
    %1400 = vmatprep.subr.bf16.mxu0 0
    %1401 = vmatpush1.bf16.msra.mxu0 %v1392
    %1402 = vmatprep.subr.bf16.mxu0 0
    %1403 = vmatpush1.bf16.msra.mxu0 0
    %1404 = vmatprep.subr.bf16.mxu0 0
    %1405 = vmatpush1.bf16.msra.mxu0 0
    %1406 = vmatprep.subr.bf16.mxu0 0
    %1407 = vmatpush1.bf16.msra.mxu0 0
    %1408 = vmatprep.subr.bf16.mxu0 0
    %1409 = vmatpush1.bf16.msra.mxu0 0
    %1410 = vmatprep.subr.bf16.mxu0 0
    %1411 = vmatpush1.bf16.msra.mxu0 0
    %1412 = vmatprep.subr.bf16.mxu0 0
    %1413 = vmatpush1.bf16.msra.mxu0 0
    %1414 = vmatprep.subr.bf16.mxu0 0
    %1415 = vmatpush1.bf16.msra.mxu0 0
    %1416 = vmatprep.subr.bf16.mxu0 0
    %1417 = vmatpush1.bf16.msra.mxu0 0
    %1418 = vmatprep.subr.bf16.mxu0 0
    %1419 = vmatpush1.bf16.msra.mxu0 0
    %1420 = vmatprep.subr.bf16.mxu0 0
    %1421 = vmatpush1.bf16.msra.mxu0 0
    %1422 = vmatprep.subr.bf16.mxu0 0
    %1423 = vmatpush1.bf16.msra.mxu0 0
    %1424 = vmatprep.subr.bf16.mxu0 0
    %1425 = vmatpush1.bf16.msra.mxu0 0
    %1426 = vmatprep.subr.bf16.mxu0 0
    %1427 = vmatpush1.bf16.msra.mxu0 0
    %1428 = vmatprep.subr.bf16.mxu0 0
    %1429 = vmatpush1.bf16.msra.mxu0 0
    %1430 = vmatprep.mubr.bf16.mxu0 0
    %1431 = vmatmul.mubr.bf16.gmra.mrb[0].mxu0 %v1396
    %v1432 = vpop.f32.mrb[0].mxu0
    %v1433 = vadd.f32 %v1381, %v1432
    %v1434 = vpop.f32.mrb[0].mxu0
    %v1435 = vpop.f32.mrb[0].mxu0
    %v1436 = vadd.f32 %v1381, %v1435
    %v1437 = vpop.f32.mrb[0].mxu0
    %1438 = vdwg.mxu0
    %v1439 = vxor.u32 %v1433, 2147483648
    %v1440 = vxor.u32 %v1436, 2147483648
    %v1441 = vmul.f32 %v1439, 1.442695
    %v1442 = vpow.pop %v1441
    %v1443 = vmul.f32 %v1440, 1.442695
    %v1444 = vpow.pop %v1443
    %v1445 = vadd.f32 %v1442, 1.0
    %v1446 = vadd.f32 %v1444, 1.0
    %v1447 = vrcp.pop %v1445
    %v1448 = vmul.f32 1.0, %v1447
    %v1449 = vrcp.pop %v1446
    %v1450 = vmul.f32 1.0, %v1449
    %vm1451 = vcmp.ge.f32.partialorder %v1448, 0.5
    %vm1452 = vcmp.ge.f32.partialorder %v1450, 0.5
    %v1453 = vsel %vm1451, 1, 0
    %v1454 = vsel %vm1452, 1, 0
    %v1455 = vcvt.s32.f32 %v1453
    %v1456 = vcvt.s32.f32 %v1454
    %s1457 = scalar_lea.vmem [#allocation9], 6
    %v1458 = vld [vmem:[%s1457] sm:$0x7]
    %1460 = vset.pattern.permute.xlu0 0
    %1461 = vperm.xlu0 %1460, %v1455
    %v1462 = vpop.permute.xlu0 %1461
    %1465 = vset.pattern.permute.xlu0 0
    %1466 = vperm.xlu0 %1465, %v1456
    %v1467 = vpop.permute.xlu0 %1466
    %v1470 = vlaneseq
    %v1471 = vshrl.u32 %v1470, 7
    %v1472 = vsub.s32 0, %v1471
    %v1473 = vrot.slane %v1458, %v1472
    %v1474 = vlaneseq
    %v1475 = vshrl.u32 %v1474, 7
    %v1476 = vsub.s32 1, %v1475
    %v1477 = vrot.slane %v1458, %v1476
    %v1478 = vlaneseq
    %v1479 = vshrl.u32 %v1478, 7
    %v1480 = vsub.s32 2, %v1479
    %v1481 = vrot.slane %v1458, %v1480
    %v1485 = vmul.f32 %v1462, %v1473
    %v1486 = vmul.f32 %v1462, %v1477
    %v1487 = vmul.f32 %v1462, %v1481
    %v1488 = vmul.f32 %v1467, %v1473
    %v1489 = vmul.f32 %v1467, %v1477
    %v1490 = vmul.f32 %v1467, %v1481
    %v1491 = vadd.f32 %v565, %v1485
    %v1492 = vadd.f32 %v606, %v1486
    %v1493 = vadd.f32 %v608, %v1487
    %v1494 = vadd.f32 %v569, %v1488
    %v1495 = vadd.f32 %v610, %v1489
    %v1496 = vadd.f32 %v612, %v1490
    %v1497 = vadd.f32 %v1491, %v1316
    %v1498 = vadd.f32 %v1494, %v1320
    %v1499 = vxor.u32 %v1497, 2147483648
    %v1500 = vxor.u32 %v1498, 2147483648
    %v1501 = vmul.f32 %v1499, 1.442695
    %v1502 = vpow.pop %v1501
    %v1503 = vmul.f32 %v1500, 1.442695
    %v1504 = vpow.pop %v1503
    %v1505 = vadd.f32 %v1502, 1.0
    %v1506 = vadd.f32 %v1504, 1.0
    %v1507 = vrcp.pop %v1505
    %v1508 = vmul.f32 1.0, %v1507
    %v1509 = vrcp.pop %v1506
    %v1510 = vmul.f32 1.0, %v1509
    %v1511 = vadd.f32 %v1492, %v1318
    %v1512 = vadd.f32 %v1495, %v1322
    %v1513 = vxor.u32 %v1511, 2147483648
    %v1514 = vxor.u32 %v1512, 2147483648
    %v1515 = vmul.f32 %v1513, 1.442695
    %v1516 = vpow.pop %v1515
    %v1517 = vmul.f32 %v1514, 1.442695
    %v1518 = vpow.pop %v1517
    %v1519 = vadd.f32 %v1516, 1.0
    %v1520 = vadd.f32 %v1518, 1.0
    %v1521 = vrcp.pop %v1519
    %v1522 = vmul.f32 1.0, %v1521
    %v1523 = vrcp.pop %v1520
    %v1524 = vmul.f32 1.0, %v1523
    %v1525 = vmul.f32 %v1508, %v1359
    %v1526 = vmul.f32 %v1510, %v1363
    %v1527 = vadd.f32 %v1493, %v1525
    %v1528 = vadd.f32 %v1496, %v1526
    %v1529 = vtanh.pop %v1527
    %v1530 = vtanh.pop %v1528
    %v1531 = vsub.f32 1.0, %v1522
    %v1532 = vsub.f32 1.0, %v1524
    %v1533 = vmul.f32 %v1531, %v1529
    %v1534 = vmul.f32 %v1532, %v1530
    %v1535 = vmul.f32 %v1522, %v1203
    %v1536 = vmul.f32 %v1524, %v1204
    %v1537 = vadd.f32 %v1533, %v1535
    %v1538 = vadd.f32 %v1534, %v1536
    %v1539 = vmul.f32 %v229, 1.0025032
    %v1540 = vmul.f32 %v239, 1.0025032
    %v1541 = vadd.f32 %v1537, %v1539
    %v1542 = vadd.f32 %v1538, %v1540
    %v1543 = vpack.c.bf16 %v1542, %v1541
    %s1544 = scalar_lea.vmem [#allocation11], 128
    %v1545 = vld [vmem:[%s1544] sm:$0xff]
    %v1546 = vld [vmem:[%s1544 + $0x8] sm:$0xff]
    %v1547 = vld [vmem:[%s1544 + $0x10] sm:$0xff]
    %v1548 = vld [vmem:[%s1544 + $0x18] sm:$0xff]
    %v1549 = vld [vmem:[%s1544 + $0x20] sm:$0xff]
    %v1550 = vld [vmem:[%s1544 + $0x28] sm:$0xff]
    %v1551 = vld [vmem:[%s1544 + $0x30] sm:$0xff]
    %v1552 = vld [vmem:[%s1544 + $0x38] sm:$0xff]
    %s1553 = scalar_lea.vmem [#allocation12], 8
    %v1554 = vld [vmem:[%s1553] sm:$0xf]
    %v1556 = vlaneseq
    %v1557 = vshrl.u32 %v1556, 7
    %v1558 = vsub.s32 0, %v1557
    %v1559 = vrot.slane %v1554, %v1558
    %v1560 = vlaneseq
    %v1561 = vshrl.u32 %v1560, 7
    %v1562 = vsub.s32 1, %v1561
    %v1563 = vrot.slane %v1554, %v1562
    %v1564 = vlaneseq
    %v1565 = vshrl.u32 %v1564, 7
    %v1566 = vsub.s32 2, %v1565
    %v1567 = vrot.slane %v1554, %v1566
    %v1568 = vlaneseq
    %v1569 = vshrl.u32 %v1568, 7
    %v1570 = vsub.s32 3, %v1569
    %v1571 = vrot.slane %v1554, %v1570
    %v1584 = vunpack.c.l.b16 %v1545
    %v1585 = vunpack.c.h.b16 %v1545
    %v1586 = vunpack.c.l.b16 %v1546
    %v1587 = vunpack.c.h.b16 %v1546
    %v1588 = vunpack.c.l.b16 %v1547
    %v1589 = vunpack.c.h.b16 %v1547
    %v1590 = vunpack.c.l.b16 %v1548
    %v1591 = vunpack.c.h.b16 %v1548
    %v1592 = vunpack.c.l.b16 %v1549
    %v1593 = vunpack.c.h.b16 %v1549
    %v1594 = vunpack.c.l.b16 %v1550
    %v1595 = vunpack.c.h.b16 %v1550
    %v1596 = vunpack.c.l.b16 %v1551
    %v1597 = vunpack.c.h.b16 %v1551
    %v1598 = vunpack.c.l.b16 %v1552
    %v1599 = vunpack.c.h.b16 %v1552
    %v1600 = vpack.c.b16 %v1588, %v1584
    %v1601 = vpack.c.b16 %v1589, %v1585
    %v1602 = vpack.c.b16 %v1590, %v1586
    %v1603 = vpack.c.b16 %v1591, %v1587
    %v1604 = vpack.c.b16 %v1596, %v1592
    %v1605 = vpack.c.b16 %v1597, %v1593
    %v1606 = vpack.c.b16 %v1598, %v1594
    %v1607 = vpack.c.b16 %v1599, %v1595
    %v1617 = vsel %vm724, %v1543, 0
    %1619 = vmatprep.subr.bf16.mxu0 %v1601
    %1620 = vmatpush1.bf16.msra.mxu0 %v1600
    %1621 = vmatprep.subr.bf16.mxu0 %v1605
    %1622 = vmatpush1.bf16.msra.mxu0 %v1604
    %1623 = vmatprep.subr.bf16.mxu0 0
    %1624 = vmatpush1.bf16.msra.mxu0 0
    %1625 = vmatprep.subr.bf16.mxu0 0
    %1626 = vmatpush1.bf16.msra.mxu0 0
    %1627 = vmatprep.subr.bf16.mxu0 0
    %1628 = vmatpush1.bf16.msra.mxu0 0
    %1629 = vmatprep.subr.bf16.mxu0 0
    %1630 = vmatpush1.bf16.msra.mxu0 0
    %1631 = vmatprep.subr.bf16.mxu0 0
    %1632 = vmatpush1.bf16.msra.mxu0 0
    %1633 = vmatprep.subr.bf16.mxu0 0
    %1634 = vmatpush1.bf16.msra.mxu0 0
    %1635 = vmatprep.subr.bf16.mxu0 0
    %1636 = vmatpush1.bf16.msra.mxu0 0
    %1637 = vmatprep.subr.bf16.mxu0 0
    %1638 = vmatpush1.bf16.msra.mxu0 0
    %1639 = vmatprep.subr.bf16.mxu0 0
    %1640 = vmatpush1.bf16.msra.mxu0 0
    %1641 = vmatprep.subr.bf16.mxu0 0
    %1642 = vmatpush1.bf16.msra.mxu0 0
    %1643 = vmatprep.subr.bf16.mxu0 0
    %1644 = vmatpush1.bf16.msra.mxu0 0
    %1645 = vmatprep.subr.bf16.mxu0 0
    %1646 = vmatpush1.bf16.msra.mxu0 0
    %1647 = vmatprep.subr.bf16.mxu0 0
    %1648 = vmatpush1.bf16.msra.mxu0 0
    %1649 = vmatprep.subr.bf16.mxu0 0
    %1650 = vmatpush1.bf16.msra.mxu0 0
    %1651 = vmatprep.mubr.bf16.mxu0 0
    %1652 = vmatmul.mubr.bf16.gmra.mrb[0].mxu0 %v1617
    %v1653 = vpop.f32.mrb[0].mxu0
    %v1654 = vadd.f32 %v1559, %v1653
    %v1655 = vpop.f32.mrb[0].mxu0
    %v1656 = vadd.f32 %v1563, %v1655
    %v1657 = vpop.f32.mrb[0].mxu0
    %v1658 = vadd.f32 %v1559, %v1657
    %v1659 = vpop.f32.mrb[0].mxu0
    %v1660 = vadd.f32 %v1563, %v1659
    %1661 = vdwg.mxu0
    %1662 = vmatprep.subr.bf16.mxu0 %v1603
    %1663 = vmatpush1.bf16.msra.mxu0 %v1602
    %1664 = vmatprep.subr.bf16.mxu0 %v1607
    %1665 = vmatpush1.bf16.msra.mxu0 %v1606
    %1666 = vmatprep.subr.bf16.mxu0 0
    %1667 = vmatpush1.bf16.msra.mxu0 0
    %1668 = vmatprep.subr.bf16.mxu0 0
    %1669 = vmatpush1.bf16.msra.mxu0 0
    %1670 = vmatprep.subr.bf16.mxu0 0
    %1671 = vmatpush1.bf16.msra.mxu0 0
    %1672 = vmatprep.subr.bf16.mxu0 0
    %1673 = vmatpush1.bf16.msra.mxu0 0
    %1674 = vmatprep.subr.bf16.mxu0 0
    %1675 = vmatpush1.bf16.msra.mxu0 0
    %1676 = vmatprep.subr.bf16.mxu0 0
    %1677 = vmatpush1.bf16.msra.mxu0 0
    %1678 = vmatprep.subr.bf16.mxu0 0
    %1679 = vmatpush1.bf16.msra.mxu0 0
    %1680 = vmatprep.subr.bf16.mxu0 0
    %1681 = vmatpush1.bf16.msra.mxu0 0
    %1682 = vmatprep.subr.bf16.mxu0 0
    %1683 = vmatpush1.bf16.msra.mxu0 0
    %1684 = vmatprep.subr.bf16.mxu0 0
    %1685 = vmatpush1.bf16.msra.mxu0 0
    %1686 = vmatprep.subr.bf16.mxu0 0
    %1687 = vmatpush1.bf16.msra.mxu0 0
    %1688 = vmatprep.subr.bf16.mxu0 0
    %1689 = vmatpush1.bf16.msra.mxu0 0
    %1690 = vmatprep.subr.bf16.mxu0 0
    %1691 = vmatpush1.bf16.msra.mxu0 0
    %1692 = vmatprep.subr.bf16.mxu0 0
    %1693 = vmatpush1.bf16.msra.mxu0 0
    %1694 = vmatprep.mubr.bf16.mxu0 0
    %1695 = vmatmul.mubr.bf16.gmra.mrb[0].mxu0 %v1617
    %v1696 = vpop.f32.mrb[0].mxu0
    %v1697 = vadd.f32 %v1567, %v1696
    %v1698 = vpop.f32.mrb[0].mxu0
    %v1699 = vadd.f32 %v1571, %v1698
    %v1700 = vpop.f32.mrb[0].mxu0
    %v1701 = vadd.f32 %v1567, %v1700
    %v1702 = vpop.f32.mrb[0].mxu0
    %v1703 = vadd.f32 %v1571, %v1702
    %1704 = vdwg.mxu0
    %v1705 = vmax.f32 %v1699, 0.0
    %v1706 = vmax.f32 %v1703, 0.0
    %v1707 = vpack.c.bf16 %v1706, %v1705
    %s1708 = scalar_lea.vmem %s9, 32
    %v1709 = vld [vmem:[%s1708] sm:$0xf]
    %v1710 = vld [vmem:[%s1708 + $0x4] sm:$0xf]
    %v1711 = vld [vmem:[%s1708 + $0x8] sm:$0xf]
    %v1712 = vld [vmem:[%s1708 + $0xc] sm:$0xf]
    %s1713 = scalar_lea.vmem %s10, 2
    %v1714 = vld [vmem:[%s1713] sm:$0x1]
    %v1716 = vlaneseq
    %v1717 = vshrl.u32 %v1716, 7
    %v1718 = vsub.s32 0, %v1717
    %v1719 = vrot.slane %v1714, %v1718
    %v1725 = vunpack.c.l.b16 %v1709
    %v1726 = vunpack.c.l.b16 %v1710
    %v1727 = vunpack.c.l.b16 %v1711
    %v1728 = vunpack.c.l.b16 %v1712
    %v1729 = vpack.c.b16 %v1726, %v1725
    %v1730 = vpack.c.b16 %v1728, %v1727
    %v1734 = vsel %vm724, %v1707, 0
    %1736 = vmatprep.subr.bf16.mxu0 0
    %1737 = vmatpush1.bf16.msra.mxu0 %v1729
    %1738 = vmatprep.subr.bf16.mxu0 0
    %1739 = vmatpush1.bf16.msra.mxu0 %v1730
    %1740 = vmatprep.subr.bf16.mxu0 0
    %1741 = vmatpush1.bf16.msra.mxu0 0
    %1742 = vmatprep.subr.bf16.mxu0 0
    %1743 = vmatpush1.bf16.msra.mxu0 0
    %1744 = vmatprep.subr.bf16.mxu0 0
    %1745 = vmatpush1.bf16.msra.mxu0 0
    %1746 = vmatprep.subr.bf16.mxu0 0
    %1747 = vmatpush1.bf16.msra.mxu0 0
    %1748 = vmatprep.subr.bf16.mxu0 0
    %1749 = vmatpush1.bf16.msra.mxu0 0
    %1750 = vmatprep.subr.bf16.mxu0 0
    %1751 = vmatpush1.bf16.msra.mxu0 0
    %1752 = vmatprep.subr.bf16.mxu0 0
    %1753 = vmatpush1.bf16.msra.mxu0 0
    %1754 = vmatprep.subr.bf16.mxu0 0
    %1755 = vmatpush1.bf16.msra.mxu0 0
    %1756 = vmatprep.subr.bf16.mxu0 0
    %1757 = vmatpush1.bf16.msra.mxu0 0
    %1758 = vmatprep.subr.bf16.mxu0 0
    %1759 = vmatpush1.bf16.msra.mxu0 0
    %1760 = vmatprep.subr.bf16.mxu0 0
    %1761 = vmatpush1.bf16.msra.mxu0 0
    %1762 = vmatprep.subr.bf16.mxu0 0
    %1763 = vmatpush1.bf16.msra.mxu0 0
    %1764 = vmatprep.subr.bf16.mxu0 0
    %1765 = vmatpush1.bf16.msra.mxu0 0
    %1766 = vmatprep.subr.bf16.mxu0 0
    %1767 = vmatpush1.bf16.msra.mxu0 0
    %1768 = vmatprep.mubr.bf16.mxu0 0
    %1769 = vmatmul.mubr.bf16.gmra.mrb[0].mxu0 %v1734
    %v1770 = vpop.f32.mrb[0].mxu0
    %v1771 = vadd.f32 %v1719, %v1770
    %v1772 = vpop.f32.mrb[0].mxu0
    %v1773 = vpop.f32.mrb[0].mxu0
    %v1774 = vadd.f32 %v1719, %v1773
    %v1775 = vpop.f32.mrb[0].mxu0
    %1776 = vdwg.mxu0
    %v1777 = vxor.u32 %v1771, 2147483648
    %v1778 = vxor.u32 %v1774, 2147483648
    %v1779 = vmul.f32 %v1777, 1.442695
    %v1780 = vpow.pop %v1779
    %v1781 = vmul.f32 %v1778, 1.442695
    %v1782 = vpow.pop %v1781
    %v1783 = vadd.f32 %v1780, 1.0
    %v1784 = vadd.f32 %v1782, 1.0
    %v1785 = vrcp.pop %v1783
    %v1786 = vmul.f32 1.0, %v1785
    %v1787 = vrcp.pop %v1784
    %v1788 = vmul.f32 1.0, %v1787
    %vm1789 = vcmp.ge.f32.partialorder %v1786, 0.5
    %vm1790 = vcmp.ge.f32.partialorder %v1788, 0.5
    %v1791 = vsel %vm1789, 1, 0
    %v1792 = vsel %vm1790, 1, 0
    %v1793 = vcvt.s32.f32 %v1791
    %v1794 = vcvt.s32.f32 %v1792
    %s1795 = scalar_lea.vmem [#allocation9], 9
    %v1796 = vld [vmem:[%s1795] sm:$0x7]
    %1798 = vset.pattern.permute.xlu0 0
    %1799 = vperm.xlu0 %1798, %v1793
    %v1800 = vpop.permute.xlu0 %1799
    %1803 = vset.pattern.permute.xlu0 0
    %1804 = vperm.xlu0 %1803, %v1794
    %v1805 = vpop.permute.xlu0 %1804
    %v1808 = vlaneseq
    %v1809 = vshrl.u32 %v1808, 7
    %v1810 = vsub.s32 0, %v1809
    %v1811 = vrot.slane %v1796, %v1810
    %v1812 = vlaneseq
    %v1813 = vshrl.u32 %v1812, 7
    %v1814 = vsub.s32 1, %v1813
    %v1815 = vrot.slane %v1796, %v1814
    %v1816 = vlaneseq
    %v1817 = vshrl.u32 %v1816, 7
    %v1818 = vsub.s32 2, %v1817
    %v1819 = vrot.slane %v1796, %v1818
    %v1823 = vmul.f32 %v1800, %v1811
    %v1824 = vmul.f32 %v1800, %v1815
    %v1825 = vmul.f32 %v1800, %v1819
    %v1826 = vmul.f32 %v1805, %v1811
    %v1827 = vmul.f32 %v1805, %v1815
    %v1828 = vmul.f32 %v1805, %v1819
    %v1829 = vadd.f32 %v649, %v1823
    %v1830 = vadd.f32 %v651, %v1824
    %v1831 = vadd.f32 %v692, %v1825
    %v1832 = vadd.f32 %v653, %v1826
    %v1833 = vadd.f32 %v655, %v1827
    %v1834 = vadd.f32 %v695, %v1828
    %v1835 = vadd.f32 %v1829, %v1654
    %v1836 = vadd.f32 %v1832, %v1658
    %v1837 = vxor.u32 %v1835, 2147483648
    %v1838 = vxor.u32 %v1836, 2147483648
    %v1839 = vmul.f32 %v1837, 1.442695
    %v1840 = vpow.pop %v1839
    %v1841 = vmul.f32 %v1838, 1.442695
    %v1842 = vpow.pop %v1841
    %v1843 = vadd.f32 %v1840, 1.0
    %v1844 = vadd.f32 %v1842, 1.0
    %v1845 = vrcp.pop %v1843
    %v1846 = vmul.f32 1.0, %v1845
    %v1847 = vrcp.pop %v1844
    %v1848 = vmul.f32 1.0, %v1847
    %v1849 = vadd.f32 %v1830, %v1656
    %v1850 = vadd.f32 %v1833, %v1660
    %v1851 = vxor.u32 %v1849, 2147483648
    %v1852 = vxor.u32 %v1850, 2147483648
    %v1853 = vmul.f32 %v1851, 1.442695
    %v1854 = vpow.pop %v1853
    %v1855 = vmul.f32 %v1852, 1.442695
    %v1856 = vpow.pop %v1855
    %v1857 = vadd.f32 %v1854, 1.0
    %v1858 = vadd.f32 %v1856, 1.0
    %v1859 = vrcp.pop %v1857
    %v1860 = vmul.f32 1.0, %v1859
    %v1861 = vrcp.pop %v1858
    %v1862 = vmul.f32 1.0, %v1861
    %v1863 = vmul.f32 %v1846, %v1697
    %v1864 = vmul.f32 %v1848, %v1701
    %v1865 = vadd.f32 %v1831, %v1863
    %v1866 = vadd.f32 %v1834, %v1864
    %v1867 = vtanh.pop %v1865
    %v1868 = vtanh.pop %v1866
    %v1869 = vsub.f32 1.0, %v1860
    %v1870 = vsub.f32 1.0, %v1862
    %v1871 = vmul.f32 %v1869, %v1867
    %v1872 = vmul.f32 %v1870, %v1868
    %v1873 = vmul.f32 %v1860, %v1541
    %v1874 = vmul.f32 %v1862, %v1542
    %v1875 = vadd.f32 %v1871, %v1873
    %v1876 = vadd.f32 %v1872, %v1874
    %v1877 = vmul.f32 %v230, 1.0025032
    %v1878 = vmul.f32 %v240, 1.0025032
    %v1879 = vadd.f32 %v1875, %v1877
    %v1880 = vadd.f32 %v1876, %v1878
    %v1881 = vpack.c.bf16 %v1880, %v1879
    %v1882 = vld [vmem:[#allocation15] sm:$0xff]
    %v1883 = vld [vmem:[#allocation15 + $0x8] sm:$0xff]
    %v1884 = vld [vmem:[#allocation15 + $0x10] sm:$0xff]
    %v1885 = vld [vmem:[#allocation15 + $0x18] sm:$0xff]
    %v1886 = vld [vmem:[%s12] sm:$0x3]
    %v1888 = vlaneseq
    %v1889 = vshrl.u32 %v1888, 7
    %v1890 = vsub.s32 0, %v1889
    %v1891 = vrot.slane %v1886, %v1890
    %v1892 = vlaneseq
    %v1893 = vshrl.u32 %v1892, 7
    %v1894 = vsub.s32 1, %v1893
    %v1895 = vrot.slane %v1886, %v1894
    %v1902 = vunpack.c.l.b16 %v1882
    %v1903 = vunpack.c.h.b16 %v1882
    %v1904 = vunpack.c.l.b16 %v1883
    %v1905 = vunpack.c.h.b16 %v1883
    %v1906 = vunpack.c.l.b16 %v1884
    %v1907 = vunpack.c.h.b16 %v1884
    %v1908 = vunpack.c.l.b16 %v1885
    %v1909 = vunpack.c.h.b16 %v1885
    %v1910 = vpack.c.b16 %v1904, %v1902
    %v1911 = vpack.c.b16 %v1905, %v1903
    %v1912 = vpack.c.b16 %v1908, %v1906
    %v1913 = vpack.c.b16 %v1909, %v1907
    %v1919 = vsel %vm724, %v1881, 0
    %1921 = vmatprep.subr.bf16.mxu0 %v1911
    %1922 = vmatpush1.bf16.msra.mxu0 %v1910
    %1923 = vmatprep.subr.bf16.mxu0 %v1913
    %1924 = vmatpush1.bf16.msra.mxu0 %v1912
    %1925 = vmatprep.subr.bf16.mxu0 0
    %1926 = vmatpush1.bf16.msra.mxu0 0
    %1927 = vmatprep.subr.bf16.mxu0 0
    %1928 = vmatpush1.bf16.msra.mxu0 0
    %1929 = vmatprep.subr.bf16.mxu0 0
    %1930 = vmatpush1.bf16.msra.mxu0 0
    %1931 = vmatprep.subr.bf16.mxu0 0
    %1932 = vmatpush1.bf16.msra.mxu0 0
    %1933 = vmatprep.subr.bf16.mxu0 0
    %1934 = vmatpush1.bf16.msra.mxu0 0
    %1935 = vmatprep.subr.bf16.mxu0 0
    %1936 = vmatpush1.bf16.msra.mxu0 0
    %1937 = vmatprep.subr.bf16.mxu0 0
    %1938 = vmatpush1.bf16.msra.mxu0 0
    %1939 = vmatprep.subr.bf16.mxu0 0
    %1940 = vmatpush1.bf16.msra.mxu0 0
    %1941 = vmatprep.subr.bf16.mxu0 0
    %1942 = vmatpush1.bf16.msra.mxu0 0
    %1943 = vmatprep.subr.bf16.mxu0 0
    %1944 = vmatpush1.bf16.msra.mxu0 0
    %1945 = vmatprep.subr.bf16.mxu0 0
    %1946 = vmatpush1.bf16.msra.mxu0 0
    %1947 = vmatprep.subr.bf16.mxu0 0
    %1948 = vmatpush1.bf16.msra.mxu0 0
    %1949 = vmatprep.subr.bf16.mxu0 0
    %1950 = vmatpush1.bf16.msra.mxu0 0
    %1951 = vmatprep.subr.bf16.mxu0 0
    %1952 = vmatpush1.bf16.msra.mxu0 0
    %1953 = vmatprep.mubr.bf16.mxu0 0
    %1954 = vmatmul.mubr.bf16.gmra.mrb[0].mxu0 %v1919
    %v1955 = vpop.f32.mrb[0].mxu0
    %v1956 = vadd.f32 %v1891, %v1955
    %v1957 = vpop.f32.mrb[0].mxu0
    %v1958 = vadd.f32 %v1895, %v1957
    %v1959 = vpop.f32.mrb[0].mxu0
    %v1960 = vadd.f32 %v1891, %v1959
    %v1961 = vpop.f32.mrb[0].mxu0
    %v1962 = vadd.f32 %v1895, %v1961
    %1963 = vdwg.mxu0
    %v1964 = vmax.f32 %v1958, 0.0
    %v1965 = vmax.f32 %v1962, 0.0
    %vm1966 = vcmp.ne.f32.partialorder %v1958, %v1958
    %vm1967 = vcmp.ne.f32.partialorder %v1962, %v1962
    %v1968 = vadd.f32 %v1958, 0.0
    %v1969 = vadd.f32 %v1962, 0.0
    %v1970 = vand.u32 2147483647, %v1958
    %v1971 = vand.u32 2147483647, %v1962
    %v1972 = vsub.f32 0.0, %v1970
    %v1973 = vsub.f32 0.0, %v1971
    %v1974 = vmul.f32 %v1972, 1.442695
    %v1975 = vpow.pop %v1974
    %v1976 = vmul.f32 %v1973, 1.442695
    %v1977 = vpow.pop %v1976
    %v1978 = vadd.f32 %v1975, 1.0
    %v1979 = vlog2.pop %v1978
    %v1980 = vmul.f32 %v1979, 0.6931472
    %v1981 = vmul.f32 -0.5, %v1975
    %v1982 = vadd.f32 %v1981, 1.0
    %v1983 = vmul.f32 %v1982, %v1975
    %v1984 = vand.u32 2147483647, %v1975
    %vm1985 = vcmp.lt.f32.partialorder %v1984, 0.0004427343
    %v1986 = vsel %vm1985, %v1983, %v1980
    %v1987 = vadd.f32 %v1977, 1.0
    %v1988 = vlog2.pop %v1987
    %v1989 = vmul.f32 %v1988, 0.6931472
    %v1990 = vmul.f32 -0.5, %v1977
    %v1991 = vadd.f32 %v1990, 1.0
    %v1992 = vmul.f32 %v1991, %v1977
    %v1993 = vand.u32 2147483647, %v1977
    %vm1994 = vcmp.lt.f32.partialorder %v1993, 0.0004427343
    %v1995 = vsel %vm1994, %v1992, %v1989
    %v1996 = vadd.f32 %v1964, %v1986
    %v1997 = vadd.f32 %v1965, %v1995
    %v1998 = vsel %vm1966, %v1968, %v1996
    %v1999 = vsel %vm1967, %v1969, %v1997
    %v2000 = vmul.f32 %v1998, 0.5
    %v2001 = vmul.f32 %v1999, 0.5
    %v2002 = vmul.f32 %v2000, 1.442695
    %v2003 = vpow.pop %v2002
    %v2004 = vmul.f32 %v2001, 1.442695
    %v2005 = vpow.pop %v2004
    %v2006 = vmul.f32 %v2003, %v226
    %v2007 = vmul.f32 %v2005, %v236
    %v2008 = vadd.f32 %v1956, %v2006
    %v2009 = vadd.f32 %v1960, %v2007
    %v2010 = vpack.c.bf16 %v2009, %v2008
    %v2011 = vld [vmem:[#allocation17] sm:$0xff]
    %v2012 = vld [vmem:[#allocation17 + $0x8] sm:$0xff]
    %v2013 = vld [vmem:[#allocation17 + $0x10] sm:$0xff]
    %v2014 = vld [vmem:[#allocation17 + $0x18] sm:$0xff]
    %v2015 = vld [vmem:[#allocation17 + $0x20] sm:$0xff]
    %v2016 = vld [vmem:[#allocation17 + $0x28] sm:$0xff]
    %v2017 = vld [vmem:[#allocation18] sm:$0xff]
    %v2018 = vld [vmem:[#allocation18 + $0x8] sm:$0xf]
    %v2021 = vlaneseq
    %v2022 = vshrl.u32 %v2021, 7
    %v2023 = vsub.s32 0, %v2022
    %v2024 = vrot.slane %v2017, %v2023
    %v2025 = vlaneseq
    %v2026 = vshrl.u32 %v2025, 7
    %v2027 = vsub.s32 1, %v2026
    %v2028 = vrot.slane %v2017, %v2027
    %v2029 = vlaneseq
    %v2030 = vshrl.u32 %v2029, 7
    %v2031 = vsub.s32 2, %v2030
    %v2032 = vrot.slane %v2017, %v2031
    %v2033 = vlaneseq
    %v2034 = vshrl.u32 %v2033, 7
    %v2035 = vsub.s32 3, %v2034
    %v2036 = vrot.slane %v2017, %v2035
    %v2037 = vlaneseq
    %v2038 = vshrl.u32 %v2037, 7
    %v2039 = vsub.s32 4, %v2038
    %v2040 = vrot.slane %v2017, %v2039
    %v2041 = vlaneseq
    %v2042 = vshrl.u32 %v2041, 7
    %v2043 = vsub.s32 5, %v2042
    %v2044 = vrot.slane %v2017, %v2043
    %v2045 = vlaneseq
    %v2046 = vshrl.u32 %v2045, 7
    %v2047 = vsub.s32 6, %v2046
    %v2048 = vrot.slane %v2017, %v2047
    %v2049 = vlaneseq
    %v2050 = vshrl.u32 %v2049, 7
    %v2051 = vsub.s32 7, %v2050
    %v2052 = vrot.slane %v2017, %v2051
    %v2053 = vlaneseq
    %v2054 = vshrl.u32 %v2053, 7
    %v2055 = vsub.s32 0, %v2054
    %v2056 = vrot.slane %v2018, %v2055
    %v2057 = vlaneseq
    %v2058 = vshrl.u32 %v2057, 7
    %v2059 = vsub.s32 1, %v2058
    %v2060 = vrot.slane %v2018, %v2059
    %v2061 = vlaneseq
    %v2062 = vshrl.u32 %v2061, 7
    %v2063 = vsub.s32 2, %v2062
    %v2064 = vrot.slane %v2018, %v2063
    %v2065 = vlaneseq
    %v2066 = vshrl.u32 %v2065, 7
    %v2067 = vsub.s32 3, %v2066
    %v2068 = vrot.slane %v2018, %v2067
    %v2087 = vunpack.c.l.b16 %v2011
    %v2088 = vunpack.c.h.b16 %v2011
    %v2089 = vunpack.c.l.b16 %v2012
    %v2090 = vunpack.c.h.b16 %v2012
    %v2091 = vunpack.c.l.b16 %v2013
    %v2092 = vunpack.c.h.b16 %v2013
    %v2093 = vunpack.c.l.b16 %v2014
    %v2094 = vunpack.c.h.b16 %v2014
    %v2095 = vunpack.c.l.b16 %v2015
    %v2096 = vunpack.c.h.b16 %v2015
    %v2097 = vunpack.c.l.b16 %v2016
    %v2098 = vunpack.c.h.b16 %v2016
    %v2099 = vpack.c.b16 %v2087, %v2087
    %v2100 = vpack.c.b16 %v2088, %v2088
    %v2101 = vpack.c.b16 %v2089, %v2089
    %v2102 = vpack.c.b16 %v2090, %v2090
    %v2103 = vpack.c.b16 %v2091, %v2091
    %v2104 = vpack.c.b16 %v2092, %v2092
    %v2105 = vpack.c.b16 %v2093, %v2093
    %v2106 = vpack.c.b16 %v2094, %v2094
    %v2107 = vpack.c.b16 %v2095, %v2095
    %v2108 = vpack.c.b16 %v2096, %v2096
    %v2109 = vpack.c.b16 %v2097, %v2097
    %v2110 = vpack.c.b16 %v2098, %v2098
    %vm2111 = vcmask 64512
    %v2113 = vsel %vm2111, %v2010, 0
    %vm2115 = vcmask 1043456
    %v2117 = vsel %vm2115, %v2099, 0
    %v2120 = vsel %vm2115, %v2100, 0
    %v2123 = vsel %vm2115, %v2101, 0
    %v2126 = vsel %vm2115, %v2102, 0
    %v2129 = vsel %vm2115, %v2103, 0
    %v2132 = vsel %vm2115, %v2104, 0
    %v2135 = vsel %vm2115, %v2105, 0
    %v2138 = vsel %vm2115, %v2106, 0
    %v2141 = vsel %vm2115, %v2107, 0
    %v2144 = vsel %vm2115, %v2108, 0
    %v2147 = vsel %vm2115, %v2109, 0
    %v2150 = vsel %vm2115, %v2110, 0
    %2152 = vmatprep.subr.bf16.mxu0 %v2120
    %2153 = vmatpush1.bf16.msra.mxu0 %v2117
    %2154 = vmatprep.subr.bf16.mxu0 0
    %2155 = vmatpush1.bf16.msra.mxu0 0
    %2156 = vmatprep.subr.bf16.mxu0 0
    %2157 = vmatpush1.bf16.msra.mxu0 0
    %2158 = vmatprep.subr.bf16.mxu0 0
    %2159 = vmatpush1.bf16.msra.mxu0 0
    %2160 = vmatprep.subr.bf16.mxu0 0
    %2161 = vmatpush1.bf16.msra.mxu0 0
    %2162 = vmatprep.subr.bf16.mxu0 0
    %2163 = vmatpush1.bf16.msra.mxu0 0
    %2164 = vmatprep.subr.bf16.mxu0 0
    %2165 = vmatpush1.bf16.msra.mxu0 0
    %2166 = vmatprep.subr.bf16.mxu0 0
    %2167 = vmatpush1.bf16.msra.mxu0 0
    %2168 = vmatprep.subr.bf16.mxu0 0
    %2169 = vmatpush1.bf16.msra.mxu0 0
    %2170 = vmatprep.subr.bf16.mxu0 0
    %2171 = vmatpush1.bf16.msra.mxu0 0
    %2172 = vmatprep.subr.bf16.mxu0 0
    %2173 = vmatpush1.bf16.msra.mxu0 0
    %2174 = vmatprep.subr.bf16.mxu0 0
    %2175 = vmatpush1.bf16.msra.mxu0 0
    %2176 = vmatprep.subr.bf16.mxu0 0
    %2177 = vmatpush1.bf16.msra.mxu0 0
    %2178 = vmatprep.subr.bf16.mxu0 0
    %2179 = vmatpush1.bf16.msra.mxu0 0
    %2180 = vmatprep.subr.bf16.mxu0 0
    %2181 = vmatpush1.bf16.msra.mxu0 0
    %2182 = vmatprep.subr.bf16.mxu0 0
    %2183 = vmatpush1.bf16.msra.mxu0 0
    %2184 = vmatprep.mubr.bf16.mxu0 0
    %2185 = vmatmul.mubr.bf16.gmra.mrb[0].mxu0 %v2113
    %v2186 = vpop.f32.mrb[0].mxu0
    %v2187 = vadd.f32 %v2024, %v2186
    %v2188 = vpop.f32.mrb[0].mxu0
    %v2189 = vadd.f32 %v2028, %v2188
    %v2190 = vpop.f32.mrb[0].mxu0
    %v2191 = vadd.f32 %v2024, %v2190
    %v2192 = vpop.f32.mrb[0].mxu0
    %v2193 = vadd.f32 %v2028, %v2192
    %2194 = vdwg.mxu0
    %2195 = vmatprep.subr.bf16.mxu0 %v2126
    %2196 = vmatpush1.bf16.msra.mxu0 %v2123
    %2197 = vmatprep.subr.bf16.mxu0 0
    %2198 = vmatpush1.bf16.msra.mxu0 0
    %2199 = vmatprep.subr.bf16.mxu0 0
    %2200 = vmatpush1.bf16.msra.mxu0 0
    %2201 = vmatprep.subr.bf16.mxu0 0
    %2202 = vmatpush1.bf16.msra.mxu0 0
    %2203 = vmatprep.subr.bf16.mxu0 0
    %2204 = vmatpush1.bf16.msra.mxu0 0
    %2205 = vmatprep.subr.bf16.mxu0 0
    %2206 = vmatpush1.bf16.msra.mxu0 0
    %2207 = vmatprep.subr.bf16.mxu0 0
    %2208 = vmatpush1.bf16.msra.mxu0 0
    %2209 = vmatprep.subr.bf16.mxu0 0
    %2210 = vmatpush1.bf16.msra.mxu0 0
    %2211 = vmatprep.subr.bf16.mxu0 0
    %2212 = vmatpush1.bf16.msra.mxu0 0
    %2213 = vmatprep.subr.bf16.mxu0 0
    %2214 = vmatpush1.bf16.msra.mxu0 0
    %2215 = vmatprep.subr.bf16.mxu0 0
    %2216 = vmatpush1.bf16.msra.mxu0 0
    %2217 = vmatprep.subr.bf16.mxu0 0
    %2218 = vmatpush1.bf16.msra.mxu0 0
    %2219 = vmatprep.subr.bf16.mxu0 0
    %2220 = vmatpush1.bf16.msra.mxu0 0
    %2221 = vmatprep.subr.bf16.mxu0 0
    %2222 = vmatpush1.bf16.msra.mxu0 0
    %2223 = vmatprep.subr.bf16.mxu0 0
    %2224 = vmatpush1.bf16.msra.mxu0 0
    %2225 = vmatprep.subr.bf16.mxu0 0
    %2226 = vmatpush1.bf16.msra.mxu0 0
    %2227 = vmatprep.mubr.bf16.mxu0 0
    %2228 = vmatmul.mubr.bf16.gmra.mrb[0].mxu0 %v2113
    %v2229 = vpop.f32.mrb[0].mxu0
    %v2230 = vadd.f32 %v2032, %v2229
    %v2231 = vpop.f32.mrb[0].mxu0
    %v2232 = vadd.f32 %v2036, %v2231
    %v2233 = vpop.f32.mrb[0].mxu0
    %v2234 = vadd.f32 %v2032, %v2233
    %v2235 = vpop.f32.mrb[0].mxu0
    %v2236 = vadd.f32 %v2036, %v2235
    %2237 = vdwg.mxu0
    %2238 = vmatprep.subr.bf16.mxu0 %v2132
    %2239 = vmatpush1.bf16.msra.mxu0 %v2129
    %2240 = vmatprep.subr.bf16.mxu0 0
    %2241 = vmatpush1.bf16.msra.mxu0 0
    %2242 = vmatprep.subr.bf16.mxu0 0
    %2243 = vmatpush1.bf16.msra.mxu0 0
    %2244 = vmatprep.subr.bf16.mxu0 0
    %2245 = vmatpush1.bf16.msra.mxu0 0
    %2246 = vmatprep.subr.bf16.mxu0 0
    %2247 = vmatpush1.bf16.msra.mxu0 0
    %2248 = vmatprep.subr.bf16.mxu0 0
    %2249 = vmatpush1.bf16.msra.mxu0 0
    %2250 = vmatprep.subr.bf16.mxu0 0
    %2251 = vmatpush1.bf16.msra.mxu0 0
    %2252 = vmatprep.subr.bf16.mxu0 0
    %2253 = vmatpush1.bf16.msra.mxu0 0
    %2254 = vmatprep.subr.bf16.mxu0 0
    %2255 = vmatpush1.bf16.msra.mxu0 0
    %2256 = vmatprep.subr.bf16.mxu0 0
    %2257 = vmatpush1.bf16.msra.mxu0 0
    %2258 = vmatprep.subr.bf16.mxu0 0
    %2259 = vmatpush1.bf16.msra.mxu0 0
    %2260 = vmatprep.subr.bf16.mxu0 0
    %2261 = vmatpush1.bf16.msra.mxu0 0
    %2262 = vmatprep.subr.bf16.mxu0 0
    %2263 = vmatpush1.bf16.msra.mxu0 0
    %2264 = vmatprep.subr.bf16.mxu0 0
    %2265 = vmatpush1.bf16.msra.mxu0 0
    %2266 = vmatprep.subr.bf16.mxu0 0
    %2267 = vmatpush1.bf16.msra.mxu0 0
    %2268 = vmatprep.subr.bf16.mxu0 0
    %2269 = vmatpush1.bf16.msra.mxu0 0
    %2270 = vmatprep.mubr.bf16.mxu0 0
    %2271 = vmatmul.mubr.bf16.gmra.mrb[0].mxu0 %v2113
    %v2272 = vpop.f32.mrb[0].mxu0
    %v2273 = vadd.f32 %v2040, %v2272
    %v2274 = vpop.f32.mrb[0].mxu0
    %v2275 = vadd.f32 %v2044, %v2274
    %v2276 = vpop.f32.mrb[0].mxu0
    %v2277 = vadd.f32 %v2040, %v2276
    %v2278 = vpop.f32.mrb[0].mxu0
    %v2279 = vadd.f32 %v2044, %v2278
    %2280 = vdwg.mxu0
    %2281 = vmatprep.subr.bf16.mxu0 %v2138
    %2282 = vmatpush1.bf16.msra.mxu0 %v2135
    %2283 = vmatprep.subr.bf16.mxu0 0
    %2284 = vmatpush1.bf16.msra.mxu0 0
    %2285 = vmatprep.subr.bf16.mxu0 0
    %2286 = vmatpush1.bf16.msra.mxu0 0
    %2287 = vmatprep.subr.bf16.mxu0 0
    %2288 = vmatpush1.bf16.msra.mxu0 0
    %2289 = vmatprep.subr.bf16.mxu0 0
    %2290 = vmatpush1.bf16.msra.mxu0 0
    %2291 = vmatprep.subr.bf16.mxu0 0
    %2292 = vmatpush1.bf16.msra.mxu0 0
    %2293 = vmatprep.subr.bf16.mxu0 0
    %2294 = vmatpush1.bf16.msra.mxu0 0
    %2295 = vmatprep.subr.bf16.mxu0 0
    %2296 = vmatpush1.bf16.msra.mxu0 0
    %2297 = vmatprep.subr.bf16.mxu0 0
    %2298 = vmatpush1.bf16.msra.mxu0 0
    %2299 = vmatprep.subr.bf16.mxu0 0
    %2300 = vmatpush1.bf16.msra.mxu0 0
    %2301 = vmatprep.subr.bf16.mxu0 0
    %2302 = vmatpush1.bf16.msra.mxu0 0
    %2303 = vmatprep.subr.bf16.mxu0 0
    %2304 = vmatpush1.bf16.msra.mxu0 0
    %2305 = vmatprep.subr.bf16.mxu0 0
    %2306 = vmatpush1.bf16.msra.mxu0 0
    %2307 = vmatprep.subr.bf16.mxu0 0
    %2308 = vmatpush1.bf16.msra.mxu0 0
    %2309 = vmatprep.subr.bf16.mxu0 0
    %2310 = vmatpush1.bf16.msra.mxu0 0
    %2311 = vmatprep.subr.bf16.mxu0 0
    %2312 = vmatpush1.bf16.msra.mxu0 0
    %2313 = vmatprep.mubr.bf16.mxu0 0
    %2314 = vmatmul.mubr.bf16.gmra.mrb[0].mxu0 %v2113
    %v2315 = vpop.f32.mrb[0].mxu0
    %v2316 = vadd.f32 %v2048, %v2315
    %v2317 = vpop.f32.mrb[0].mxu0
    %v2318 = vadd.f32 %v2052, %v2317
    %v2319 = vpop.f32.mrb[0].mxu0
    %v2320 = vadd.f32 %v2048, %v2319
    %v2321 = vpop.f32.mrb[0].mxu0
    %v2322 = vadd.f32 %v2052, %v2321
    %2323 = vdwg.mxu0
    %2324 = vmatprep.subr.bf16.mxu0 %v2144
    %2325 = vmatpush1.bf16.msra.mxu0 %v2141
    %2326 = vmatprep.subr.bf16.mxu0 0
    %2327 = vmatpush1.bf16.msra.mxu0 0
    %2328 = vmatprep.subr.bf16.mxu0 0
    %2329 = vmatpush1.bf16.msra.mxu0 0
    %2330 = vmatprep.subr.bf16.mxu0 0
    %2331 = vmatpush1.bf16.msra.mxu0 0
    %2332 = vmatprep.subr.bf16.mxu0 0
    %2333 = vmatpush1.bf16.msra.mxu0 0
    %2334 = vmatprep.subr.bf16.mxu0 0
    %2335 = vmatpush1.bf16.msra.mxu0 0
    %2336 = vmatprep.subr.bf16.mxu0 0
    %2337 = vmatpush1.bf16.msra.mxu0 0
    %2338 = vmatprep.subr.bf16.mxu0 0
    %2339 = vmatpush1.bf16.msra.mxu0 0
    %2340 = vmatprep.subr.bf16.mxu0 0
    %2341 = vmatpush1.bf16.msra.mxu0 0
    %2342 = vmatprep.subr.bf16.mxu0 0
    %2343 = vmatpush1.bf16.msra.mxu0 0
    %2344 = vmatprep.subr.bf16.mxu0 0
    %2345 = vmatpush1.bf16.msra.mxu0 0
    %2346 = vmatprep.subr.bf16.mxu0 0
    %2347 = vmatpush1.bf16.msra.mxu0 0
    %2348 = vmatprep.subr.bf16.mxu0 0
    %2349 = vmatpush1.bf16.msra.mxu0 0
    %2350 = vmatprep.subr.bf16.mxu0 0
    %2351 = vmatpush1.bf16.msra.mxu0 0
    %2352 = vmatprep.subr.bf16.mxu0 0
    %2353 = vmatpush1.bf16.msra.mxu0 0
    %2354 = vmatprep.subr.bf16.mxu0 0
    %2355 = vmatpush1.bf16.msra.mxu0 0
    %2356 = vmatprep.mubr.bf16.mxu0 0
    %2357 = vmatmul.mubr.bf16.gmra.mrb[0].mxu0 %v2113
    %v2358 = vpop.f32.mrb[0].mxu0
    %v2359 = vadd.f32 %v2056, %v2358
    %v2360 = vpop.f32.mrb[0].mxu0
    %v2361 = vadd.f32 %v2060, %v2360
    %v2362 = vpop.f32.mrb[0].mxu0
    %v2363 = vadd.f32 %v2056, %v2362
    %v2364 = vpop.f32.mrb[0].mxu0
    %v2365 = vadd.f32 %v2060, %v2364
    %2366 = vdwg.mxu0
    %2367 = vmatprep.subr.bf16.mxu0 %v2150
    %2368 = vmatpush1.bf16.msra.mxu0 %v2147
    %2369 = vmatprep.subr.bf16.mxu0 0
    %2370 = vmatpush1.bf16.msra.mxu0 0
    %2371 = vmatprep.subr.bf16.mxu0 0
    %2372 = vmatpush1.bf16.msra.mxu0 0
    %2373 = vmatprep.subr.bf16.mxu0 0
    %2374 = vmatpush1.bf16.msra.mxu0 0
    %2375 = vmatprep.subr.bf16.mxu0 0
    %2376 = vmatpush1.bf16.msra.mxu0 0
    %2377 = vmatprep.subr.bf16.mxu0 0
    %2378 = vmatpush1.bf16.msra.mxu0 0
    %2379 = vmatprep.subr.bf16.mxu0 0
    %2380 = vmatpush1.bf16.msra.mxu0 0
    %2381 = vmatprep.subr.bf16.mxu0 0
    %2382 = vmatpush1.bf16.msra.mxu0 0
    %2383 = vmatprep.subr.bf16.mxu0 0
    %2384 = vmatpush1.bf16.msra.mxu0 0
    %2385 = vmatprep.subr.bf16.mxu0 0
    %2386 = vmatpush1.bf16.msra.mxu0 0
    %2387 = vmatprep.subr.bf16.mxu0 0
    %2388 = vmatpush1.bf16.msra.mxu0 0
    %2389 = vmatprep.subr.bf16.mxu0 0
    %2390 = vmatpush1.bf16.msra.mxu0 0
    %2391 = vmatprep.subr.bf16.mxu0 0
    %2392 = vmatpush1.bf16.msra.mxu0 0
    %2393 = vmatprep.subr.bf16.mxu0 0
    %2394 = vmatpush1.bf16.msra.mxu0 0
    %2395 = vmatprep.subr.bf16.mxu0 0
    %2396 = vmatpush1.bf16.msra.mxu0 0
    %2397 = vmatprep.subr.bf16.mxu0 0
    %2398 = vmatpush1.bf16.msra.mxu0 0
    %2399 = vmatprep.mubr.bf16.mxu0 0
    %2400 = vmatmul.mubr.bf16.gmra.mrb[0].mxu0 %v2113
    %v2401 = vpop.f32.mrb[0].mxu0
    %v2402 = vadd.f32 %v2064, %v2401
    %v2403 = vpop.f32.mrb[0].mxu0
    %v2404 = vadd.f32 %v2068, %v2403
    %v2405 = vpop.f32.mrb[0].mxu0
    %v2406 = vadd.f32 %v2064, %v2405
    %v2407 = vpop.f32.mrb[0].mxu0
    %v2408 = vadd.f32 %v2068, %v2407
    %2409 = vdwg.mxu0
    %vm2410 = vcmp.gt.f32.partialorder %v778, 0.5
    %vm2411 = vcmp.gt.f32.partialorder %v780, 0.5
    %v2412 = vsel %vm2410, 1, 0
    %v2413 = vsel %vm2411, 1, 0
    %v2414 = vcvt.s32.f32 %v2412
    %v2415 = vcvt.s32.f32 %v2413
    %v2416 = vld [vmem:[#allocation20] sm:$0x7]
    %2418 = vset.pattern.permute.xlu0 0
    %2419 = vperm.xlu0 %2418, %v2414
    %v2420 = vpop.permute.xlu0 %2419
    %2423 = vset.pattern.permute.xlu0 0
    %2424 = vperm.xlu0 %2423, %v2415
    %v2425 = vpop.permute.xlu0 %2424
    %v2428 = vlaneseq
    %v2429 = vshrl.u32 %v2428, 7
    %v2430 = vsub.s32 0, %v2429
    %v2431 = vrot.slane %v2416, %v2430
    %v2432 = vlaneseq
    %v2433 = vshrl.u32 %v2432, 7
    %v2434 = vsub.s32 1, %v2433
    %v2435 = vrot.slane %v2416, %v2434
    %v2436 = vlaneseq
    %v2437 = vshrl.u32 %v2436, 7
    %v2438 = vsub.s32 2, %v2437
    %v2439 = vrot.slane %v2416, %v2438
    %v2443 = vmul.f32 %v2420, %v2431
    %v2444 = vmul.f32 %v2420, %v2435
    %v2445 = vmul.f32 %v2420, %v2439
    %v2446 = vmul.f32 %v2425, %v2431
    %v2447 = vmul.f32 %v2425, %v2435
    %v2448 = vmul.f32 %v2425, %v2439
    %v2449 = vadd.f32 %v2187, %v2443
    %v2450 = vadd.f32 %v2189, %v2444
    %v2451 = vadd.f32 %v2230, %v2445
    %v2452 = vadd.f32 %v2191, %v2446
    %v2453 = vadd.f32 %v2193, %v2447
    %v2454 = vadd.f32 %v2234, %v2448
    %v2455 = vxor.u32 %v2449, 2147483648
    %v2456 = vxor.u32 %v2452, 2147483648
    %v2457 = vmul.f32 %v2455, 1.442695
    %v2458 = vpow.pop %v2457
    %v2459 = vmul.f32 %v2456, 1.442695
    %v2460 = vpow.pop %v2459
    %v2461 = vadd.f32 %v2458, 1.0
    %v2462 = vadd.f32 %v2460, 1.0
    %v2463 = vrcp.pop %v2461
    %v2464 = vmul.f32 1.0, %v2463
    %v2465 = vrcp.pop %v2462
    %v2466 = vmul.f32 1.0, %v2465
    %v2467 = vxor.u32 %v2450, 2147483648
    %v2468 = vxor.u32 %v2453, 2147483648
    %v2469 = vmul.f32 %v2467, 1.442695
    %v2470 = vpow.pop %v2469
    %v2471 = vmul.f32 %v2468, 1.442695
    %v2472 = vpow.pop %v2471
    %v2473 = vadd.f32 %v2470, 1.0
    %v2474 = vadd.f32 %v2472, 1.0
    %v2475 = vrcp.pop %v2473
    %v2476 = vmul.f32 1.0, %v2475
    %v2477 = vrcp.pop %v2474
    %v2478 = vmul.f32 1.0, %v2477
    %v2479 = vld [vmem:[#allocation21] sm:$0x1]
    %v2481 = vlaneseq
    %v2482 = vshrl.u32 %v2481, 7
    %v2483 = vsub.s32 0, %v2482
    %v2484 = vrot.slane %v2479, %v2483
    %v2486 = vmul.f32 %v2464, %v2484
    %v2487 = vmul.f32 %v2466, %v2484
    %v2488 = vadd.f32 %v2451, %v2486
    %v2489 = vadd.f32 %v2454, %v2487
    %v2490 = vtanh.pop %v2488
    %v2491 = vtanh.pop %v2489
    %v2492 = vsub.f32 1.0, %v2476
    %v2493 = vsub.f32 1.0, %v2478
    %v2494 = vmul.f32 %v2492, %v2490
    %v2495 = vmul.f32 %v2493, %v2491
    %v2496 = vmul.f32 %v231, 1.0025032
    %v2497 = vmul.f32 %v241, 1.0025032
    %v2498 = vadd.f32 %v2494, %v2496
    %v2499 = vadd.f32 %v2495, %v2497
    %vm2500 = vcmp.gt.f32.partialorder %v1110, 0.5
    %vm2501 = vcmp.gt.f32.partialorder %v1112, 0.5
    %v2502 = vsel %vm2500, 1, 0
    %v2503 = vsel %vm2501, 1, 0
    %v2504 = vcvt.s32.f32 %v2502
    %v2505 = vcvt.s32.f32 %v2503
    %s2506 = scalar_lea.vmem [#allocation20], 3
    %v2507 = vld [vmem:[%s2506] sm:$0x7]
    %2509 = vset.pattern.permute.xlu0 0
    %2510 = vperm.xlu0 %2509, %v2504
    %v2511 = vpop.permute.xlu0 %2510
    %2514 = vset.pattern.permute.xlu0 0
    %2515 = vperm.xlu0 %2514, %v2505
    %v2516 = vpop.permute.xlu0 %2515
    %v2519 = vlaneseq
    %v2520 = vshrl.u32 %v2519, 7
    %v2521 = vsub.s32 0, %v2520
    %v2522 = vrot.slane %v2507, %v2521
    %v2523 = vlaneseq
    %v2524 = vshrl.u32 %v2523, 7
    %v2525 = vsub.s32 1, %v2524
    %v2526 = vrot.slane %v2507, %v2525
    %v2527 = vlaneseq
    %v2528 = vshrl.u32 %v2527, 7
    %v2529 = vsub.s32 2, %v2528
    %v2530 = vrot.slane %v2507, %v2529
    %v2534 = vmul.f32 %v2511, %v2522
    %v2535 = vmul.f32 %v2511, %v2526
    %v2536 = vmul.f32 %v2511, %v2530
    %v2537 = vmul.f32 %v2516, %v2522
    %v2538 = vmul.f32 %v2516, %v2526
    %v2539 = vmul.f32 %v2516, %v2530
    %v2540 = vadd.f32 %v2232, %v2534
    %v2541 = vadd.f32 %v2273, %v2535
    %v2542 = vadd.f32 %v2275, %v2536
    %v2543 = vadd.f32 %v2236, %v2537
    %v2544 = vadd.f32 %v2277, %v2538
    %v2545 = vadd.f32 %v2279, %v2539
    %v2546 = vpack.c.bf16 %v2499, %v2498
    %v2547 = vld [vmem:[%s16] sm:$0xff]
    %v2548 = vld [vmem:[%s16 + $0x8] sm:$0xf]
    %v2549 = vld [vmem:[%s16 + $0xc] sm:$0xff]
    %v2550 = vld [vmem:[%s16 + $0x14] sm:$0xf]
    %v2551 = vld [vmem:[%s16 + $0x18] sm:$0xff]
    %v2552 = vld [vmem:[%s16 + $0x20] sm:$0xf]
    %v2553 = vld [vmem:[%s16 + $0x24] sm:$0xff]
    %v2554 = vld [vmem:[%s16 + $0x2c] sm:$0xf]
    %v2555 = vld [vmem:[%s17] sm:$0x7]
    %v2557 = vlaneseq
    %v2558 = vshrl.u32 %v2557, 7
    %v2559 = vsub.s32 0, %v2558
    %v2560 = vrot.slane %v2555, %v2559
    %v2561 = vlaneseq
    %v2562 = vshrl.u32 %v2561, 7
    %v2563 = vsub.s32 1, %v2562
    %v2564 = vrot.slane %v2555, %v2563
    %v2565 = vlaneseq
    %v2566 = vshrl.u32 %v2565, 7
    %v2567 = vsub.s32 2, %v2566
    %v2568 = vrot.slane %v2555, %v2567
    %v2580 = vunpack.c.l.b16 %v2547
    %v2581 = vunpack.c.h.b16 %v2547
    %v2582 = vunpack.c.l.b16 %v2548
    %v2583 = vunpack.c.l.b16 %v2549
    %v2584 = vunpack.c.h.b16 %v2549
    %v2585 = vunpack.c.l.b16 %v2550
    %v2586 = vunpack.c.l.b16 %v2551
    %v2587 = vunpack.c.h.b16 %v2551
    %v2588 = vunpack.c.l.b16 %v2552
    %v2589 = vunpack.c.l.b16 %v2553
    %v2590 = vunpack.c.h.b16 %v2553
    %v2591 = vunpack.c.l.b16 %v2554
    %v2592 = vpack.c.b16 %v2583, %v2580
    %v2593 = vpack.c.b16 %v2584, %v2581
    %v2594 = vpack.c.b16 %v2585, %v2582
    %v2595 = vpack.c.b16 %v2589, %v2586
    %v2596 = vpack.c.b16 %v2590, %v2587
    %v2597 = vpack.c.b16 %v2591, %v2588
    %v2605 = vsel %vm724, %v2546, 0
    %2607 = vmatprep.subr.bf16.mxu0 %v2593
    %2608 = vmatpush1.bf16.msra.mxu0 %v2592
    %2609 = vmatprep.subr.bf16.mxu0 %v2596
    %2610 = vmatpush1.bf16.msra.mxu0 %v2595
    %2611 = vmatprep.subr.bf16.mxu0 0
    %2612 = vmatpush1.bf16.msra.mxu0 0
    %2613 = vmatprep.subr.bf16.mxu0 0
    %2614 = vmatpush1.bf16.msra.mxu0 0
    %2615 = vmatprep.subr.bf16.mxu0 0
    %2616 = vmatpush1.bf16.msra.mxu0 0
    %2617 = vmatprep.subr.bf16.mxu0 0
    %2618 = vmatpush1.bf16.msra.mxu0 0
    %2619 = vmatprep.subr.bf16.mxu0 0
    %2620 = vmatpush1.bf16.msra.mxu0 0
    %2621 = vmatprep.subr.bf16.mxu0 0
    %2622 = vmatpush1.bf16.msra.mxu0 0
    %2623 = vmatprep.subr.bf16.mxu0 0
    %2624 = vmatpush1.bf16.msra.mxu0 0
    %2625 = vmatprep.subr.bf16.mxu0 0
    %2626 = vmatpush1.bf16.msra.mxu0 0
    %2627 = vmatprep.subr.bf16.mxu0 0
    %2628 = vmatpush1.bf16.msra.mxu0 0
    %2629 = vmatprep.subr.bf16.mxu0 0
    %2630 = vmatpush1.bf16.msra.mxu0 0
    %2631 = vmatprep.subr.bf16.mxu0 0
    %2632 = vmatpush1.bf16.msra.mxu0 0
    %2633 = vmatprep.subr.bf16.mxu0 0
    %2634 = vmatpush1.bf16.msra.mxu0 0
    %2635 = vmatprep.subr.bf16.mxu0 0
    %2636 = vmatpush1.bf16.msra.mxu0 0
    %2637 = vmatprep.subr.bf16.mxu0 0
    %2638 = vmatpush1.bf16.msra.mxu0 0
    %2639 = vmatprep.mubr.bf16.mxu0 0
    %2640 = vmatmul.mubr.bf16.gmra.mrb[0].mxu0 %v2605
    %v2641 = vpop.f32.mrb[0].mxu0
    %v2642 = vadd.f32 %v2560, %v2641
    %v2643 = vpop.f32.mrb[0].mxu0
    %v2644 = vadd.f32 %v2564, %v2643
    %v2645 = vpop.f32.mrb[0].mxu0
    %v2646 = vadd.f32 %v2560, %v2645
    %v2647 = vpop.f32.mrb[0].mxu0
    %v2648 = vadd.f32 %v2564, %v2647
    %2649 = vdwg.mxu0
    %2650 = vmatprep.subr.bf16.mxu0 0
    %2651 = vmatpush1.bf16.msra.mxu0 %v2594
    %2652 = vmatprep.subr.bf16.mxu0 0
    %2653 = vmatpush1.bf16.msra.mxu0 %v2597
    %2654 = vmatprep.subr.bf16.mxu0 0
    %2655 = vmatpush1.bf16.msra.mxu0 0
    %2656 = vmatprep.subr.bf16.mxu0 0
    %2657 = vmatpush1.bf16.msra.mxu0 0
    %2658 = vmatprep.subr.bf16.mxu0 0
    %2659 = vmatpush1.bf16.msra.mxu0 0
    %2660 = vmatprep.subr.bf16.mxu0 0
    %2661 = vmatpush1.bf16.msra.mxu0 0
    %2662 = vmatprep.subr.bf16.mxu0 0
    %2663 = vmatpush1.bf16.msra.mxu0 0
    %2664 = vmatprep.subr.bf16.mxu0 0
    %2665 = vmatpush1.bf16.msra.mxu0 0
    %2666 = vmatprep.subr.bf16.mxu0 0
    %2667 = vmatpush1.bf16.msra.mxu0 0
    %2668 = vmatprep.subr.bf16.mxu0 0
    %2669 = vmatpush1.bf16.msra.mxu0 0
    %2670 = vmatprep.subr.bf16.mxu0 0
    %2671 = vmatpush1.bf16.msra.mxu0 0
    %2672 = vmatprep.subr.bf16.mxu0 0
    %2673 = vmatpush1.bf16.msra.mxu0 0
    %2674 = vmatprep.subr.bf16.mxu0 0
    %2675 = vmatpush1.bf16.msra.mxu0 0
    %2676 = vmatprep.subr.bf16.mxu0 0
    %2677 = vmatpush1.bf16.msra.mxu0 0
    %2678 = vmatprep.subr.bf16.mxu0 0
    %2679 = vmatpush1.bf16.msra.mxu0 0
    %2680 = vmatprep.subr.bf16.mxu0 0
    %2681 = vmatpush1.bf16.msra.mxu0 0
    %2682 = vmatprep.mubr.bf16.mxu0 0
    %2683 = vmatmul.mubr.bf16.gmra.mrb[0].mxu0 %v2605
    %v2684 = vpop.f32.mrb[0].mxu0
    %v2685 = vadd.f32 %v2568, %v2684
    %v2686 = vpop.f32.mrb[0].mxu0
    %v2687 = vpop.f32.mrb[0].mxu0
    %v2688 = vadd.f32 %v2568, %v2687
    %v2689 = vpop.f32.mrb[0].mxu0
    %2690 = vdwg.mxu0
    %v2691 = vadd.f32 %v2540, %v2642
    %v2692 = vadd.f32 %v2543, %v2646
    %v2693 = vxor.u32 %v2691, 2147483648
    %v2694 = vxor.u32 %v2692, 2147483648
    %v2695 = vmul.f32 %v2693, 1.442695
    %v2696 = vpow.pop %v2695
    %v2697 = vmul.f32 %v2694, 1.442695
    %v2698 = vpow.pop %v2697
    %v2699 = vadd.f32 %v2696, 1.0
    %v2700 = vadd.f32 %v2698, 1.0
    %v2701 = vrcp.pop %v2699
    %v2702 = vmul.f32 1.0, %v2701
    %v2703 = vrcp.pop %v2700
    %v2704 = vmul.f32 1.0, %v2703
    %v2705 = vadd.f32 %v2541, %v2644
    %v2706 = vadd.f32 %v2544, %v2648
    %v2707 = vxor.u32 %v2705, 2147483648
    %v2708 = vxor.u32 %v2706, 2147483648
    %v2709 = vmul.f32 %v2707, 1.442695
    %v2710 = vpow.pop %v2709
    %v2711 = vmul.f32 %v2708, 1.442695
    %v2712 = vpow.pop %v2711
    %v2713 = vadd.f32 %v2710, 1.0
    %v2714 = vadd.f32 %v2712, 1.0
    %v2715 = vrcp.pop %v2713
    %v2716 = vmul.f32 1.0, %v2715
    %v2717 = vrcp.pop %v2714
    %v2718 = vmul.f32 1.0, %v2717
    %v2719 = vmul.f32 %v2702, %v2685
    %v2720 = vmul.f32 %v2704, %v2688
    %v2721 = vadd.f32 %v2542, %v2719
    %v2722 = vadd.f32 %v2545, %v2720
    %v2723 = vtanh.pop %v2721
    %v2724 = vtanh.pop %v2722
    %v2725 = vsub.f32 1.0, %v2716
    %v2726 = vsub.f32 1.0, %v2718
    %v2727 = vmul.f32 %v2725, %v2723
    %v2728 = vmul.f32 %v2726, %v2724
    %v2729 = vmul.f32 %v2716, %v2498
    %v2730 = vmul.f32 %v2718, %v2499
    %v2731 = vadd.f32 %v2727, %v2729
    %v2732 = vadd.f32 %v2728, %v2730
    %v2733 = vmul.f32 %v232, 1.0025032
    %v2734 = vmul.f32 %v242, 1.0025032
    %v2735 = vadd.f32 %v2731, %v2733
    %v2736 = vadd.f32 %v2732, %v2734
    %vm2737 = vcmp.gt.f32.partialorder %v1448, 0.5
    %vm2738 = vcmp.gt.f32.partialorder %v1450, 0.5
    %v2739 = vsel %vm2737, 1, 0
    %v2740 = vsel %vm2738, 1, 0
    %v2741 = vcvt.s32.f32 %v2739
    %v2742 = vcvt.s32.f32 %v2740
    %s2743 = scalar_lea.vmem [#allocation20], 6
    %v2744 = vld [vmem:[%s2743] sm:$0x7]
    %2746 = vset.pattern.permute.xlu0 0
    %2747 = vperm.xlu0 %2746, %v2741
    %v2748 = vpop.permute.xlu0 %2747
    %2751 = vset.pattern.permute.xlu0 0
    %2752 = vperm.xlu0 %2751, %v2742
    %v2753 = vpop.permute.xlu0 %2752
    %v2756 = vlaneseq
    %v2757 = vshrl.u32 %v2756, 7
    %v2758 = vsub.s32 0, %v2757
    %v2759 = vrot.slane %v2744, %v2758
    %v2760 = vlaneseq
    %v2761 = vshrl.u32 %v2760, 7
    %v2762 = vsub.s32 1, %v2761
    %v2763 = vrot.slane %v2744, %v2762
    %v2764 = vlaneseq
    %v2765 = vshrl.u32 %v2764, 7
    %v2766 = vsub.s32 2, %v2765
    %v2767 = vrot.slane %v2744, %v2766
    %v2771 = vmul.f32 %v2748, %v2759
    %v2772 = vmul.f32 %v2748, %v2763
    %v2773 = vmul.f32 %v2748, %v2767
    %v2774 = vmul.f32 %v2753, %v2759
    %v2775 = vmul.f32 %v2753, %v2763
    %v2776 = vmul.f32 %v2753, %v2767
    %v2777 = vadd.f32 %v2316, %v2771
    %v2778 = vadd.f32 %v2318, %v2772
    %v2779 = vadd.f32 %v2359, %v2773
    %v2780 = vadd.f32 %v2320, %v2774
    %v2781 = vadd.f32 %v2322, %v2775
    %v2782 = vadd.f32 %v2363, %v2776
    %v2783 = vpack.c.bf16 %v2736, %v2735
    %s2784 = scalar_lea.vmem %s16, 48
    %v2785 = vld [vmem:[%s2784] sm:$0xff]
    %v2786 = vld [vmem:[%s2784 + $0x8] sm:$0xf]
    %v2787 = vld [vmem:[%s2784 + $0xc] sm:$0xff]
    %v2788 = vld [vmem:[%s2784 + $0x14] sm:$0xf]
    %v2789 = vld [vmem:[%s2784 + $0x18] sm:$0xff]
    %v2790 = vld [vmem:[%s2784 + $0x20] sm:$0xf]
    %v2791 = vld [vmem:[%s2784 + $0x24] sm:$0xff]
    %v2792 = vld [vmem:[%s2784 + $0x2c] sm:$0xf]
    %s2793 = scalar_lea.vmem %s17, 3
    %v2794 = vld [vmem:[%s2793] sm:$0x7]
    %v2796 = vlaneseq
    %v2797 = vshrl.u32 %v2796, 7
    %v2798 = vsub.s32 0, %v2797
    %v2799 = vrot.slane %v2794, %v2798
    %v2800 = vlaneseq
    %v2801 = vshrl.u32 %v2800, 7
    %v2802 = vsub.s32 1, %v2801
    %v2803 = vrot.slane %v2794, %v2802
    %v2804 = vlaneseq
    %v2805 = vshrl.u32 %v2804, 7
    %v2806 = vsub.s32 2, %v2805
    %v2807 = vrot.slane %v2794, %v2806
    %v2819 = vunpack.c.l.b16 %v2785
    %v2820 = vunpack.c.h.b16 %v2785
    %v2821 = vunpack.c.l.b16 %v2786
    %v2822 = vunpack.c.l.b16 %v2787
    %v2823 = vunpack.c.h.b16 %v2787
    %v2824 = vunpack.c.l.b16 %v2788
    %v2825 = vunpack.c.l.b16 %v2789
    %v2826 = vunpack.c.h.b16 %v2789
    %v2827 = vunpack.c.l.b16 %v2790
    %v2828 = vunpack.c.l.b16 %v2791
    %v2829 = vunpack.c.h.b16 %v2791
    %v2830 = vunpack.c.l.b16 %v2792
    %v2831 = vpack.c.b16 %v2822, %v2819
    %v2832 = vpack.c.b16 %v2823, %v2820
    %v2833 = vpack.c.b16 %v2824, %v2821
    %v2834 = vpack.c.b16 %v2828, %v2825
    %v2835 = vpack.c.b16 %v2829, %v2826
    %v2836 = vpack.c.b16 %v2830, %v2827
    %v2844 = vsel %vm724, %v2783, 0
    %2846 = vmatprep.subr.bf16.mxu0 %v2832
    %2847 = vmatpush1.bf16.msra.mxu0 %v2831
    %2848 = vmatprep.subr.bf16.mxu0 %v2835
    %2849 = vmatpush1.bf16.msra.mxu0 %v2834
    %2850 = vmatprep.subr.bf16.mxu0 0
    %2851 = vmatpush1.bf16.msra.mxu0 0
    %2852 = vmatprep.subr.bf16.mxu0 0
    %2853 = vmatpush1.bf16.msra.mxu0 0
    %2854 = vmatprep.subr.bf16.mxu0 0
    %2855 = vmatpush1.bf16.msra.mxu0 0
    %2856 = vmatprep.subr.bf16.mxu0 0
    %2857 = vmatpush1.bf16.msra.mxu0 0
    %2858 = vmatprep.subr.bf16.mxu0 0
    %2859 = vmatpush1.bf16.msra.mxu0 0
    %2860 = vmatprep.subr.bf16.mxu0 0
    %2861 = vmatpush1.bf16.msra.mxu0 0
    %2862 = vmatprep.subr.bf16.mxu0 0
    %2863 = vmatpush1.bf16.msra.mxu0 0
    %2864 = vmatprep.subr.bf16.mxu0 0
    %2865 = vmatpush1.bf16.msra.mxu0 0
    %2866 = vmatprep.subr.bf16.mxu0 0
    %2867 = vmatpush1.bf16.msra.mxu0 0
    %2868 = vmatprep.subr.bf16.mxu0 0
    %2869 = vmatpush1.bf16.msra.mxu0 0
    %2870 = vmatprep.subr.bf16.mxu0 0
    %2871 = vmatpush1.bf16.msra.mxu0 0
    %2872 = vmatprep.subr.bf16.mxu0 0
    %2873 = vmatpush1.bf16.msra.mxu0 0
    %2874 = vmatprep.subr.bf16.mxu0 0
    %2875 = vmatpush1.bf16.msra.mxu0 0
    %2876 = vmatprep.subr.bf16.mxu0 0
    %2877 = vmatpush1.bf16.msra.mxu0 0
    %2878 = vmatprep.mubr.bf16.mxu0 0
    %2879 = vmatmul.mubr.bf16.gmra.mrb[0].mxu0 %v2844
    %v2880 = vpop.f32.mrb[0].mxu0
    %v2881 = vadd.f32 %v2799, %v2880
    %v2882 = vpop.f32.mrb[0].mxu0
    %v2883 = vadd.f32 %v2803, %v2882
    %v2884 = vpop.f32.mrb[0].mxu0
    %v2885 = vadd.f32 %v2799, %v2884
    %v2886 = vpop.f32.mrb[0].mxu0
    %v2887 = vadd.f32 %v2803, %v2886
    %2888 = vdwg.mxu0
    %2889 = vmatprep.subr.bf16.mxu0 0
    %2890 = vmatpush1.bf16.msra.mxu0 %v2833
    %2891 = vmatprep.subr.bf16.mxu0 0
    %2892 = vmatpush1.bf16.msra.mxu0 %v2836
    %2893 = vmatprep.subr.bf16.mxu0 0
    %2894 = vmatpush1.bf16.msra.mxu0 0
    %2895 = vmatprep.subr.bf16.mxu0 0
    %2896 = vmatpush1.bf16.msra.mxu0 0
    %2897 = vmatprep.subr.bf16.mxu0 0
    %2898 = vmatpush1.bf16.msra.mxu0 0
    %2899 = vmatprep.subr.bf16.mxu0 0
    %2900 = vmatpush1.bf16.msra.mxu0 0
    %2901 = vmatprep.subr.bf16.mxu0 0
    %2902 = vmatpush1.bf16.msra.mxu0 0
    %2903 = vmatprep.subr.bf16.mxu0 0
    %2904 = vmatpush1.bf16.msra.mxu0 0
    %2905 = vmatprep.subr.bf16.mxu0 0
    %2906 = vmatpush1.bf16.msra.mxu0 0
    %2907 = vmatprep.subr.bf16.mxu0 0
    %2908 = vmatpush1.bf16.msra.mxu0 0
    %2909 = vmatprep.subr.bf16.mxu0 0
    %2910 = vmatpush1.bf16.msra.mxu0 0
    %2911 = vmatprep.subr.bf16.mxu0 0
    %2912 = vmatpush1.bf16.msra.mxu0 0
    %2913 = vmatprep.subr.bf16.mxu0 0
    %2914 = vmatpush1.bf16.msra.mxu0 0
    %2915 = vmatprep.subr.bf16.mxu0 0
    %2916 = vmatpush1.bf16.msra.mxu0 0
    %2917 = vmatprep.subr.bf16.mxu0 0
    %2918 = vmatpush1.bf16.msra.mxu0 0
    %2919 = vmatprep.subr.bf16.mxu0 0
    %2920 = vmatpush1.bf16.msra.mxu0 0
    %2921 = vmatprep.mubr.bf16.mxu0 0
    %2922 = vmatmul.mubr.bf16.gmra.mrb[0].mxu0 %v2844
    %v2923 = vpop.f32.mrb[0].mxu0
    %v2924 = vadd.f32 %v2807, %v2923
    %v2925 = vpop.f32.mrb[0].mxu0
    %v2926 = vpop.f32.mrb[0].mxu0
    %v2927 = vadd.f32 %v2807, %v2926
    %v2928 = vpop.f32.mrb[0].mxu0
    %2929 = vdwg.mxu0
    %v2930 = vadd.f32 %v2777, %v2881
    %v2931 = vadd.f32 %v2780, %v2885
    %v2932 = vxor.u32 %v2930, 2147483648
    %v2933 = vxor.u32 %v2931, 2147483648
    %v2934 = vmul.f32 %v2932, 1.442695
    %v2935 = vpow.pop %v2934
    %v2936 = vmul.f32 %v2933, 1.442695
    %v2937 = vpow.pop %v2936
    %v2938 = vadd.f32 %v2935, 1.0
    %v2939 = vadd.f32 %v2937, 1.0
    %v2940 = vrcp.pop %v2938
    %v2941 = vmul.f32 1.0, %v2940
    %v2942 = vrcp.pop %v2939
    %v2943 = vmul.f32 1.0, %v2942
    %v2944 = vadd.f32 %v2778, %v2883
    %v2945 = vadd.f32 %v2781, %v2887
    %v2946 = vxor.u32 %v2944, 2147483648
    %v2947 = vxor.u32 %v2945, 2147483648
    %v2948 = vmul.f32 %v2946, 1.442695
    %v2949 = vpow.pop %v2948
    %v2950 = vmul.f32 %v2947, 1.442695
    %v2951 = vpow.pop %v2950
    %v2952 = vadd.f32 %v2949, 1.0
    %v2953 = vadd.f32 %v2951, 1.0
    %v2954 = vrcp.pop %v2952
    %v2955 = vmul.f32 1.0, %v2954
    %v2956 = vrcp.pop %v2953
    %v2957 = vmul.f32 1.0, %v2956
    %v2958 = vmul.f32 %v2941, %v2924
    %v2959 = vmul.f32 %v2943, %v2927
    %v2960 = vadd.f32 %v2779, %v2958
    %v2961 = vadd.f32 %v2782, %v2959
    %v2962 = vtanh.pop %v2960
    %v2963 = vtanh.pop %v2961
    %v2964 = vsub.f32 1.0, %v2955
    %v2965 = vsub.f32 1.0, %v2957
    %v2966 = vmul.f32 %v2964, %v2962
    %v2967 = vmul.f32 %v2965, %v2963
    %v2968 = vmul.f32 %v2955, %v2735
    %v2969 = vmul.f32 %v2957, %v2736
    %v2970 = vadd.f32 %v2966, %v2968
    %v2971 = vadd.f32 %v2967, %v2969
    %v2972 = vmul.f32 %v233, 1.0025032
    %v2973 = vmul.f32 %v243, 1.0025032
    %v2974 = vadd.f32 %v2970, %v2972
    %v2975 = vadd.f32 %v2971, %v2973
    %vm2976 = vcmp.gt.f32.partialorder %v1786, 0.5
    %vm2977 = vcmp.gt.f32.partialorder %v1788, 0.5
    %v2978 = vsel %vm2976, 1, 0
    %v2979 = vsel %vm2977, 1, 0
    %v2980 = vcvt.s32.f32 %v2978
    %v2981 = vcvt.s32.f32 %v2979
    %s2982 = scalar_lea.vmem [#allocation20], 9
    %v2983 = vld [vmem:[%s2982] sm:$0x7]
    %2985 = vset.pattern.permute.xlu0 0
    %2986 = vperm.xlu0 %2985, %v2980
    %v2987 = vpop.permute.xlu0 %2986
    %2990 = vset.pattern.permute.xlu0 0
    %2991 = vperm.xlu0 %2990, %v2981
    %v2992 = vpop.permute.xlu0 %2991
    %v2995 = vlaneseq
    %v2996 = vshrl.u32 %v2995, 7
    %v2997 = vsub.s32 0, %v2996
    %v2998 = vrot.slane %v2983, %v2997
    %v2999 = vlaneseq
    %v3000 = vshrl.u32 %v2999, 7
    %v3001 = vsub.s32 1, %v3000
    %v3002 = vrot.slane %v2983, %v3001
    %v3003 = vlaneseq
    %v3004 = vshrl.u32 %v3003, 7
    %v3005 = vsub.s32 2, %v3004
    %v3006 = vrot.slane %v2983, %v3005
    %v3010 = vmul.f32 %v2987, %v2998
    %v3011 = vmul.f32 %v2987, %v3002
    %v3012 = vmul.f32 %v2987, %v3006
    %v3013 = vmul.f32 %v2992, %v2998
    %v3014 = vmul.f32 %v2992, %v3002
    %v3015 = vmul.f32 %v2992, %v3006
    %v3016 = vadd.f32 %v2361, %v3010
    %v3017 = vadd.f32 %v2402, %v3011
    %v3018 = vadd.f32 %v2404, %v3012
    %v3019 = vadd.f32 %v2365, %v3013
    %v3020 = vadd.f32 %v2406, %v3014
    %v3021 = vadd.f32 %v2408, %v3015
    %v3022 = vpack.c.bf16 %v2975, %v2974
    %s3023 = scalar_lea.vmem %s16, 96
    %v3024 = vld [vmem:[%s3023] sm:$0xff]
    %v3025 = vld [vmem:[%s3023 + $0x8] sm:$0xf]
    %v3026 = vld [vmem:[%s3023 + $0xc] sm:$0xff]
    %v3027 = vld [vmem:[%s3023 + $0x14] sm:$0xf]
    %v3028 = vld [vmem:[%s3023 + $0x18] sm:$0xff]
    %v3029 = vld [vmem:[%s3023 + $0x20] sm:$0xf]
    %v3030 = vld [vmem:[%s3023 + $0x24] sm:$0xff]
    %v3031 = vld [vmem:[%s3023 + $0x2c] sm:$0xf]
    %s3032 = scalar_lea.vmem %s17, 6
    %v3033 = vld [vmem:[%s3032] sm:$0x7]
    %v3035 = vlaneseq
    %v3036 = vshrl.u32 %v3035, 7
    %v3037 = vsub.s32 0, %v3036
    %v3038 = vrot.slane %v3033, %v3037
    %v3039 = vlaneseq
    %v3040 = vshrl.u32 %v3039, 7
    %v3041 = vsub.s32 1, %v3040
    %v3042 = vrot.slane %v3033, %v3041
    %v3043 = vlaneseq
    %v3044 = vshrl.u32 %v3043, 7
    %v3045 = vsub.s32 2, %v3044
    %v3046 = vrot.slane %v3033, %v3045
    %v3058 = vunpack.c.l.b16 %v3024
    %v3059 = vunpack.c.h.b16 %v3024
    %v3060 = vunpack.c.l.b16 %v3025
    %v3061 = vunpack.c.l.b16 %v3026
    %v3062 = vunpack.c.h.b16 %v3026
    %v3063 = vunpack.c.l.b16 %v3027
    %v3064 = vunpack.c.l.b16 %v3028
    %v3065 = vunpack.c.h.b16 %v3028
    %v3066 = vunpack.c.l.b16 %v3029
    %v3067 = vunpack.c.l.b16 %v3030
    %v3068 = vunpack.c.h.b16 %v3030
    %v3069 = vunpack.c.l.b16 %v3031
    %v3070 = vpack.c.b16 %v3061, %v3058
    %v3071 = vpack.c.b16 %v3062, %v3059
    %v3072 = vpack.c.b16 %v3063, %v3060
    %v3073 = vpack.c.b16 %v3067, %v3064
    %v3074 = vpack.c.b16 %v3068, %v3065
    %v3075 = vpack.c.b16 %v3069, %v3066
    %v3083 = vsel %vm724, %v3022, 0
    %3085 = vmatprep.subr.bf16.mxu0 %v3071
    %3086 = vmatpush1.bf16.msra.mxu0 %v3070
    %3087 = vmatprep.subr.bf16.mxu0 %v3074
    %3088 = vmatpush1.bf16.msra.mxu0 %v3073
    %3089 = vmatprep.subr.bf16.mxu0 0
    %3090 = vmatpush1.bf16.msra.mxu0 0
    %3091 = vmatprep.subr.bf16.mxu0 0
    %3092 = vmatpush1.bf16.msra.mxu0 0
    %3093 = vmatprep.subr.bf16.mxu0 0
    %3094 = vmatpush1.bf16.msra.mxu0 0
    %3095 = vmatprep.subr.bf16.mxu0 0
    %3096 = vmatpush1.bf16.msra.mxu0 0
    %3097 = vmatprep.subr.bf16.mxu0 0
    %3098 = vmatpush1.bf16.msra.mxu0 0
    %3099 = vmatprep.subr.bf16.mxu0 0
    %3100 = vmatpush1.bf16.msra.mxu0 0
    %3101 = vmatprep.subr.bf16.mxu0 0
    %3102 = vmatpush1.bf16.msra.mxu0 0
    %3103 = vmatprep.subr.bf16.mxu0 0
    %3104 = vmatpush1.bf16.msra.mxu0 0
    %3105 = vmatprep.subr.bf16.mxu0 0
    %3106 = vmatpush1.bf16.msra.mxu0 0
    %3107 = vmatprep.subr.bf16.mxu0 0
    %3108 = vmatpush1.bf16.msra.mxu0 0
    %3109 = vmatprep.subr.bf16.mxu0 0
    %3110 = vmatpush1.bf16.msra.mxu0 0
    %3111 = vmatprep.subr.bf16.mxu0 0
    %3112 = vmatpush1.bf16.msra.mxu0 0
    %3113 = vmatprep.subr.bf16.mxu0 0
    %3114 = vmatpush1.bf16.msra.mxu0 0
    %3115 = vmatprep.subr.bf16.mxu0 0
    %3116 = vmatpush1.bf16.msra.mxu0 0
    %3117 = vmatprep.mubr.bf16.mxu0 0
    %3118 = vmatmul.mubr.bf16.gmra.mrb[0].mxu0 %v3083
    %v3119 = vpop.f32.mrb[0].mxu0
    %v3120 = vadd.f32 %v3038, %v3119
    %v3121 = vpop.f32.mrb[0].mxu0
    %v3122 = vadd.f32 %v3042, %v3121
    %v3123 = vpop.f32.mrb[0].mxu0
    %v3124 = vadd.f32 %v3038, %v3123
    %v3125 = vpop.f32.mrb[0].mxu0
    %v3126 = vadd.f32 %v3042, %v3125
    %3127 = vdwg.mxu0
    %3128 = vmatprep.subr.bf16.mxu0 0
    %3129 = vmatpush1.bf16.msra.mxu0 %v3072
    %3130 = vmatprep.subr.bf16.mxu0 0
    %3131 = vmatpush1.bf16.msra.mxu0 %v3075
    %3132 = vmatprep.subr.bf16.mxu0 0
    %3133 = vmatpush1.bf16.msra.mxu0 0
    %3134 = vmatprep.subr.bf16.mxu0 0
    %3135 = vmatpush1.bf16.msra.mxu0 0
    %3136 = vmatprep.subr.bf16.mxu0 0
    %3137 = vmatpush1.bf16.msra.mxu0 0
    %3138 = vmatprep.subr.bf16.mxu0 0
    %3139 = vmatpush1.bf16.msra.mxu0 0
    %3140 = vmatprep.subr.bf16.mxu0 0
    %3141 = vmatpush1.bf16.msra.mxu0 0
    %3142 = vmatprep.subr.bf16.mxu0 0
    %3143 = vmatpush1.bf16.msra.mxu0 0
    %3144 = vmatprep.subr.bf16.mxu0 0
    %3145 = vmatpush1.bf16.msra.mxu0 0
    %3146 = vmatprep.subr.bf16.mxu0 0
    %3147 = vmatpush1.bf16.msra.mxu0 0
    %3148 = vmatprep.subr.bf16.mxu0 0
    %3149 = vmatpush1.bf16.msra.mxu0 0
    %3150 = vmatprep.subr.bf16.mxu0 0
    %3151 = vmatpush1.bf16.msra.mxu0 0
    %3152 = vmatprep.subr.bf16.mxu0 0
    %3153 = vmatpush1.bf16.msra.mxu0 0
    %3154 = vmatprep.subr.bf16.mxu0 0
    %3155 = vmatpush1.bf16.msra.mxu0 0
    %3156 = vmatprep.subr.bf16.mxu0 0
    %3157 = vmatpush1.bf16.msra.mxu0 0
    %3158 = vmatprep.subr.bf16.mxu0 0
    %3159 = vmatpush1.bf16.msra.mxu0 0
    %3160 = vmatprep.mubr.bf16.mxu0 0
    %3161 = vmatmul.mubr.bf16.gmra.mrb[0].mxu0 %v3083
    %v3162 = vpop.f32.mrb[0].mxu0
    %v3163 = vadd.f32 %v3046, %v3162
    %v3164 = vpop.f32.mrb[0].mxu0
    %v3165 = vpop.f32.mrb[0].mxu0
    %v3166 = vadd.f32 %v3046, %v3165
    %v3167 = vpop.f32.mrb[0].mxu0
    %3168 = vdwg.mxu0
    %v3169 = vadd.f32 %v3016, %v3120
    %v3170 = vadd.f32 %v3019, %v3124
    %v3171 = vxor.u32 %v3169, 2147483648
    %v3172 = vxor.u32 %v3170, 2147483648
    %v3173 = vmul.f32 %v3171, 1.442695
    %v3174 = vpow.pop %v3173
    %v3175 = vmul.f32 %v3172, 1.442695
    %v3176 = vpow.pop %v3175
    %v3177 = vadd.f32 %v3174, 1.0
    %v3178 = vadd.f32 %v3176, 1.0
    %v3179 = vrcp.pop %v3177
    %v3180 = vmul.f32 1.0, %v3179
    %v3181 = vrcp.pop %v3178
    %v3182 = vmul.f32 1.0, %v3181
    %v3183 = vadd.f32 %v3017, %v3122
    %v3184 = vadd.f32 %v3020, %v3126
    %v3185 = vxor.u32 %v3183, 2147483648
    %v3186 = vxor.u32 %v3184, 2147483648
    %v3187 = vmul.f32 %v3185, 1.442695
    %v3188 = vpow.pop %v3187
    %v3189 = vmul.f32 %v3186, 1.442695
    %v3190 = vpow.pop %v3189
    %v3191 = vadd.f32 %v3188, 1.0
    %v3192 = vadd.f32 %v3190, 1.0
    %v3193 = vrcp.pop %v3191
    %v3194 = vmul.f32 1.0, %v3193
    %v3195 = vrcp.pop %v3192
    %v3196 = vmul.f32 1.0, %v3195
    %v3197 = vmul.f32 %v3180, %v3163
    %v3198 = vmul.f32 %v3182, %v3166
    %v3199 = vadd.f32 %v3018, %v3197
    %v3200 = vadd.f32 %v3021, %v3198
    %v3201 = vtanh.pop %v3199
    %v3202 = vtanh.pop %v3200
    %v3203 = vsub.f32 1.0, %v3194
    %v3204 = vsub.f32 1.0, %v3196
    %v3205 = vmul.f32 %v3203, %v3201
    %v3206 = vmul.f32 %v3204, %v3202
    %v3207 = vmul.f32 %v3194, %v2974
    %v3208 = vmul.f32 %v3196, %v2975
    %v3209 = vadd.f32 %v3205, %v3207
    %v3210 = vadd.f32 %v3206, %v3208
    %v3211 = vmul.f32 %v234, 1.0025032
    %v3212 = vmul.f32 %v244, 1.0025032
    %v3213 = vadd.f32 %v3209, %v3211
    %v3214 = vadd.f32 %v3210, %v3212
    %v3215 = vpack.c.bf16 %v3214, %v3213
    %v3216 = vld [vmem:[%s19] sm:$0xf]
    %v3217 = vld [vmem:[%s19 + $0x4] sm:$0xf]
    %v3218 = vld [vmem:[%s19 + $0x8] sm:$0xf]
    %v3219 = vld [vmem:[%s19 + $0xc] sm:$0xf]
    %v3220 = vld [vmem:[%s20] sm:$0x1]
    %v3222 = vlaneseq
    %v3223 = vshrl.u32 %v3222, 7
    %v3224 = vsub.s32 0, %v3223
    %v3225 = vrot.slane %v3220, %v3224
    %v3231 = vunpack.c.l.b16 %v3216
    %v3232 = vunpack.c.l.b16 %v3217
    %v3233 = vunpack.c.l.b16 %v3218
    %v3234 = vunpack.c.l.b16 %v3219
    %v3235 = vpack.c.b16 %v3232, %v3231
    %v3236 = vpack.c.b16 %v3234, %v3233
    %v3240 = vsel %vm724, %v3215, 0
    %3242 = vmatprep.subr.bf16.mxu0 0
    %3243 = vmatpush1.bf16.msra.mxu0 %v3235
    %3244 = vmatprep.subr.bf16.mxu0 0
    %3245 = vmatpush1.bf16.msra.mxu0 %v3236
    %3246 = vmatprep.subr.bf16.mxu0 0
    %3247 = vmatpush1.bf16.msra.mxu0 0
    %3248 = vmatprep.subr.bf16.mxu0 0
    %3249 = vmatpush1.bf16.msra.mxu0 0
    %3250 = vmatprep.subr.bf16.mxu0 0
    %3251 = vmatpush1.bf16.msra.mxu0 0
    %3252 = vmatprep.subr.bf16.mxu0 0
    %3253 = vmatpush1.bf16.msra.mxu0 0
    %3254 = vmatprep.subr.bf16.mxu0 0
    %3255 = vmatpush1.bf16.msra.mxu0 0
    %3256 = vmatprep.subr.bf16.mxu0 0
    %3257 = vmatpush1.bf16.msra.mxu0 0
    %3258 = vmatprep.subr.bf16.mxu0 0
    %3259 = vmatpush1.bf16.msra.mxu0 0
    %3260 = vmatprep.subr.bf16.mxu0 0
    %3261 = vmatpush1.bf16.msra.mxu0 0
    %3262 = vmatprep.subr.bf16.mxu0 0
    %3263 = vmatpush1.bf16.msra.mxu0 0
    %3264 = vmatprep.subr.bf16.mxu0 0
    %3265 = vmatpush1.bf16.msra.mxu0 0
    %3266 = vmatprep.subr.bf16.mxu0 0
    %3267 = vmatpush1.bf16.msra.mxu0 0
    %3268 = vmatprep.subr.bf16.mxu0 0
    %3269 = vmatpush1.bf16.msra.mxu0 0
    %3270 = vmatprep.subr.bf16.mxu0 0
    %3271 = vmatpush1.bf16.msra.mxu0 0
    %3272 = vmatprep.subr.bf16.mxu0 0
    %3273 = vmatpush1.bf16.msra.mxu0 0
    %3274 = vmatprep.mubr.bf16.mxu0 0
    %3275 = vmatmul.mubr.bf16.gmra.mrb[0].mxu0 %v3240
    %v3276 = vpop.f32.mrb[0].mxu0
    %v3277 = vadd.f32 %v3225, %v3276
    %v3278 = vpop.f32.mrb[0].mxu0
    %v3279 = vpop.f32.mrb[0].mxu0
    %v3280 = vadd.f32 %v3225, %v3279
    %v3281 = vpop.f32.mrb[0].mxu0
    %3282 = vdwg.mxu0
    %v3283 = vsub.f32 0.0, %v3277
    %v3284 = vsub.f32 0.0, %v3280
    %v3285 = vmax.f32 %v3283, 0.0
    %v3286 = vmax.f32 %v3284, 0.0
    %vm3287 = vcmp.ne.f32.partialorder %v3283, %v3283
    %vm3288 = vcmp.ne.f32.partialorder %v3284, %v3284
    %v3289 = vadd.f32 %v3283, 0.0
    %v3290 = vadd.f32 %v3284, 0.0
    %v3291 = vand.u32 2147483647, %v3283
    %v3292 = vand.u32 2147483647, %v3284
    %v3293 = vsub.f32 0.0, %v3291
    %v3294 = vsub.f32 0.0, %v3292
    %v3295 = vmul.f32 %v3293, 1.442695
    %v3296 = vpow.pop %v3295
    %v3297 = vmul.f32 %v3294, 1.442695
    %v3298 = vpow.pop %v3297
    %v3299 = vadd.f32 %v3296, 1.0
    %v3300 = vlog2.pop %v3299
    %v3301 = vmul.f32 %v3300, 0.6931472
    %v3302 = vmul.f32 -0.5, %v3296
    %v3303 = vadd.f32 %v3302, 1.0
    %v3304 = vmul.f32 %v3303, %v3296
    %v3305 = vand.u32 2147483647, %v3296
    %vm3306 = vcmp.lt.f32.partialorder %v3305, 0.0004427343
    %v3307 = vsel %vm3306, %v3304, %v3301
    %v3308 = vadd.f32 %v3298, 1.0
    %v3309 = vlog2.pop %v3308
    %v3310 = vmul.f32 %v3309, 0.6931472
    %v3311 = vmul.f32 -0.5, %v3298
    %v3312 = vadd.f32 %v3311, 1.0
    %v3313 = vmul.f32 %v3312, %v3298
    %v3314 = vand.u32 2147483647, %v3298
    %vm3315 = vcmp.lt.f32.partialorder %v3314, 0.0004427343
    %v3316 = vsel %vm3315, %v3313, %v3310
    %v3317 = vadd.f32 %v3285, %v3307
    %v3318 = vadd.f32 %v3286, %v3316
    %v3319 = vsel %vm3287, %v3289, %v3317
    %v3320 = vsel %vm3288, %v3290, %v3318
    %v3321 = vsub.f32 0.0, %v3319
    %v3322 = vsub.f32 0.0, %v3320
    %v3323 = vmul.f32 %v225, %v3321
    %v3324 = vmul.f32 %v235, %v3322
    %v3325 = vsel %vm395, %v3323, 0.0
    %3326 = vadd.xlane.f32.xlu0 %v3325
    %v3327 = vpop.xlane.xlu0 %3326
    %v3328 = vsel %vm395, %v3324, 0.0
    %3329 = vadd.xlane.f32.xlu0 %v3328
    %v3330 = vpop.xlane.xlu0 %3329
    %v3331 = vadd.f32 %v778, 1e-06
    %v3332 = vadd.f32 %v780, 1e-06
    %v3333 = vlog2.pop %v3331
    %v3334 = vmul.f32 %v3333, 0.6931472
    %v3335 = vlog2.pop %v3332
    %v3336 = vmul.f32 %v3335, 0.6931472
    %v3337 = vsub.f32 %v3334, -1.3862903
    %v3338 = vsub.f32 %v3336, -1.3862903
    %v3339 = vmul.f32 %v778, %v3337
    %v3340 = vmul.f32 %v780, %v3338
    %v3341 = vadd.f32 %v3339, 0.0
    %v3342 = vadd.f32 %v3340, 0.0
    %v3343 = vadd.f32 %v1110, 1e-06
    %v3344 = vadd.f32 %v1112, 1e-06
    %v3345 = vlog2.pop %v3343
    %v3346 = vmul.f32 %v3345, 0.6931472
    %v3347 = vlog2.pop %v3344
    %v3348 = vmul.f32 %v3347, 0.6931472
    %v3349 = vsub.f32 %v3346, -1.3862903
    %v3350 = vsub.f32 %v3348, -1.3862903
    %v3351 = vmul.f32 %v1110, %v3349
    %v3352 = vmul.f32 %v1112, %v3350
    %v3353 = vadd.f32 %v3341, %v3351
    %v3354 = vadd.f32 %v3342, %v3352
    %v3355 = vadd.f32 %v1448, 1e-06
    %v3356 = vadd.f32 %v1450, 1e-06
    %v3357 = vlog2.pop %v3355
    %v3358 = vmul.f32 %v3357, 0.6931472
    %v3359 = vlog2.pop %v3356
    %v3360 = vmul.f32 %v3359, 0.6931472
    %v3361 = vsub.f32 %v3358, -1.3862903
    %v3362 = vsub.f32 %v3360, -1.3862903
    %v3363 = vmul.f32 %v1448, %v3361
    %v3364 = vmul.f32 %v1450, %v3362
    %v3365 = vadd.f32 %v3353, %v3363
    %v3366 = vadd.f32 %v3354, %v3364
    %v3367 = vadd.f32 %v1786, 1e-06
    %v3368 = vadd.f32 %v1788, 1e-06
    %v3369 = vlog2.pop %v3367
    %v3370 = vmul.f32 %v3369, 0.6931472
    %v3371 = vlog2.pop %v3368
    %v3372 = vmul.f32 %v3371, 0.6931472
    %v3373 = vsub.f32 %v3370, -1.3862903
    %v3374 = vsub.f32 %v3372, -1.3862903
    %v3375 = vmul.f32 %v1786, %v3373
    %v3376 = vmul.f32 %v1788, %v3374
    %v3377 = vadd.f32 %v3365, %v3375
    %v3378 = vadd.f32 %v3366, %v3376
    %v3379 = vmul.f32 %v2008, %v2008
    %v3380 = vmul.f32 %v2009, %v2009
    %v3381 = vrcp.pop 2.0
    %v3382 = vmul.f32 %v3379, %v3381
    %v3383 = vmul.f32 %v3380, %v3381
    %v3384 = vsub.f32 -0.9189385, %v3382
    %v3385 = vsub.f32 -0.9189385, %v3383
    %v3386 = vsel %vm2111, %v3384, 0.0
    %3387 = vadd.xlane.f32.xlu0 %v3386
    %v3388 = vpop.xlane.xlu0 %3387
    %v3389 = vsel %vm2111, %v3385, 0.0
    %3390 = vadd.xlane.f32.xlu0 %v3389
    %v3391 = vpop.xlane.xlu0 %3390
    %v3392 = vmul.f32 %v1998, %v3381
    %v3393 = vmul.f32 %v1999, %v3381
    %v3394 = vsub.f32 -0.9189385, %v3392
    %v3395 = vsub.f32 -0.9189385, %v3393
    %v3396 = vsub.f32 %v2008, %v1956
    %v3397 = vsub.f32 %v2009, %v1960
    %v3398 = vmul.f32 %v3396, %v3396
    %v3399 = vmul.f32 %v3397, %v3397
    %v3400 = vmul.f32 %v1998, 1.442695
    %v3401 = vpow.pop %v3400
    %v3402 = vmul.f32 %v1999, 1.442695
    %v3403 = vpow.pop %v3402
    %v3404 = vmul.f32 %v3401, 2.0
    %v3405 = vmul.f32 %v3403, 2.0
    %v3406 = vrcp.pop %v3404
    %v3407 = vmul.f32 %v3398, %v3406
    %v3408 = vrcp.pop %v3405
    %v3409 = vmul.f32 %v3399, %v3408
    %v3410 = vsub.f32 %v3394, %v3407
    %v3411 = vsub.f32 %v3395, %v3409
    %v3412 = vsel %vm2111, %v3410, 0.0
    %3413 = vadd.xlane.f32.xlu0 %v3412
    %v3414 = vpop.xlane.xlu0 %3413
    %v3415 = vsel %vm2111, %v3411, 0.0
    %3416 = vadd.xlane.f32.xlu0 %v3415
    %v3417 = vpop.xlane.xlu0 %3416
    %v3418 = vsub.f32 %v3414, %v3388
    %v3419 = vsub.f32 %v3417, %v3391
    %v3420 = vsub.f32 %v3418, %v3327
    %v3421 = vsub.f32 %v3419, %v3330
    %v3422 = vadd.f32 %v3420, %v3377
    %v3423 = vadd.f32 %v3421, %v3378
    %3426 = vrot.lane.b32.xlu0 %v1110, 1
    %v3427 = vpop.permute.xlu0 %3426
    %3428 = vrot.lane.b32.xlu0 %v1112, 1
    %v3429 = vpop.permute.xlu0 %3428
    %3434 = vrot.lane.b32.xlu0 %v1448, 2
    %v3435 = vpop.permute.xlu0 %3434
    %3436 = vrot.lane.b32.xlu0 %v1450, 2
    %v3437 = vpop.permute.xlu0 %3436
    %3442 = vrot.lane.b32.xlu0 %v1786, 3
    %v3443 = vpop.permute.xlu0 %3442
    %3444 = vrot.lane.b32.xlu0 %v1788, 3
    %v3445 = vpop.permute.xlu0 %3444
    %3450 = vrot.lane.b32.xlu0 %v3422, 4
    %v3451 = vpop.permute.xlu0 %3450
    %3452 = vrot.lane.b32.xlu0 %v3423, 4
    %v3453 = vpop.permute.xlu0 %3452
    %vm3456 = vcmask 7168
    %v3457 = vsel %vm3456, %v778, %v3427
    %v3458 = vsel %vm3456, %v780, %v3429
    %vm3459 = vcmask 15360
    %v3460 = vsel %vm3459, %v3457, %v3435
    %v3461 = vsel %vm3459, %v3458, %v3437
    %vm3462 = vcmask 23552
    %v3463 = vsel %vm3462, %v3460, %v3443
    %v3464 = vsel %vm3462, %v3461, %v3445
    %vm3465 = vcmask 31744
    %v3466 = vsel %vm3465, %v3463, %v3451
    %v3467 = vsel %vm3465, %v3464, %v3453
    %vm3468 = vcmask 39936
    %v3469 = vsel %vm3468, %v3466, 0.0
    %v3470 = vsel %vm3468, %v3467, 0.0
    %3471 = vst [vmem:[#allocation23] sm:$0xff] %v3469
    %3472 = vst [vmem:[#allocation23 + $0x8] sm:$0xff] %v3470
    // Predicated region
    $region134: #{tpu_custom_call.1} parent=1 // pred_check
      _
    $region135: #{tpu_custom_call.1} parent=1 // pred_check_branch
      %3474 = sbr.rel (0) target = $region137
    $region136: #{tpu_custom_call.1} parent=1 // pred_region
      %s3476 = ssub.s32 256, 256
      %3477 = vsyncadd [#allocation5], %s3476
      %s3478 = sshll.u32 [#allocation23], 4
      %s3479 = int_to_ptr.vmem [resolvable:$true] %s3478
      %3484 = dma.vmem_to_hbm [thread:$0]  %s3479, 256, %s21, [#allocation5], 128, 128, 8
    $region137: #{tpu_custom_call.1} parent=1 // pred_fallthru
      _
    // Predicated region
    $region138: #{tpu_custom_call.1} parent=1 // pred_check
      _
    $region139: #{tpu_custom_call.1} parent=1 // pred_check_branch
      %3486 = sbr.rel (0) target = $region141
    $region140: #{tpu_custom_call.1} parent=1 // pred_region
      %3487 = dma.done [#allocation5], 256
    $region141: #{tpu_custom_call.1} parent=1 // pred_fallthru
      _
    %3488 = vsyncpa [#allocation4], 1
    %3489 = vsyncpa [#allocation7], 1
    %3490 = vsyncpa [#allocation10], 1
    %3491 = vsyncpa [#allocation13], 1
    %3492 = vsyncpa [#allocation16], 1
    %3493 = vsyncpa [#allocation19], 1
    %3494 = vsyncpa [#allocation22], 1
    %3495 = vsyncpa [#allocation5], 1

</llo_original>
